<compile_context>
chip_gen: v7x
topology: tpu7x:2x2x1
jax: 0.10.0
libtpu: 0.0.40
codegen_flags: <defaults>
</compile_context>

<pallas_src>
import jax
import jax.numpy as jnp
from jax import lax
from jax.experimental import pallas as pl
from jax.experimental.pallas import tpu as pltpu


def _round_up(x, m):
    return (x + m - 1) // m * m


# -----------------------------------------------------------------------------
# Kernel 1: fused matmul  y = x @ w + bias [+ add] [-> ReLU]
# Used for the 1x1 convs AND the sub-pixel transposed convs.
# Grid over row tiles ("parallel"); contraction + output dims untiled so the
# weight stays resident and accumulation happens in registers.
# -----------------------------------------------------------------------------
def _fused_matmul(x2, w2, bias, add2=None, *, relu, tm_max=256):
    M, K = x2.shape
    Nc = w2.shape[1]
    tm = min(tm_max, _round_up(M, 8))
    Mp = _round_up(M, tm)
    if Mp != M:
        x2 = jnp.pad(x2, ((0, Mp - M), (0, 0)))
        if add2 is not None:
            add2 = jnp.pad(add2, ((0, Mp - M), (0, 0)))
    b2 = bias.reshape(1, Nc).astype(jnp.float32)
    grid = (Mp // tm,)

    if add2 is None:
        def kernel(x_ref, w_ref, b_ref, o_ref):
            y = jnp.dot(x_ref[...], w_ref[...],
                        preferred_element_type=jnp.float32) + b_ref[...]
            if relu:
                y = jnp.maximum(y, 0.0)
            o_ref[...] = y

        in_specs = [
            pl.BlockSpec((tm, K), lambda i: (i, 0)),
            pl.BlockSpec((K, Nc), lambda i: (0, 0)),
            pl.BlockSpec((1, Nc), lambda i: (0, 0)),
        ]
        args = (x2, w2, b2)
    else:
        def kernel(x_ref, w_ref, b_ref, a_ref, o_ref):
            y = jnp.dot(x_ref[...], w_ref[...],
                        preferred_element_type=jnp.float32)
            y = y + b_ref[...] + a_ref[...]
            if relu:
                y = jnp.maximum(y, 0.0)
            o_ref[...] = y

        in_specs = [
            pl.BlockSpec((tm, K), lambda i: (i, 0)),
            pl.BlockSpec((K, Nc), lambda i: (0, 0)),
            pl.BlockSpec((1, Nc), lambda i: (0, 0)),
            pl.BlockSpec((tm, Nc), lambda i: (i, 0)),
        ]
        args = (x2, w2, b2, add2)

    out = pl.pallas_call(
        kernel,
        out_shape=jax.ShapeDtypeStruct((Mp, Nc), jnp.float32),
        grid=grid,
        in_specs=in_specs,
        out_specs=pl.BlockSpec((tm, Nc), lambda i: (i, 0)),
        compiler_params=pltpu.CompilerParams(
            dimension_semantics=("parallel",)),
    )(*args)
    return out, M


def pwconv_relu(x_nhwc, w_oi11, b):
    """ReLU(Conv2d 1x1).  x: [N,H,W,Cin]; w: [Cout,Cin,1,1]; b: [Cout]."""
    N, H, W, Cin = x_nhwc.shape
    Cout = w_oi11.shape[0]
    x2 = x_nhwc.reshape(N * H * W, Cin)
    w2 = jnp.transpose(w_oi11[:, :, 0, 0], (1, 0))          # [Cin, Cout]
    out, M = _fused_matmul(x2, w2, b, relu=True)
    return out[:M].reshape(N, H, W, Cout)


# -----------------------------------------------------------------------------
# Sub-pixel transposed-conv helpers (glue: pure layout / small weight rework).
# Requires K == 2*stride and 2*padding == stride (true for all FCN8s deconvs):
# each output pixel (s*j+dh, s*i+dw) reads input rows {j-1, j, j+1} only.
# -----------------------------------------------------------------------------
def _subpixel_weight(w_iokk, stride, padding):
    """PyTorch ConvTranspose2d weight [Cin,Cout,K,K] -> [9*Cin, s*s*Cout]."""
    Cin, Cout, K, K2 = w_iokk.shape
    s, p = stride, padding
    assert K == K2 and K == 2 * s and 2 * p == s, \
        "sub-pixel path assumes kernel=2*stride, padding=stride/2"
    d = jnp.arange(s)
    # window row u=0 -> ih=j-1, u=1 -> ih=j, u=2 -> ih=j+1
    kh = jnp.stack([d + p + s, d + p, d + p - s], axis=0)              # [3, s]
    valid = jnp.stack([d < s - p, jnp.ones((s,), dtype=bool), d >= s - p],
                      axis=0)                                          # [3, s]
    kh_c = jnp.clip(kh, 0, K - 1)
    wt = w_iokk[:, :, kh_c, :][:, :, :, :, kh_c]          # [Cin,Cout,3,s,3,s]
    mask = (valid[:, :, None, None] & valid[None, None, :, :]).astype(wt.dtype)
    wt = wt * mask[None, None]
    weff = jnp.transpose(wt, (2, 4, 0, 3, 5, 1))          # [3,3,Cin,s,s,Cout]
    return weff.reshape(9 * Cin, s * s * Cout)


def _patch3x3(x_nhwc):
    """[N,H,W,C] -> [N*H*W, 9*C]; column = (u*3+v)*C + c, zero-padded border."""
    N, H, W, C = x_nhwc.shape
    xp = jnp.pad(x_nhwc, ((0, 0), (1, 1), (1, 1), (0, 0)))
    cols = [xp[:, u:u + H, v:v + W, :] for u in range(3) for v in range(3)]
    return jnp.concatenate(cols, axis=-1).reshape(N * H * W, 9 * C)


def _to_phase_blocked(x_nhwc, s):
    """[N, s*H, s*W, C] -> [N*H*W, s*s*C] with column (dh*s+dw)*C + c."""
    N, Hs, Ws, C = x_nhwc.shape
    H, W = Hs // s, Ws // s
    x = x_nhwc.reshape(N, H, s, W, s, C)
    x = jnp.transpose(x, (0, 1, 3, 2, 4, 5))
    return x.reshape(N * H * W, s * s * C)


def _from_phase_blocked(x2, N, H, W, s, C):
    """Inverse of _to_phase_blocked (pixel shuffle)."""
    x = x2.reshape(N, H, W, s, s, C)
    x = jnp.transpose(x, (0, 1, 3, 2, 4, 5))
    return x.reshape(N, H * s, W * s, C)


def deconv_subpixel(x_nhwc, w_iokk, b, *, stride, padding, skip_nhwc=None):
    """ConvTranspose2d (+ optional fused residual add), phase-blocked output."""
    N, H, W, Cin = x_nhwc.shape
    Cout = w_iokk.shape[1]
    s = stride
    weff = _subpixel_weight(w_iokk, stride, padding)     # [9*Cin, s*s*Cout]
    bias_pb = jnp.tile(b, s * s)                         # [s*s*Cout]
    patches = _patch3x3(x_nhwc)                          # [N*H*W, 9*Cin]
    add2 = _to_phase_blocked(skip_nhwc, s) if skip_nhwc is not None else None
    out2, M = _fused_matmul(patches, weff, bias_pb, add2, relu=False)
    return out2[:M], (N, H, W, s, Cout)


# -----------------------------------------------------------------------------
# Kernels 2+3: tiled BatchNorm2d (training-mode batch stats) on the
# phase-blocked tensor.  Stats: gridded sum/sumsq reduction into a resident
# [2, Cpb] accumulator ("arbitrary" axis).  Apply: gridded scale/shift.
# -----------------------------------------------------------------------------
def batchnorm_pb(x2_pb, gamma, beta, s, count, eps=1e-5, tm_max=256):
    Mq, Cpb = x2_pb.shape
    C = Cpb // (s * s)
    tm = min(tm_max, _round_up(Mq, 8))
    Mp = _round_up(Mq, tm)
    xp = jnp.pad(x2_pb, ((0, Mp - Mq), (0, 0))) if Mp != Mq else x2_pb
    grid = (Mp // tm,)

    def stats_kernel(x_ref, s_ref):
        @pl.when(pl.program_id(0) == 0)
        def _():
            s_ref[...] = jnp.zeros_like(s_ref)
        x = x_ref[...]
        row = lax.broadcasted_iota(jnp.int32, x.shape, 0) + pl.program_id(0) * tm
        x = jnp.where(row < Mq, x, 0.0)     # ignore padded rows in the stats
        part = jnp.concatenate(
            [jnp.sum(x, axis=0, keepdims=True),
             jnp.sum(x * x, axis=0, keepdims=True)], axis=0)
        s_ref[...] += part

    sums = pl.pallas_call(
        stats_kernel,
        out_shape=jax.ShapeDtypeStruct((2, Cpb), jnp.float32),
        grid=grid,
        in_specs=[pl.BlockSpec((tm, Cpb), lambda i: (i, 0))],
        out_specs=pl.BlockSpec((2, Cpb), lambda i: (0, 0)),
        compiler_params=pltpu.CompilerParams(
            dimension_semantics=("arbitrary",)),
    )(xp)

    sums_c = sums.reshape(2, s * s, C).sum(axis=1)       # [2, C]
    mean = sums_c[0] / count
    var = jnp.maximum(sums_c[1] / count - mean * mean, 0.0)   # biased variance
    scale = gamma * lax.rsqrt(var + eps)
    shift = beta - mean * scale
    scale_pb = jnp.tile(scale, s * s).reshape(1, Cpb)
    shift_pb = jnp.tile(shift, s * s).reshape(1, Cpb)

    def apply_kernel(x_ref, sc_ref, sh_ref, o_ref):
        o_ref[...] = x_ref[...] * sc_ref[...] + sh_ref[...]

    out = pl.pallas_call(
        apply_kernel,
        out_shape=jax.ShapeDtypeStruct((Mp, Cpb), jnp.float32),
        grid=grid,
        in_specs=[pl.BlockSpec((tm, Cpb), lambda i: (i, 0)),
                  pl.BlockSpec((1, Cpb), lambda i: (0, 0)),
                  pl.BlockSpec((1, Cpb), lambda i: (0, 0))],
        out_specs=pl.BlockSpec((tm, Cpb), lambda i: (i, 0)),
        compiler_params=pltpu.CompilerParams(
            dimension_semantics=("parallel",)),
    )(xp, scale_pb, shift_pb)
    return out[:Mq]


# -----------------------------------------------------------------------------
# FCN8s forward (Pallas path)
# -----------------------------------------------------------------------------
def fcn8s_forward(params, x5, x4, x3):
    nhwc = lambda t: jnp.transpose(t, (0, 2, 3, 1))
    x5n, x4n, x3n = nhwc(x5), nhwc(x4), nhwc(x3)

    # score = relu(conv1(x5))
    score = pwconv_relu(x5n, params["conv1_w"], params["conv1_b"])

    # score = bn1(deconv2_1(score) + relu(conv2(x4)))     (add fused in deconv)
    skip = pwconv_relu(x4n, params["conv2_w"], params["conv2_b"])
    up_pb, (N, H, W, s, C) = deconv_subpixel(
        score, params["deconv2_1_w"], params["deconv2_1_b"],
        stride=2, padding=1, skip_nhwc=skip)
    y_pb = batchnorm_pb(up_pb, params["bn1_g"], params["bn1_b"], s,
                        count=N * H * W * s * s)
    score = _from_phase_blocked(y_pb, N, H, W, s, C)

    # score = bn2(deconv2_2(score) + relu(conv3(x3)))
    skip = pwconv_relu(x3n, params["conv3_w"], params["conv3_b"])
    up_pb, (N, H, W, s, C) = deconv_subpixel(
        score, params["deconv2_2_w"], params["deconv2_2_b"],
        stride=2, padding=1, skip_nhwc=skip)
    y_pb = batchnorm_pb(up_pb, params["bn2_g"], params["bn2_b"], s,
                        count=N * H * W * s * s)
    score = _from_phase_blocked(y_pb, N, H, W, s, C)

    # out = deconv8(score)
    out_pb, (N, H, W, s, C) = deconv_subpixel(
        score, params["deconv8_w"], params["deconv8_b"], stride=8, padding=4)
    out = _from_phase_blocked(out_pb, N, H, W, s, C)
    return jnp.transpose(out, (0, 3, 1, 2))               # back to NCHW


# -----------------------------------------------------------------------------
# Pure-XLA reference (NCHW), used only to validate the Pallas kernels
# -----------------------------------------------------------------------------
def _ref_conv1x1_relu(x, w, b):
    y = lax.conv_general_dilated(x, w, (1, 1), "VALID",
                                 dimension_numbers=("NCHW", "OIHW", "NCHW"))
    return jax.nn.relu(y + b.reshape(1, -1, 1, 1))


def _ref_tconv(x, w, b, s, p):
    K = w.shape[-1]
    wc = jnp.flip(jnp.transpose(w, (1, 0, 2, 3)), axis=(2, 3))
    y = lax.conv_general_dilated(x, wc, window_strides=(1, 1),
                                 padding=[(K - 1 - p, K - 1 - p)] * 2,
                                 lhs_dilation=(s, s),
                                 dimension_numbers=("NCHW", "OIHW", "NCHW"))
    return y + b.reshape(1, -1, 1, 1)


def _ref_bn(x, g, be, eps=1e-5):
    mean = x.mean(axis=(0, 2, 3), keepdims=True)
    var = ((x - mean) ** 2).mean(axis=(0, 2, 3), keepdims=True)
    return (x - mean) * lax.rsqrt(var + eps) * g.reshape(1, -1, 1, 1) \
        + be.reshape(1, -1, 1, 1)


def fcn8s_reference(params, x5, x4, x3):
    s = _ref_conv1x1_relu(x5, params["conv1_w"], params["conv1_b"])
    s = _ref_bn(_ref_tconv(s, params["deconv2_1_w"], params["deconv2_1_b"], 2, 1)
                + _ref_conv1x1_relu(x4, params["conv2_w"], params["conv2_b"]),
                params["bn1_g"], params["bn1_b"])
    s = _ref_bn(_ref_tconv(s, params["deconv2_2_w"], params["deconv2_2_b"], 2, 1)
                + _ref_conv1x1_relu(x3, params["conv3_w"], params["conv3_b"]),
                params["bn2_g"], params["bn2_b"])
    return _ref_tconv(s, params["deconv8_w"], params["deconv8_b"], 8, 4)


# -----------------------------------------------------------------------------
# Deterministic parameter init (shapes match FCN8s.__init__ with in_channels
# 512/512/256; BN affine params use the PyTorch defaults 1/0).
# -----------------------------------------------------------------------------
def init_params(key, num_classes):
    ks = jax.random.split(key, 12)
    w = lambda k, shp, s=0.05: s * jax.random.normal(k, shp, jnp.float32)
    return {
        "conv1_w": w(ks[0], (num_classes, 512, 1, 1)), "conv1_b": w(ks[1], (num_classes,), 0.1),
        "conv2_w": w(ks[2], (num_classes, 512, 1, 1)), "conv2_b": w(ks[3], (num_classes,), 0.1),
        "conv3_w": w(ks[4], (num_classes, 256, 1, 1)), "conv3_b": w(ks[5], (num_classes,), 0.1),
        "deconv2_1_w": w(ks[6], (num_classes, num_classes, 4, 4)),
        "deconv2_1_b": w(ks[7], (num_classes,), 0.1),
        "deconv2_2_w": w(ks[8], (num_classes, num_classes, 4, 4)),
        "deconv2_2_b": w(ks[9], (num_classes,), 0.1),
        "deconv8_w": w(ks[10], (num_classes, num_classes, 16, 16)),
        "deconv8_b": w(ks[11], (num_classes,), 0.1),
        "bn1_g": jnp.ones((num_classes,), jnp.float32),
        "bn1_b": jnp.zeros((num_classes,), jnp.float32),
        "bn2_g": jnp.ones((num_classes,), jnp.float32),
        "bn2_b": jnp.zeros((num_classes,), jnp.float32),
    }


if __name__ == "__main__":
    num_classes = 8
    N = 2
    key = jax.random.PRNGKey(0)
    kx5, kx4, kx3, kp = jax.random.split(key, 4)
    # Backbone feature maps at strides 32/16/8 of a hypothetical 64x64 image
    # (small shapes; PyTorch NCHW layout at the API boundary).
    x5 = jax.random.normal(kx5, (N, 512, 2, 2), jnp.float32)
    x4 = jax.random.normal(kx4, (N, 512, 4, 4), jnp.float32)
    x3 = jax.random.normal(kx3, (N, 256, 8, 8), jnp.float32)
    params = init_params(kp, num_classes)

    out = jax.block_until_ready(jax.jit(fcn8s_forward)(params, x5, x4, x3))
    assert out.shape == (N, num_classes, 64, 64), out.shape

    ref = jax.block_until_ready(jax.jit(fcn8s_reference)(params, x5, x4, x3))
    max_err = float(jnp.max(jnp.abs(out - ref)))
    assert jnp.allclose(out, ref, atol=1e-3, rtol=1e-3), max_err

    print("KERNEL_OK")
</pallas_src>

<mosaic_0001>
module attributes {stable_mosaic.version = 11 : i64} {
  func.func @kernel(%arg0: i32, %arg1: memref<128x256xf32, #tpu.memory_space<vmem>>, %arg2: memref<256x8xf32, #tpu.memory_space<vmem>>, %arg3: memref<1x8xf32, #tpu.memory_space<vmem>>, %arg4: memref<128x8xf32, #tpu.memory_space<vmem>>) attributes {dimension_semantics = [#tpu.dimension_semantics<parallel>], iteration_bounds = array<i64: 1>, scalar_prefetch = 0 : i64, scratch_operands = 0 : i64, tpu.core_type = #tpu.core_type<tc>, window_params = [{transform_indices = @transform_0, window_bounds = array<i64: 128, 256>}, {pipeline_mode = #tpu.pipeline_mode<synchronous>, transform_indices = @transform_1, window_bounds = array<i64: 256, 8>}, {pipeline_mode = #tpu.pipeline_mode<synchronous>, transform_indices = @transform_2, window_bounds = array<i64: 1, 8>}, {transform_indices = @transform_3, window_bounds = array<i64: 128, 8>}]} {
    %c0 = arith.constant 0 : index
    %c0_0 = arith.constant 0 : index
    %0 = vector.load %arg1[%c0, %c0_0] : memref<128x256xf32, #tpu.memory_space<vmem>>, vector<128x256xf32>
    %c0_1 = arith.constant 0 : index
    %c0_2 = arith.constant 0 : index
    %1 = vector.load %arg2[%c0_1, %c0_2] : memref<256x8xf32, #tpu.memory_space<vmem>>, vector<256x8xf32>
    %cst = arith.constant dense<0.000000e+00> : vector<128x8xf32>
    %2 = tpu.matmul %0, %1, %cst {dimension_numbers = #tpu.dot_dimension_numbers<[1], [0], [0], [1], [0, 0, 1, 1], [], []>} : vector<128x256xf32>, vector<256x8xf32>, vector<128x8xf32> -> vector<128x8xf32>
    %c0_3 = arith.constant 0 : index
    %c0_4 = arith.constant 0 : index
    %3 = vector.load %arg3[%c0_3, %c0_4] : memref<1x8xf32, #tpu.memory_space<vmem>>, vector<1x8xf32>
    %4 = vector.broadcast %3 : vector<1x8xf32> to vector<128x8xf32>
    %5 = arith.addf %2, %4 : vector<128x8xf32>
    %cst_5 = arith.constant 0.000000e+00 : f32
    %6 = vector.broadcast %cst_5 : f32 to vector<128x8xf32>
    %7 = arith.maximumf %5, %6 : vector<128x8xf32>
    %c0_6 = arith.constant 0 : index
    %c0_7 = arith.constant 0 : index
    %8 = vector.load %arg4[%c0_6, %c0_7] : memref<128x8xf32, #tpu.memory_space<vmem>>, vector<128x8xf32>
    tpu.vector_store %arg4[%c0_6, %c0_7], %7 {strides = array<i32>} : memref<128x8xf32, #tpu.memory_space<vmem>>, vector<128x8xf32>,
    return
  }
  func.func @transform_0(%arg0: i32) -> (i32, i32) {
    %c0_i32 = arith.constant 0 : i32
    %c0_i32_0 = arith.constant 0 : i32
    return %arg0, %c0_i32 : i32, i32
  }
  func.func @transform_1(%arg0: i32) -> (i32, i32) {
    %c0_i32 = arith.constant 0 : i32
    %c0_i32_0 = arith.constant 0 : i32
    %c0_i32_1 = arith.constant 0 : i32
    return %c0_i32, %c0_i32_0 : i32, i32
  }
  func.func @transform_2(%arg0: i32) -> (i32, i32) {
    %c0_i32 = arith.constant 0 : i32
    %c0_i32_0 = arith.constant 0 : i32
    %c0_i32_1 = arith.constant 0 : i32
    return %c0_i32, %c0_i32_0 : i32, i32
  }
  func.func @transform_3(%arg0: i32) -> (i32, i32) {
    %c0_i32 = arith.constant 0 : i32
    %c0_i32_0 = arith.constant 0 : i32
    return %arg0, %c0_i32 : i32, i32
  }
}

module attributes {stable_mosaic.version = 11 : i64} {
  func.func @kernel(%arg0: i32, %arg1: memref<8x512xf32, #tpu.memory_space<vmem>>, %arg2: memref<512x8xf32, #tpu.memory_space<vmem>>, %arg3: memref<1x8xf32, #tpu.memory_space<vmem>>, %arg4: memref<8x8xf32, #tpu.memory_space<vmem>>) attributes {dimension_semantics = [#tpu.dimension_semantics<parallel>], iteration_bounds = array<i64: 1>, scalar_prefetch = 0 : i64, scratch_operands = 0 : i64, tpu.core_type = #tpu.core_type<tc>, window_params = [{transform_indices = @transform_0, window_bounds = array<i64: 8, 512>}, {pipeline_mode = #tpu.pipeline_mode<synchronous>, transform_indices = @transform_1, window_bounds = array<i64: 512, 8>}, {pipeline_mode = #tpu.pipeline_mode<synchronous>, transform_indices = @transform_2, window_bounds = array<i64: 1, 8>}, {transform_indices = @transform_3, window_bounds = array<i64: 8, 8>}]} {
    %c0 = arith.constant 0 : index
    %c0_0 = arith.constant 0 : index
    %0 = vector.load %arg1[%c0, %c0_0] : memref<8x512xf32, #tpu.memory_space<vmem>>, vector<8x512xf32>
    %c0_1 = arith.constant 0 : index
    %c0_2 = arith.constant 0 : index
    %1 = vector.load %arg2[%c0_1, %c0_2] : memref<512x8xf32, #tpu.memory_space<vmem>>, vector<512x8xf32>
    %cst = arith.constant dense<0.000000e+00> : vector<8x8xf32>
    %2 = tpu.matmul %0, %1, %cst {dimension_numbers = #tpu.dot_dimension_numbers<[1], [0], [0], [1], [0, 0, 1, 1], [], []>} : vector<8x512xf32>, vector<512x8xf32>, vector<8x8xf32> -> vector<8x8xf32>
    %c0_3 = arith.constant 0 : index
    %c0_4 = arith.constant 0 : index
    %3 = vector.load %arg3[%c0_3, %c0_4] : memref<1x8xf32, #tpu.memory_space<vmem>>, vector<1x8xf32>
    %4 = vector.broadcast %3 : vector<1x8xf32> to vector<8x8xf32>
    %5 = arith.addf %2, %4 : vector<8x8xf32>
    %cst_5 = arith.constant 0.000000e+00 : f32
    %6 = vector.broadcast %cst_5 : f32 to vector<8x8xf32>
    %7 = arith.maximumf %5, %6 : vector<8x8xf32>
    %c0_6 = arith.constant 0 : index
    %c0_7 = arith.constant 0 : index
    %8 = vector.load %arg4[%c0_6, %c0_7] : memref<8x8xf32, #tpu.memory_space<vmem>>, vector<8x8xf32>
    tpu.vector_store %arg4[%c0_6, %c0_7], %7 {strides = array<i32>} : memref<8x8xf32, #tpu.memory_space<vmem>>, vector<8x8xf32>,
    return
  }
  func.func @transform_0(%arg0: i32) -> (i32, i32) {
    %c0_i32 = arith.constant 0 : i32
    %c0_i32_0 = arith.constant 0 : i32
    return %arg0, %c0_i32 : i32, i32
  }
  func.func @transform_1(%arg0: i32) -> (i32, i32) {
    %c0_i32 = arith.constant 0 : i32
    %c0_i32_0 = arith.constant 0 : i32
    %c0_i32_1 = arith.constant 0 : i32
    return %c0_i32, %c0_i32_0 : i32, i32
  }
  func.func @transform_2(%arg0: i32) -> (i32, i32) {
    %c0_i32 = arith.constant 0 : i32
    %c0_i32_0 = arith.constant 0 : i32
    %c0_i32_1 = arith.constant 0 : i32
    return %c0_i32, %c0_i32_0 : i32, i32
  }
  func.func @transform_3(%arg0: i32) -> (i32, i32) {
    %c0_i32 = arith.constant 0 : i32
    %c0_i32_0 = arith.constant 0 : i32
    return %arg0, %c0_i32 : i32, i32
  }
}

module attributes {stable_mosaic.version = 11 : i64} {
  func.func @kernel(%arg0: i32, %arg1: memref<32x512xf32, #tpu.memory_space<vmem>>, %arg2: memref<512x8xf32, #tpu.memory_space<vmem>>, %arg3: memref<1x8xf32, #tpu.memory_space<vmem>>, %arg4: memref<32x8xf32, #tpu.memory_space<vmem>>) attributes {dimension_semantics = [#tpu.dimension_semantics<parallel>], iteration_bounds = array<i64: 1>, scalar_prefetch = 0 : i64, scratch_operands = 0 : i64, tpu.core_type = #tpu.core_type<tc>, window_params = [{transform_indices = @transform_0, window_bounds = array<i64: 32, 512>}, {pipeline_mode = #tpu.pipeline_mode<synchronous>, transform_indices = @transform_1, window_bounds = array<i64: 512, 8>}, {pipeline_mode = #tpu.pipeline_mode<synchronous>, transform_indices = @transform_2, window_bounds = array<i64: 1, 8>}, {transform_indices = @transform_3, window_bounds = array<i64: 32, 8>}]} {
    %c0 = arith.constant 0 : index
    %c0_0 = arith.constant 0 : index
    %0 = vector.load %arg1[%c0, %c0_0] : memref<32x512xf32, #tpu.memory_space<vmem>>, vector<32x512xf32>
    %c0_1 = arith.constant 0 : index
    %c0_2 = arith.constant 0 : index
    %1 = vector.load %arg2[%c0_1, %c0_2] : memref<512x8xf32, #tpu.memory_space<vmem>>, vector<512x8xf32>
    %cst = arith.constant dense<0.000000e+00> : vector<32x8xf32>
    %2 = tpu.matmul %0, %1, %cst {dimension_numbers = #tpu.dot_dimension_numbers<[1], [0], [0], [1], [0, 0, 1, 1], [], []>} : vector<32x512xf32>, vector<512x8xf32>, vector<32x8xf32> -> vector<32x8xf32>
    %c0_3 = arith.constant 0 : index
    %c0_4 = arith.constant 0 : index
    %3 = vector.load %arg3[%c0_3, %c0_4] : memref<1x8xf32, #tpu.memory_space<vmem>>, vector<1x8xf32>
    %4 = vector.broadcast %3 : vector<1x8xf32> to vector<32x8xf32>
    %5 = arith.addf %2, %4 : vector<32x8xf32>
    %cst_5 = arith.constant 0.000000e+00 : f32
    %6 = vector.broadcast %cst_5 : f32 to vector<32x8xf32>
    %7 = arith.maximumf %5, %6 : vector<32x8xf32>
    %c0_6 = arith.constant 0 : index
    %c0_7 = arith.constant 0 : index
    %8 = vector.load %arg4[%c0_6, %c0_7] : memref<32x8xf32, #tpu.memory_space<vmem>>, vector<32x8xf32>
    tpu.vector_store %arg4[%c0_6, %c0_7], %7 {strides = array<i32>} : memref<32x8xf32, #tpu.memory_space<vmem>>, vector<32x8xf32>,
    return
  }
  func.func @transform_0(%arg0: i32) -> (i32, i32) {
    %c0_i32 = arith.constant 0 : i32
    %c0_i32_0 = arith.constant 0 : i32
    return %arg0, %c0_i32 : i32, i32
  }
  func.func @transform_1(%arg0: i32) -> (i32, i32) {
    %c0_i32 = arith.constant 0 : i32
    %c0_i32_0 = arith.constant 0 : i32
    %c0_i32_1 = arith.constant 0 : i32
    return %c0_i32, %c0_i32_0 : i32, i32
  }
  func.func @transform_2(%arg0: i32) -> (i32, i32) {
    %c0_i32 = arith.constant 0 : i32
    %c0_i32_0 = arith.constant 0 : i32
    %c0_i32_1 = arith.constant 0 : i32
    return %c0_i32, %c0_i32_0 : i32, i32
  }
  func.func @transform_3(%arg0: i32) -> (i32, i32) {
    %c0_i32 = arith.constant 0 : i32
    %c0_i32_0 = arith.constant 0 : i32
    return %arg0, %c0_i32 : i32, i32
  }
}

module attributes {stable_mosaic.version = 11 : i64} {
  func.func @kernel(%arg0: i32, %arg1: memref<8x72xf32, #tpu.memory_space<vmem>>, %arg2: memref<72x32xf32, #tpu.memory_space<vmem>>, %arg3: memref<1x32xf32, #tpu.memory_space<vmem>>, %arg4: memref<8x32xf32, #tpu.memory_space<vmem>>, %arg5: memref<8x32xf32, #tpu.memory_space<vmem>>) attributes {dimension_semantics = [#tpu.dimension_semantics<parallel>], iteration_bounds = array<i64: 1>, scalar_prefetch = 0 : i64, scratch_operands = 0 : i64, tpu.core_type = #tpu.core_type<tc>, window_params = [{transform_indices = @transform_0, window_bounds = array<i64: 8, 72>}, {pipeline_mode = #tpu.pipeline_mode<synchronous>, transform_indices = @transform_1, window_bounds = array<i64: 72, 32>}, {pipeline_mode = #tpu.pipeline_mode<synchronous>, transform_indices = @transform_2, window_bounds = array<i64: 1, 32>}, {transform_indices = @transform_3, window_bounds = array<i64: 8, 32>}, {transform_indices = @transform_4, window_bounds = array<i64: 8, 32>}]} {
    %c0 = arith.constant 0 : index
    %c0_0 = arith.constant 0 : index
    %0 = vector.load %arg1[%c0, %c0_0] : memref<8x72xf32, #tpu.memory_space<vmem>>, vector<8x72xf32>
    %c0_1 = arith.constant 0 : index
    %c0_2 = arith.constant 0 : index
    %1 = vector.load %arg2[%c0_1, %c0_2] : memref<72x32xf32, #tpu.memory_space<vmem>>, vector<72x32xf32>
    %cst = arith.constant dense<0.000000e+00> : vector<8x32xf32>
    %2 = tpu.matmul %0, %1, %cst {dimension_numbers = #tpu.dot_dimension_numbers<[1], [0], [0], [1], [0, 0, 1, 1], [], []>} : vector<8x72xf32>, vector<72x32xf32>, vector<8x32xf32> -> vector<8x32xf32>
    %c0_3 = arith.constant 0 : index
    %c0_4 = arith.constant 0 : index
    %3 = vector.load %arg3[%c0_3, %c0_4] : memref<1x32xf32, #tpu.memory_space<vmem>>, vector<1x32xf32>
    %4 = vector.broadcast %3 : vector<1x32xf32> to vector<8x32xf32>
    %5 = arith.addf %2, %4 : vector<8x32xf32>
    %c0_5 = arith.constant 0 : index
    %c0_6 = arith.constant 0 : index
    %6 = vector.load %arg4[%c0_5, %c0_6] : memref<8x32xf32, #tpu.memory_space<vmem>>, vector<8x32xf32>
    %7 = arith.addf %5, %6 : vector<8x32xf32>
    %c0_7 = arith.constant 0 : index
    %c0_8 = arith.constant 0 : index
    %8 = vector.load %arg5[%c0_7, %c0_8] : memref<8x32xf32, #tpu.memory_space<vmem>>, vector<8x32xf32>
    tpu.vector_store %arg5[%c0_7, %c0_8], %7 {strides = array<i32>} : memref<8x32xf32, #tpu.memory_space<vmem>>, vector<8x32xf32>,
    return
  }
  func.func @transform_0(%arg0: i32) -> (i32, i32) {
    %c0_i32 = arith.constant 0 : i32
    %c0_i32_0 = arith.constant 0 : i32
    return %arg0, %c0_i32 : i32, i32
  }
  func.func @transform_1(%arg0: i32) -> (i32, i32) {
    %c0_i32 = arith.constant 0 : i32
    %c0_i32_0 = arith.constant 0 : i32
    %c0_i32_1 = arith.constant 0 : i32
    return %c0_i32, %c0_i32_0 : i32, i32
  }
  func.func @transform_2(%arg0: i32) -> (i32, i32) {
    %c0_i32 = arith.constant 0 : i32
    %c0_i32_0 = arith.constant 0 : i32
    %c0_i32_1 = arith.constant 0 : i32
    return %c0_i32, %c0_i32_0 : i32, i32
  }
  func.func @transform_3(%arg0: i32) -> (i32, i32) {
    %c0_i32 = arith.constant 0 : i32
    %c0_i32_0 = arith.constant 0 : i32
    return %arg0, %c0_i32 : i32, i32
  }
  func.func @transform_4(%arg0: i32) -> (i32, i32) {
    %c0_i32 = arith.constant 0 : i32
    %c0_i32_0 = arith.constant 0 : i32
    return %arg0, %c0_i32 : i32, i32
  }
}

module attributes {stable_mosaic.version = 11 : i64} {
  func.func @stats_kernel(%arg0: i32, %arg1: memref<8x32xf32, #tpu.memory_space<vmem>>, %arg2: memref<2x32xf32, #tpu.memory_space<vmem>>) attributes {dimension_semantics = [#tpu.dimension_semantics<arbitrary>], iteration_bounds = array<i64: 1>, scalar_prefetch = 0 : i64, scratch_operands = 0 : i64, tpu.core_type = #tpu.core_type<tc>, window_params = [{transform_indices = @transform_0, window_bounds = array<i64: 8, 32>}, {pipeline_mode = #tpu.pipeline_mode<synchronous>, transform_indices = @transform_1, window_bounds = array<i64: 2, 32>}]} {
    %c0_i32 = arith.constant 0 : i32
    %0 = arith.cmpi eq, %arg0, %c0_i32 : i32
    %1 = arith.extui %0 : i1 to i32
    %c0_i32_0 = arith.constant 0 : i32
    %2 = arith.cmpi ne, %1, %c0_i32_0 : i32
    scf.if %2 {
      %cst_9 = arith.constant 0.000000e+00 : f32
      %21 = vector.broadcast %cst_9 : f32 to vector<2x32xf32>
      %c0_10 = arith.constant 0 : index
      %c0_11 = arith.constant 0 : index
      %22 = vector.load %arg2[%c0_10, %c0_11] : memref<2x32xf32, #tpu.memory_space<vmem>>, vector<2x32xf32>
      tpu.vector_store %arg2[%c0_10, %c0_11], %21 {strides = array<i32>} : memref<2x32xf32, #tpu.memory_space<vmem>>, vector<2x32xf32>,
    } else {
    }
    %c0 = arith.constant 0 : index
    %c0_1 = arith.constant 0 : index
    %3 = vector.load %arg1[%c0, %c0_1] : memref<8x32xf32, #tpu.memory_space<vmem>>, vector<8x32xf32>
    %4 = tpu.iota {dimensions = array<i32: 0>} : vector<8x32xi32>
    %c8_i32 = arith.constant 8 : i32
    %5 = arith.muli %arg0, %c8_i32 : i32
    %6 = vector.broadcast %5 : i32 to vector<8x32xi32>
    %7 = arith.addi %4, %6 : vector<8x32xi32>
    %c8_i32_2 = arith.constant 8 : i32
    %8 = vector.broadcast %c8_i32_2 : i32 to vector<8x32xi32>
    %9 = arith.cmpi slt, %7, %8 : vector<8x32xi32>
    %cst = arith.constant 0.000000e+00 : f32
    %10 = vector.broadcast %cst : f32 to vector<8x32xf32>
    %11 = arith.select %9, %3, %10 : vector<8x32xi1>, vector<8x32xf32>
    %cst_3 = arith.constant dense<0.000000e+00> : vector<32xf32>
    %12 = vector.multi_reduction <add>, %11, %cst_3 [0] : vector<8x32xf32> to vector<32xf32>
    %13 = vector.shape_cast %12 : vector<32xf32> to vector<1x32xf32>
    %14 = arith.mulf %11, %11 : vector<8x32xf32>
    %cst_4 = arith.constant dense<0.000000e+00> : vector<32xf32>
    %15 = vector.multi_reduction <add>, %14, %cst_4 [0] : vector<8x32xf32> to vector<32xf32>
    %16 = vector.shape_cast %15 : vector<32xf32> to vector<1x32xf32>
    %17 = tpu.concatenate %13, %16 in 0 : vector<1x32xf32>, vector<1x32xf32> -> vector<2x32xf32>
    %c0_5 = arith.constant 0 : index
    %c0_6 = arith.constant 0 : index
    %18 = vector.load %arg2[%c0_5, %c0_6] : memref<2x32xf32, #tpu.memory_space<vmem>>, vector<2x32xf32>
    %19 = arith.addf %18, %17 : vector<2x32xf32>
    %c0_7 = arith.constant 0 : index
    %c0_8 = arith.constant 0 : index
    %20 = vector.load %arg2[%c0_7, %c0_8] : memref<2x32xf32, #tpu.memory_space<vmem>>, vector<2x32xf32>
    tpu.vector_store %arg2[%c0_7, %c0_8], %19 {strides = array<i32>} : memref<2x32xf32, #tpu.memory_space<vmem>>, vector<2x32xf32>,
    return
  }
  func.func @transform_0(%arg0: i32) -> (i32, i32) {
    %c0_i32 = arith.constant 0 : i32
    %c0_i32_0 = arith.constant 0 : i32
    return %arg0, %c0_i32 : i32, i32
  }
  func.func @transform_1(%arg0: i32) -> (i32, i32) {
    %c0_i32 = arith.constant 0 : i32
    %c0_i32_0 = arith.constant 0 : i32
    %c0_i32_1 = arith.constant 0 : i32
    return %c0_i32, %c0_i32_0 : i32, i32
  }
}

module attributes {stable_mosaic.version = 11 : i64} {
  func.func @apply_kernel(%arg0: i32, %arg1: memref<8x32xf32, #tpu.memory_space<vmem>>, %arg2: memref<1x32xf32, #tpu.memory_space<vmem>>, %arg3: memref<1x32xf32, #tpu.memory_space<vmem>>, %arg4: memref<8x32xf32, #tpu.memory_space<vmem>>) attributes {dimension_semantics = [#tpu.dimension_semantics<parallel>], iteration_bounds = array<i64: 1>, scalar_prefetch = 0 : i64, scratch_operands = 0 : i64, tpu.core_type = #tpu.core_type<tc>, window_params = [{transform_indices = @transform_0, window_bounds = array<i64: 8, 32>}, {pipeline_mode = #tpu.pipeline_mode<synchronous>, transform_indices = @transform_1, window_bounds = array<i64: 1, 32>}, {pipeline_mode = #tpu.pipeline_mode<synchronous>, transform_indices = @transform_2, window_bounds = array<i64: 1, 32>}, {transform_indices = @transform_3, window_bounds = array<i64: 8, 32>}]} {
    %c0 = arith.constant 0 : index
    %c0_0 = arith.constant 0 : index
    %0 = vector.load %arg1[%c0, %c0_0] : memref<8x32xf32, #tpu.memory_space<vmem>>, vector<8x32xf32>
    %c0_1 = arith.constant 0 : index
    %c0_2 = arith.constant 0 : index
    %1 = vector.load %arg2[%c0_1, %c0_2] : memref<1x32xf32, #tpu.memory_space<vmem>>, vector<1x32xf32>
    %2 = vector.broadcast %1 : vector<1x32xf32> to vector<8x32xf32>
    %3 = arith.mulf %0, %2 : vector<8x32xf32>
    %c0_3 = arith.constant 0 : index
    %c0_4 = arith.constant 0 : index
    %4 = vector.load %arg3[%c0_3, %c0_4] : memref<1x32xf32, #tpu.memory_space<vmem>>, vector<1x32xf32>
    %5 = vector.broadcast %4 : vector<1x32xf32> to vector<8x32xf32>
    %6 = arith.addf %3, %5 : vector<8x32xf32>
    %c0_5 = arith.constant 0 : index
    %c0_6 = arith.constant 0 : index
    %7 = vector.load %arg4[%c0_5, %c0_6] : memref<8x32xf32, #tpu.memory_space<vmem>>, vector<8x32xf32>
    tpu.vector_store %arg4[%c0_5, %c0_6], %6 {strides = array<i32>} : memref<8x32xf32, #tpu.memory_space<vmem>>, vector<8x32xf32>,
    return
  }
  func.func @transform_0(%arg0: i32) -> (i32, i32) {
    %c0_i32 = arith.constant 0 : i32
    %c0_i32_0 = arith.constant 0 : i32
    return %arg0, %c0_i32 : i32, i32
  }
  func.func @transform_1(%arg0: i32) -> (i32, i32) {
    %c0_i32 = arith.constant 0 : i32
    %c0_i32_0 = arith.constant 0 : i32
    %c0_i32_1 = arith.constant 0 : i32
    return %c0_i32, %c0_i32_0 : i32, i32
  }
  func.func @transform_2(%arg0: i32) -> (i32, i32) {
    %c0_i32 = arith.constant 0 : i32
    %c0_i32_0 = arith.constant 0 : i32
    %c0_i32_1 = arith.constant 0 : i32
    return %c0_i32, %c0_i32_0 : i32, i32
  }
  func.func @transform_3(%arg0: i32) -> (i32, i32) {
    %c0_i32 = arith.constant 0 : i32
    %c0_i32_0 = arith.constant 0 : i32
    return %arg0, %c0_i32 : i32, i32
  }
}

module attributes {stable_mosaic.version = 11 : i64} {
  func.func @kernel(%arg0: i32, %arg1: memref<32x72xf32, #tpu.memory_space<vmem>>, %arg2: memref<72x32xf32, #tpu.memory_space<vmem>>, %arg3: memref<1x32xf32, #tpu.memory_space<vmem>>, %arg4: memref<32x32xf32, #tpu.memory_space<vmem>>, %arg5: memref<32x32xf32, #tpu.memory_space<vmem>>) attributes {dimension_semantics = [#tpu.dimension_semantics<parallel>], iteration_bounds = array<i64: 1>, scalar_prefetch = 0 : i64, scratch_operands = 0 : i64, tpu.core_type = #tpu.core_type<tc>, window_params = [{transform_indices = @transform_0, window_bounds = array<i64: 32, 72>}, {pipeline_mode = #tpu.pipeline_mode<synchronous>, transform_indices = @transform_1, window_bounds = array<i64: 72, 32>}, {pipeline_mode = #tpu.pipeline_mode<synchronous>, transform_indices = @transform_2, window_bounds = array<i64: 1, 32>}, {transform_indices = @transform_3, window_bounds = array<i64: 32, 32>}, {transform_indices = @transform_4, window_bounds = array<i64: 32, 32>}]} {
    %c0 = arith.constant 0 : index
    %c0_0 = arith.constant 0 : index
    %0 = vector.load %arg1[%c0, %c0_0] : memref<32x72xf32, #tpu.memory_space<vmem>>, vector<32x72xf32>
    %c0_1 = arith.constant 0 : index
    %c0_2 = arith.constant 0 : index
    %1 = vector.load %arg2[%c0_1, %c0_2] : memref<72x32xf32, #tpu.memory_space<vmem>>, vector<72x32xf32>
    %cst = arith.constant dense<0.000000e+00> : vector<32x32xf32>
    %2 = tpu.matmul %0, %1, %cst {dimension_numbers = #tpu.dot_dimension_numbers<[1], [0], [0], [1], [0, 0, 1, 1], [], []>} : vector<32x72xf32>, vector<72x32xf32>, vector<32x32xf32> -> vector<32x32xf32>
    %c0_3 = arith.constant 0 : index
    %c0_4 = arith.constant 0 : index
    %3 = vector.load %arg3[%c0_3, %c0_4] : memref<1x32xf32, #tpu.memory_space<vmem>>, vector<1x32xf32>
    %4 = vector.broadcast %3 : vector<1x32xf32> to vector<32x32xf32>
    %5 = arith.addf %2, %4 : vector<32x32xf32>
    %c0_5 = arith.constant 0 : index
    %c0_6 = arith.constant 0 : index
    %6 = vector.load %arg4[%c0_5, %c0_6] : memref<32x32xf32, #tpu.memory_space<vmem>>, vector<32x32xf32>
    %7 = arith.addf %5, %6 : vector<32x32xf32>
    %c0_7 = arith.constant 0 : index
    %c0_8 = arith.constant 0 : index
    %8 = vector.load %arg5[%c0_7, %c0_8] : memref<32x32xf32, #tpu.memory_space<vmem>>, vector<32x32xf32>
    tpu.vector_store %arg5[%c0_7, %c0_8], %7 {strides = array<i32>} : memref<32x32xf32, #tpu.memory_space<vmem>>, vector<32x32xf32>,
    return
  }
  func.func @transform_0(%arg0: i32) -> (i32, i32) {
    %c0_i32 = arith.constant 0 : i32
    %c0_i32_0 = arith.constant 0 : i32
    return %arg0, %c0_i32 : i32, i32
  }
  func.func @transform_1(%arg0: i32) -> (i32, i32) {
    %c0_i32 = arith.constant 0 : i32
    %c0_i32_0 = arith.constant 0 : i32
    %c0_i32_1 = arith.constant 0 : i32
    return %c0_i32, %c0_i32_0 : i32, i32
  }
  func.func @transform_2(%arg0: i32) -> (i32, i32) {
    %c0_i32 = arith.constant 0 : i32
    %c0_i32_0 = arith.constant 0 : i32
    %c0_i32_1 = arith.constant 0 : i32
    return %c0_i32, %c0_i32_0 : i32, i32
  }
  func.func @transform_3(%arg0: i32) -> (i32, i32) {
    %c0_i32 = arith.constant 0 : i32
    %c0_i32_0 = arith.constant 0 : i32
    return %arg0, %c0_i32 : i32, i32
  }
  func.func @transform_4(%arg0: i32) -> (i32, i32) {
    %c0_i32 = arith.constant 0 : i32
    %c0_i32_0 = arith.constant 0 : i32
    return %arg0, %c0_i32 : i32, i32
  }
}

module attributes {stable_mosaic.version = 11 : i64} {
  func.func @stats_kernel(%arg0: i32, %arg1: memref<32x32xf32, #tpu.memory_space<vmem>>, %arg2: memref<2x32xf32, #tpu.memory_space<vmem>>) attributes {dimension_semantics = [#tpu.dimension_semantics<arbitrary>], iteration_bounds = array<i64: 1>, scalar_prefetch = 0 : i64, scratch_operands = 0 : i64, tpu.core_type = #tpu.core_type<tc>, window_params = [{transform_indices = @transform_0, window_bounds = array<i64: 32, 32>}, {pipeline_mode = #tpu.pipeline_mode<synchronous>, transform_indices = @transform_1, window_bounds = array<i64: 2, 32>}]} {
    %c0_i32 = arith.constant 0 : i32
    %0 = arith.cmpi eq, %arg0, %c0_i32 : i32
    %1 = arith.extui %0 : i1 to i32
    %c0_i32_0 = arith.constant 0 : i32
    %2 = arith.cmpi ne, %1, %c0_i32_0 : i32
    scf.if %2 {
      %cst_9 = arith.constant 0.000000e+00 : f32
      %21 = vector.broadcast %cst_9 : f32 to vector<2x32xf32>
      %c0_10 = arith.constant 0 : index
      %c0_11 = arith.constant 0 : index
      %22 = vector.load %arg2[%c0_10, %c0_11] : memref<2x32xf32, #tpu.memory_space<vmem>>, vector<2x32xf32>
      tpu.vector_store %arg2[%c0_10, %c0_11], %21 {strides = array<i32>} : memref<2x32xf32, #tpu.memory_space<vmem>>, vector<2x32xf32>,
    } else {
    }
    %c0 = arith.constant 0 : index
    %c0_1 = arith.constant 0 : index
    %3 = vector.load %arg1[%c0, %c0_1] : memref<32x32xf32, #tpu.memory_space<vmem>>, vector<32x32xf32>
    %4 = tpu.iota {dimensions = array<i32: 0>} : vector<32x32xi32>
    %c32_i32 = arith.constant 32 : i32
    %5 = arith.muli %arg0, %c32_i32 : i32
    %6 = vector.broadcast %5 : i32 to vector<32x32xi32>
    %7 = arith.addi %4, %6 : vector<32x32xi32>
    %c32_i32_2 = arith.constant 32 : i32
    %8 = vector.broadcast %c32_i32_2 : i32 to vector<32x32xi32>
    %9 = arith.cmpi slt, %7, %8 : vector<32x32xi32>
    %cst = arith.constant 0.000000e+00 : f32
    %10 = vector.broadcast %cst : f32 to vector<32x32xf32>
    %11 = arith.select %9, %3, %10 : vector<32x32xi1>, vector<32x32xf32>
    %cst_3 = arith.constant dense<0.000000e+00> : vector<32xf32>
    %12 = vector.multi_reduction <add>, %11, %cst_3 [0] : vector<32x32xf32> to vector<32xf32>
    %13 = vector.shape_cast %12 : vector<32xf32> to vector<1x32xf32>
    %14 = arith.mulf %11, %11 : vector<32x32xf32>
    %cst_4 = arith.constant dense<0.000000e+00> : vector<32xf32>
    %15 = vector.multi_reduction <add>, %14, %cst_4 [0] : vector<32x32xf32> to vector<32xf32>
    %16 = vector.shape_cast %15 : vector<32xf32> to vector<1x32xf32>
    %17 = tpu.concatenate %13, %16 in 0 : vector<1x32xf32>, vector<1x32xf32> -> vector<2x32xf32>
    %c0_5 = arith.constant 0 : index
    %c0_6 = arith.constant 0 : index
    %18 = vector.load %arg2[%c0_5, %c0_6] : memref<2x32xf32, #tpu.memory_space<vmem>>, vector<2x32xf32>
    %19 = arith.addf %18, %17 : vector<2x32xf32>
    %c0_7 = arith.constant 0 : index
    %c0_8 = arith.constant 0 : index
    %20 = vector.load %arg2[%c0_7, %c0_8] : memref<2x32xf32, #tpu.memory_space<vmem>>, vector<2x32xf32>
    tpu.vector_store %arg2[%c0_7, %c0_8], %19 {strides = array<i32>} : memref<2x32xf32, #tpu.memory_space<vmem>>, vector<2x32xf32>,
    return
  }
  func.func @transform_0(%arg0: i32) -> (i32, i32) {
    %c0_i32 = arith.constant 0 : i32
    %c0_i32_0 = arith.constant 0 : i32
    return %arg0, %c0_i32 : i32, i32
  }
  func.func @transform_1(%arg0: i32) -> (i32, i32) {
    %c0_i32 = arith.constant 0 : i32
    %c0_i32_0 = arith.constant 0 : i32
    %c0_i32_1 = arith.constant 0 : i32
    return %c0_i32, %c0_i32_0 : i32, i32
  }
}

module attributes {stable_mosaic.version = 11 : i64} {
  func.func @apply_kernel(%arg0: i32, %arg1: memref<32x32xf32, #tpu.memory_space<vmem>>, %arg2: memref<1x32xf32, #tpu.memory_space<vmem>>, %arg3: memref<1x32xf32, #tpu.memory_space<vmem>>, %arg4: memref<32x32xf32, #tpu.memory_space<vmem>>) attributes {dimension_semantics = [#tpu.dimension_semantics<parallel>], iteration_bounds = array<i64: 1>, scalar_prefetch = 0 : i64, scratch_operands = 0 : i64, tpu.core_type = #tpu.core_type<tc>, window_params = [{transform_indices = @transform_0, window_bounds = array<i64: 32, 32>}, {pipeline_mode = #tpu.pipeline_mode<synchronous>, transform_indices = @transform_1, window_bounds = array<i64: 1, 32>}, {pipeline_mode = #tpu.pipeline_mode<synchronous>, transform_indices = @transform_2, window_bounds = array<i64: 1, 32>}, {transform_indices = @transform_3, window_bounds = array<i64: 32, 32>}]} {
    %c0 = arith.constant 0 : index
    %c0_0 = arith.constant 0 : index
    %0 = vector.load %arg1[%c0, %c0_0] : memref<32x32xf32, #tpu.memory_space<vmem>>, vector<32x32xf32>
    %c0_1 = arith.constant 0 : index
    %c0_2 = arith.constant 0 : index
    %1 = vector.load %arg2[%c0_1, %c0_2] : memref<1x32xf32, #tpu.memory_space<vmem>>, vector<1x32xf32>
    %2 = vector.broadcast %1 : vector<1x32xf32> to vector<32x32xf32>
    %3 = arith.mulf %0, %2 : vector<32x32xf32>
    %c0_3 = arith.constant 0 : index
    %c0_4 = arith.constant 0 : index
    %4 = vector.load %arg3[%c0_3, %c0_4] : memref<1x32xf32, #tpu.memory_space<vmem>>, vector<1x32xf32>
    %5 = vector.broadcast %4 : vector<1x32xf32> to vector<32x32xf32>
    %6 = arith.addf %3, %5 : vector<32x32xf32>
    %c0_5 = arith.constant 0 : index
    %c0_6 = arith.constant 0 : index
    %7 = vector.load %arg4[%c0_5, %c0_6] : memref<32x32xf32, #tpu.memory_space<vmem>>, vector<32x32xf32>
    tpu.vector_store %arg4[%c0_5, %c0_6], %6 {strides = array<i32>} : memref<32x32xf32, #tpu.memory_space<vmem>>, vector<32x32xf32>,
    return
  }
  func.func @transform_0(%arg0: i32) -> (i32, i32) {
    %c0_i32 = arith.constant 0 : i32
    %c0_i32_0 = arith.constant 0 : i32
    return %arg0, %c0_i32 : i32, i32
  }
  func.func @transform_1(%arg0: i32) -> (i32, i32) {
    %c0_i32 = arith.constant 0 : i32
    %c0_i32_0 = arith.constant 0 : i32
    %c0_i32_1 = arith.constant 0 : i32
    return %c0_i32, %c0_i32_0 : i32, i32
  }
  func.func @transform_2(%arg0: i32) -> (i32, i32) {
    %c0_i32 = arith.constant 0 : i32
    %c0_i32_0 = arith.constant 0 : i32
    %c0_i32_1 = arith.constant 0 : i32
    return %c0_i32, %c0_i32_0 : i32, i32
  }
  func.func @transform_3(%arg0: i32) -> (i32, i32) {
    %c0_i32 = arith.constant 0 : i32
    %c0_i32_0 = arith.constant 0 : i32
    return %arg0, %c0_i32 : i32, i32
  }
}

module attributes {stable_mosaic.version = 11 : i64} {
  func.func @kernel(%arg0: i32, %arg1: memref<128x72xf32, #tpu.memory_space<vmem>>, %arg2: memref<72x512xf32, #tpu.memory_space<vmem>>, %arg3: memref<1x512xf32, #tpu.memory_space<vmem>>, %arg4: memref<128x512xf32, #tpu.memory_space<vmem>>) attributes {dimension_semantics = [#tpu.dimension_semantics<parallel>], iteration_bounds = array<i64: 1>, scalar_prefetch = 0 : i64, scratch_operands = 0 : i64, tpu.core_type = #tpu.core_type<tc>, window_params = [{transform_indices = @transform_0, window_bounds = array<i64: 128, 72>}, {pipeline_mode = #tpu.pipeline_mode<synchronous>, transform_indices = @transform_1, window_bounds = array<i64: 72, 512>}, {pipeline_mode = #tpu.pipeline_mode<synchronous>, transform_indices = @transform_2, window_bounds = array<i64: 1, 512>}, {transform_indices = @transform_3, window_bounds = array<i64: 128, 512>}]} {
    %c0 = arith.constant 0 : index
    %c0_0 = arith.constant 0 : index
    %0 = vector.load %arg1[%c0, %c0_0] : memref<128x72xf32, #tpu.memory_space<vmem>>, vector<128x72xf32>
    %c0_1 = arith.constant 0 : index
    %c0_2 = arith.constant 0 : index
    %1 = vector.load %arg2[%c0_1, %c0_2] : memref<72x512xf32, #tpu.memory_space<vmem>>, vector<72x512xf32>
    %cst = arith.constant dense<0.000000e+00> : vector<128x512xf32>
    %2 = tpu.matmul %0, %1, %cst {dimension_numbers = #tpu.dot_dimension_numbers<[1], [0], [0], [1], [0, 0, 1, 1], [], []>} : vector<128x72xf32>, vector<72x512xf32>, vector<128x512xf32> -> vector<128x512xf32>
    %c0_3 = arith.constant 0 : index
    %c0_4 = arith.constant 0 : index
    %3 = vector.load %arg3[%c0_3, %c0_4] : memref<1x512xf32, #tpu.memory_space<vmem>>, vector<1x512xf32>
    %4 = vector.broadcast %3 : vector<1x512xf32> to vector<128x512xf32>
    %5 = arith.addf %2, %4 : vector<128x512xf32>
    %c0_5 = arith.constant 0 : index
    %c0_6 = arith.constant 0 : index
    %6 = vector.load %arg4[%c0_5, %c0_6] : memref<128x512xf32, #tpu.memory_space<vmem>>, vector<128x512xf32>
    tpu.vector_store %arg4[%c0_5, %c0_6], %5 {strides = array<i32>} : memref<128x512xf32, #tpu.memory_space<vmem>>, vector<128x512xf32>,
    return
  }
  func.func @transform_0(%arg0: i32) -> (i32, i32) {
    %c0_i32 = arith.constant 0 : i32
    %c0_i32_0 = arith.constant 0 : i32
    return %arg0, %c0_i32 : i32, i32
  }
  func.func @transform_1(%arg0: i32) -> (i32, i32) {
    %c0_i32 = arith.constant 0 : i32
    %c0_i32_0 = arith.constant 0 : i32
    %c0_i32_1 = arith.constant 0 : i32
    return %c0_i32, %c0_i32_0 : i32, i32
  }
  func.func @transform_2(%arg0: i32) -> (i32, i32) {
    %c0_i32 = arith.constant 0 : i32
    %c0_i32_0 = arith.constant 0 : i32
    %c0_i32_1 = arith.constant 0 : i32
    return %c0_i32, %c0_i32_0 : i32, i32
  }
  func.func @transform_3(%arg0: i32) -> (i32, i32) {
    %c0_i32 = arith.constant 0 : i32
    %c0_i32_0 = arith.constant 0 : i32
    return %arg0, %c0_i32 : i32, i32
  }
}

</mosaic_0001>

<llo_original>
// kernel: tile.38
$region0: #{tile.38}
  #allocation2 [shape = 's32[1]{0}', space=sflag, size = 0x4, scoped, tag = 'scoped memory for tile.38']
  %s0 = inlined_call_operand.hbm [shape: f32[8], index: 0, kind: input, shape index: {}]
  %s1 = inlined_call_operand.vmem [shape: f32[4,8], index: 1, kind: output, shape index: {}]
  $region1: #{tile.38} parent=0
    #allocation0 [shape = 'u8[512]{0}', space=vmem, size = 0x400, scoped, tag = 'operand span for operand 0']
    #allocation1 [shape = 's32[1]{0}', space=sflag, size = 0x4, scoped, tag = 'scoped memory for tile.38']
    %2 = vsyncpa [#allocation1], 0
    // Predicated region
    $region2: #{tile.38} parent=1 // pred_check
      _
    $region3: #{tile.38} parent=1 // pred_check_branch
      %4 = sbr.rel (0) target = $region5
    $region4: #{tile.38} parent=1 // pred_region
      %s6 = ssub.s32 16, 16
      %7 = vsyncadd [#allocation1], %s6
      %s9 = sshll.u32 [#allocation0], 4
      %s10 = int_to_ptr.vmem [resolvable:$true] %s9
      %12 = dma.hbm_to_vmem [thread:$0]  %s0, 16, %s10, [#allocation1]
    $region5: #{tile.38} parent=1 // pred_fallthru
      _
    // Predicated region
    $region6: #{tile.38} parent=1 // pred_check
      _
    $region7: #{tile.38} parent=1 // pred_check_branch
      %14 = sbr.rel (0) target = $region9
    $region8: #{tile.38} parent=1 // pred_region
      %15 = dma.done [#allocation1], 16
    $region9: #{tile.38} parent=1 // pred_fallthru
      _
    %v16 = vld [vmem:[#allocation0] ss:$0 sm:$0xff]
    %17 = vst [vmem:[%s1] sm:$0xf] %v16
    %18 = vsyncpa [#allocation1], 1

// kernel: tile.39
$region0: #{tile.39}
  %s0 = inlined_call_operand.vmem [shape: f32[4,8], index: 0, kind: input, shape index: {}]
  %s1 = inlined_call_operand.vmem [shape: f32[1,32], index: 1, kind: output, shape index: {}]
  $region1: #{tile.39} parent=0
    #allocation0 [shape = 'u8[4096]{0}', space=vmem, size = 0x1000, scoped, tag = 'scoped mem for output reshape']
    #allocation1 [shape = 'u8[4096]{0}', space=vmem, size = 0x1000, scoped, tag = 'scoped mem for input reshape']
    %s3 = sshllo.u32 0, 4
    %v4 = vld [vmem:[%s0] sm:%s3]
    %5 = vst [vmem:[#allocation1] sm:%s3] %v4
    %v6 = vld [vmem:[#allocation1] sm:$0x1]
    %vm7 = vcmask 64512
    %8 = vst.msk [vmem:[#allocation0] sm:$0x1] %vm7, %v6
    %s9 = scalar_lea.vmem [#allocation1], 3
    %v10 = vld [vmem:[%s9] sm:$0x1]
    %11 = vrot.lane.b32.xlu0 %v10, 24
    %v12 = vpop.permute.xlu0 %11
    %vm13 = vcmask 261312
    %14 = vst.msk [vmem:[#allocation0] sm:$0x1] %vm13, %v12
    %s15 = scalar_lea.vmem [#allocation1], 2
    %v16 = vld [vmem:[%s15] sm:$0x1]
    %17 = vrot.lane.b32.xlu0 %v16, 16
    %v18 = vpop.permute.xlu0 %17
    %vm19 = vcmask 195712
    %20 = vst.msk [vmem:[#allocation0] sm:$0x1] %vm19, %v18
    %s21 = scalar_lea.vmem [#allocation1], 1
    %v22 = vld [vmem:[%s21] sm:$0x1]
    %23 = vrot.lane.b32.xlu0 %v22, 8
    %v24 = vpop.permute.xlu0 %23
    %vm25 = vcmask 130112
    %26 = vst.msk [vmem:[#allocation0] sm:$0x1] %vm25, %v24
    %s28 = sshllo.u32 0, 1
    %v30 = vld [vmem:[#allocation0] sm:%s28]
    %s31 = sshllo.u32 0, 1
    %32 = vst [vmem:[%s1] sm:%s31] %v30

// kernel: tile.68
$region0: #{tile.68}
  #allocation2 [shape = 's32[1]{0}', space=sflag, size = 0x4, scoped, tag = 'scoped memory for tile.68']
  %s0 = inlined_call_operand.hbm [shape: f32[8], index: 0, kind: input, shape index: {}]
  %s1 = inlined_call_operand.vmem [shape: f32[64,8], index: 1, kind: output, shape index: {}]
  $region1: #{tile.68} parent=0
    #allocation0 [shape = 'u8[512]{0}', space=vmem, size = 0x400, scoped, tag = 'operand span for operand 0']
    #allocation1 [shape = 's32[1]{0}', space=sflag, size = 0x4, scoped, tag = 'scoped memory for tile.68']
    %2 = vsyncpa [#allocation1], 0
    // Predicated region
    $region2: #{tile.68} parent=1 // pred_check
      _
    $region3: #{tile.68} parent=1 // pred_check_branch
      %4 = sbr.rel (0) target = $region5
    $region4: #{tile.68} parent=1 // pred_region
      %s6 = ssub.s32 16, 16
      %7 = vsyncadd [#allocation1], %s6
      %s9 = sshll.u32 [#allocation0], 4
      %s10 = int_to_ptr.vmem [resolvable:$true] %s9
      %12 = dma.hbm_to_vmem [thread:$0]  %s0, 16, %s10, [#allocation1]
    $region5: #{tile.68} parent=1 // pred_fallthru
      _
    // Predicated region
    $region6: #{tile.68} parent=1 // pred_check
      _
    $region7: #{tile.68} parent=1 // pred_check_branch
      %14 = sbr.rel (0) target = $region9
    $region8: #{tile.68} parent=1 // pred_region
      %15 = dma.done [#allocation1], 16
    $region9: #{tile.68} parent=1 // pred_fallthru
      _
    %v16 = vld [vmem:[#allocation0] ss:$0 sm:$0xff]
    %17 = vst [vmem:[%s1] sm:$0xff] %v16
    %s18 = scalar_lea.vmem %s1, 8
    %19 = vst [vmem:[%s18] sm:$0xff] %v16
    %s20 = scalar_lea.vmem %s1, 16
    %21 = vst [vmem:[%s20] sm:$0xff] %v16
    %s22 = scalar_lea.vmem %s1, 24
    %23 = vst [vmem:[%s22] sm:$0xff] %v16
    %s24 = scalar_lea.vmem %s1, 32
    %25 = vst [vmem:[%s24] sm:$0xff] %v16
    %s26 = scalar_lea.vmem %s1, 40
    %27 = vst [vmem:[%s26] sm:$0xff] %v16
    %s28 = scalar_lea.vmem %s1, 48
    %29 = vst [vmem:[%s28] sm:$0xff] %v16
    %s30 = scalar_lea.vmem %s1, 56
    %31 = vst [vmem:[%s30] sm:$0xff] %v16
    %32 = vsyncpa [#allocation1], 1

// kernel: tile.69
$region0: #{tile.69}
  %s0 = inlined_call_operand.vmem [shape: f32[64,8], index: 0, kind: input, shape index: {}]
  %s1 = inlined_call_operand.vmem [shape: f32[1,512], index: 1, kind: output, shape index: {}]
  $region1: #{tile.69} parent=0
    #allocation0 [shape = 'u8[16384]{0}', space=vmem, size = 0x4000, scoped, tag = 'scoped mem for output reshape']
    %s2 = smov 3
    %v3 = vld [vmem:[%s0] ss:$16 sm:%s2]
    %s4 = smov 12
    %v5 = vld [vmem:[%s0] ss:$16 sm:%s4]
    %vm6 = vcmask 1043458
    %v7 = vsel %vm6, %v5, %v3
    %vm8 = vcmask 64512
    %9 = vst.msk [vmem:[#allocation0] ss:$8 sm:$0xf] %vm8, %v7
    %s10 = scalar_lea.vmem %s0, 15
    %s11 = smov 3
    %v12 = vld [vmem:[%s10] ss:$16 sm:%s11]
    %s13 = scalar_lea.vmem %s0, 15
    %s14 = smov 12
    %v15 = vld [vmem:[%s13] ss:$16 sm:%s14]
    %vm16 = vcmask 1043458
    %v17 = vsel %vm16, %v15, %v12
    %18 = vrot.lane.b32.xlu0 %v17, 120
    %v19 = vpop.permute.xlu0 %18
    %vm20 = vcmask 1048512
    %21 = vst.msk [vmem:[#allocation0] ss:$8 sm:$0xf] %vm20, %v19
    %s22 = scalar_lea.vmem %s0, 14
    %s23 = smov 3
    %v24 = vld [vmem:[%s22] ss:$16 sm:%s23]
    %s25 = scalar_lea.vmem %s0, 14
    %s26 = smov 12
    %v27 = vld [vmem:[%s25] ss:$16 sm:%s26]
    %vm28 = vcmask 1043458
    %v29 = vsel %vm28, %v27, %v24
    %30 = vrot.lane.b32.xlu0 %v29, 112
    %v31 = vpop.permute.xlu0 %30
    %vm32 = vcmask 982912
    %33 = vst.msk [vmem:[#allocation0] ss:$8 sm:$0xf] %vm32, %v31
    %s34 = scalar_lea.vmem %s0, 13
    %s35 = smov 3
    %v36 = vld [vmem:[%s34] ss:$16 sm:%s35]
    %s37 = scalar_lea.vmem %s0, 13
    %s38 = smov 12
    %v39 = vld [vmem:[%s37] ss:$16 sm:%s38]
    %vm40 = vcmask 1043458
    %v41 = vsel %vm40, %v39, %v36
    %42 = vrot.lane.b32.xlu0 %v41, 104
    %v43 = vpop.permute.xlu0 %42
    %vm44 = vcmask 917312
    %45 = vst.msk [vmem:[#allocation0] ss:$8 sm:$0xf] %vm44, %v43
    %s46 = scalar_lea.vmem %s0, 12
    %s47 = smov 3
    %v48 = vld [vmem:[%s46] ss:$16 sm:%s47]
    %s49 = scalar_lea.vmem %s0, 12
    %s50 = smov 12
    %v51 = vld [vmem:[%s49] ss:$16 sm:%s50]
    %vm52 = vcmask 1043458
    %v53 = vsel %vm52, %v51, %v48
    %54 = vrot.lane.b32.xlu0 %v53, 96
    %v55 = vpop.permute.xlu0 %54
    %vm56 = vcmask 851712
    %57 = vst.msk [vmem:[#allocation0] ss:$8 sm:$0xf] %vm56, %v55
    %s58 = scalar_lea.vmem %s0, 11
    %s59 = smov 3
    %v60 = vld [vmem:[%s58] ss:$16 sm:%s59]
    %s61 = scalar_lea.vmem %s0, 11
    %s62 = smov 12
    %v63 = vld [vmem:[%s61] ss:$16 sm:%s62]
    %vm64 = vcmask 1043458
    %v65 = vsel %vm64, %v63, %v60
    %66 = vrot.lane.b32.xlu0 %v65, 88
    %v67 = vpop.permute.xlu0 %66
    %vm68 = vcmask 786112
    %69 = vst.msk [vmem:[#allocation0] ss:$8 sm:$0xf] %vm68, %v67
    %s70 = scalar_lea.vmem %s0, 10
    %s71 = smov 3
    %v72 = vld [vmem:[%s70] ss:$16 sm:%s71]
    %s73 = scalar_lea.vmem %s0, 10
    %s74 = smov 12
    %v75 = vld [vmem:[%s73] ss:$16 sm:%s74]
    %vm76 = vcmask 1043458
    %v77 = vsel %vm76, %v75, %v72
    %78 = vrot.lane.b32.xlu0 %v77, 80
    %v79 = vpop.permute.xlu0 %78
    %vm80 = vcmask 720512
    %81 = vst.msk [vmem:[#allocation0] ss:$8 sm:$0xf] %vm80, %v79
    %s82 = scalar_lea.vmem %s0, 9
    %s83 = smov 3
    %v84 = vld [vmem:[%s82] ss:$16 sm:%s83]
    %s85 = scalar_lea.vmem %s0, 9
    %s86 = smov 12
    %v87 = vld [vmem:[%s85] ss:$16 sm:%s86]
    %vm88 = vcmask 1043458
    %v89 = vsel %vm88, %v87, %v84
    %90 = vrot.lane.b32.xlu0 %v89, 72
    %v91 = vpop.permute.xlu0 %90
    %vm92 = vcmask 654912
    %93 = vst.msk [vmem:[#allocation0] ss:$8 sm:$0xf] %vm92, %v91
    %s94 = scalar_lea.vmem %s0, 8
    %s95 = smov 3
    %v96 = vld [vmem:[%s94] ss:$16 sm:%s95]
    %s97 = scalar_lea.vmem %s0, 8
    %s98 = smov 12
    %v99 = vld [vmem:[%s97] ss:$16 sm:%s98]
    %vm100 = vcmask 1043458
    %v101 = vsel %vm100, %v99, %v96
    %102 = vrot.lane.b32.xlu0 %v101, 64
    %v103 = vpop.permute.xlu0 %102
    %vm104 = vcmask 589312
    %105 = vst.msk [vmem:[#allocation0] ss:$8 sm:$0xf] %vm104, %v103
    %s106 = scalar_lea.vmem %s0, 7
    %s107 = smov 3
    %v108 = vld [vmem:[%s106] ss:$16 sm:%s107]
    %s109 = scalar_lea.vmem %s0, 7
    %s110 = smov 12
    %v111 = vld [vmem:[%s109] ss:$16 sm:%s110]
    %vm112 = vcmask 1043458
    %v113 = vsel %vm112, %v111, %v108
    %114 = vrot.lane.b32.xlu0 %v113, 56
    %v115 = vpop.permute.xlu0 %114
    %vm116 = vcmask 523712
    %117 = vst.msk [vmem:[#allocation0] ss:$8 sm:$0xf] %vm116, %v115
    %s118 = scalar_lea.vmem %s0, 6
    %s119 = smov 3
    %v120 = vld [vmem:[%s118] ss:$16 sm:%s119]
    %s121 = scalar_lea.vmem %s0, 6
    %s122 = smov 12
    %v123 = vld [vmem:[%s121] ss:$16 sm:%s122]
    %vm124 = vcmask 1043458
    %v125 = vsel %vm124, %v123, %v120
    %126 = vrot.lane.b32.xlu0 %v125, 48
    %v127 = vpop.permute.xlu0 %126
    %vm128 = vcmask 458112
    %129 = vst.msk [vmem:[#allocation0] ss:$8 sm:$0xf] %vm128, %v127
    %s130 = scalar_lea.vmem %s0, 5
    %s131 = smov 3
    %v132 = vld [vmem:[%s130] ss:$16 sm:%s131]
    %s133 = scalar_lea.vmem %s0, 5
    %s134 = smov 12
    %v135 = vld [vmem:[%s133] ss:$16 sm:%s134]
    %vm136 = vcmask 1043458
    %v137 = vsel %vm136, %v135, %v132
    %138 = vrot.lane.b32.xlu0 %v137, 40
    %v139 = vpop.permute.xlu0 %138
    %vm140 = vcmask 392512
    %141 = vst.msk [vmem:[#allocation0] ss:$8 sm:$0xf] %vm140, %v139
    %s142 = scalar_lea.vmem %s0, 4
    %s143 = smov 3
    %v144 = vld [vmem:[%s142] ss:$16 sm:%s143]
    %s145 = scalar_lea.vmem %s0, 4
    %s146 = smov 12
    %v147 = vld [vmem:[%s145] ss:$16 sm:%s146]
    %vm148 = vcmask 1043458
    %v149 = vsel %vm148, %v147, %v144
    %150 = vrot.lane.b32.xlu0 %v149, 32
    %v151 = vpop.permute.xlu0 %150
    %vm152 = vcmask 326912
    %153 = vst.msk [vmem:[#allocation0] ss:$8 sm:$0xf] %vm152, %v151
    %s154 = scalar_lea.vmem %s0, 3
    %s155 = smov 3
    %v156 = vld [vmem:[%s154] ss:$16 sm:%s155]
    %s157 = scalar_lea.vmem %s0, 3
    %s158 = smov 12
    %v159 = vld [vmem:[%s157] ss:$16 sm:%s158]
    %vm160 = vcmask 1043458
    %v161 = vsel %vm160, %v159, %v156
    %162 = vrot.lane.b32.xlu0 %v161, 24
    %v163 = vpop.permute.xlu0 %162
    %vm164 = vcmask 261312
    %165 = vst.msk [vmem:[#allocation0] ss:$8 sm:$0xf] %vm164, %v163
    %s166 = scalar_lea.vmem %s0, 2
    %s167 = smov 3
    %v168 = vld [vmem:[%s166] ss:$16 sm:%s167]
    %s169 = scalar_lea.vmem %s0, 2
    %s170 = smov 12
    %v171 = vld [vmem:[%s169] ss:$16 sm:%s170]
    %vm172 = vcmask 1043458
    %v173 = vsel %vm172, %v171, %v168
    %174 = vrot.lane.b32.xlu0 %v173, 16
    %v175 = vpop.permute.xlu0 %174
    %vm176 = vcmask 195712
    %177 = vst.msk [vmem:[#allocation0] ss:$8 sm:$0xf] %vm176, %v175
    %s178 = scalar_lea.vmem %s0, 1
    %s179 = smov 3
    %v180 = vld [vmem:[%s178] ss:$16 sm:%s179]
    %s181 = scalar_lea.vmem %s0, 1
    %s182 = smov 12
    %v183 = vld [vmem:[%s181] ss:$16 sm:%s182]
    %vm184 = vcmask 1043458
    %v185 = vsel %vm184, %v183, %v180
    %186 = vrot.lane.b32.xlu0 %v185, 8
    %v187 = vpop.permute.xlu0 %186
    %vm188 = vcmask 130112
    %189 = vst.msk [vmem:[#allocation0] ss:$8 sm:$0xf] %vm188, %v187
    %s191 = sshllo.u32 0, 1
    %v193 = vld [vmem:[#allocation0] sm:%s191]
    %s194 = sshllo.u32 0, 1
    %195 = vst [vmem:[%s1] sm:%s194] %v193
    %s196 = scalar_lea.vmem [#allocation0], 8
    %v197 = vld [vmem:[%s196] sm:%s191]
    %s198 = sshllo.u32 0, 1
    %s199 = scalar_lea.vmem %s1, 1
    %200 = vst [vmem:[%s199] sm:%s198] %v197
    %s201 = scalar_lea.vmem [#allocation0], 16
    %v202 = vld [vmem:[%s201] sm:%s191]
    %s203 = sshllo.u32 0, 1
    %s204 = smul.addr 1, 2
    %s205 = scalar_lea.vmem %s1, %s204
    %206 = vst [vmem:[%s205] sm:%s203] %v202
    %s207 = scalar_lea.vmem [#allocation0], 24
    %v208 = vld [vmem:[%s207] sm:%s191]
    %s209 = sshllo.u32 0, 1
    %s210 = smul.addr 1, 3
    %s211 = scalar_lea.vmem %s1, %s210
    %212 = vst [vmem:[%s211] sm:%s209] %v208

// kernel: fcn8s_forward.15
$region0: #{fcn8s_forward.15}
  #allocation0 [shape = 'u32[]', space=smem, size = 0x4, offset = 0x4, fixed_abs, tag = 'smem constant byte address 0x4 - core index']
  #allocation1 [shape = 'u32[144,128]{1,0:T(1,128)}', space=vmem, size = 0x12000, scoped, tag = 'internal scratch']
  %s0 = inlined_call_operand.vmem [shape: f32[128,256], index: 0, kind: input, shape index: {}]
  %s1 = inlined_call_operand.vmem [shape: f32[256,8], index: 1, kind: input, shape index: {}]
  %s2 = inlined_call_operand.vmem [shape: f32[1,8], index: 2, kind: input, shape index: {}]
  %s3 = inlined_call_operand.vmem [shape: f32[128,8], index: 3, kind: output, shape index: {}]
  %s4 = sld [smem:[#allocation0]]
  $region22: #{fcn8s_forward.15} parent=0
    _
  %s6 = ssub.s32 1, %s4
  %s7 = scalar_select 0, %s6, %s4
  // Predicated region
  $region2: #{fcn8s_forward.15} parent=0 // pred_check
    _
  $region3: #{fcn8s_forward.15} parent=0 // pred_check_branch
    %9 = sbr.rel (0) target = $region5
  $region4: #{fcn8s_forward.15} parent=0 // pred_region
    _
  $region5: #{fcn8s_forward.15} parent=0 // pred_fallthru
    _
  // Predicated region
  $region6: #{fcn8s_forward.15} parent=0 // pred_check
    _
  $region7: #{fcn8s_forward.15} parent=0 // pred_check_branch
    %11 = sbr.rel (0) target = $region9
  $region8: #{fcn8s_forward.15} parent=0 // pred_region
    _
  $region9: #{fcn8s_forward.15} parent=0 // pred_fallthru
    _
  // Predicated region
  $region10: #{fcn8s_forward.15} parent=0 // pred_check
    _
  $region11: #{fcn8s_forward.15} parent=0 // pred_check_branch
    %13 = sbr.rel (0) target = $region13
  $region12: #{fcn8s_forward.15} parent=0 // pred_region
    _
  $region13: #{fcn8s_forward.15} parent=0 // pred_fallthru
    _
  %v14 = vld [vmem:[%s0] sm:$0xff]
  %v15 = vld [vmem:[%s0 + $0x8] sm:$0xff]
  %v16 = vld [vmem:[%s0 + $0x10] sm:$0xff]
  %v17 = vld [vmem:[%s0 + $0x18] sm:$0xff]
  %v18 = vld [vmem:[%s0 + $0x20] sm:$0xff]
  %v19 = vld [vmem:[%s0 + $0x28] sm:$0xff]
  %v20 = vld [vmem:[%s0 + $0x30] sm:$0xff]
  %v21 = vld [vmem:[%s0 + $0x38] sm:$0xff]
  %v22 = vld [vmem:[%s0 + $0x40] sm:$0xff]
  %v23 = vld [vmem:[%s0 + $0x48] sm:$0xff]
  %v24 = vld [vmem:[%s0 + $0x50] sm:$0xff]
  %v25 = vld [vmem:[%s0 + $0x58] sm:$0xff]
  %v26 = vld [vmem:[%s0 + $0x60] sm:$0xff]
  %v27 = vld [vmem:[%s0 + $0x68] sm:$0xff]
  %v28 = vld [vmem:[%s0 + $0x70] sm:$0xff]
  %v29 = vld [vmem:[%s0 + $0x78] sm:$0xff]
  %v30 = vld [vmem:[%s0 + $0x80] sm:$0xff]
  %v31 = vld [vmem:[%s0 + $0x88] sm:$0xff]
  %v32 = vld [vmem:[%s0 + $0x90] sm:$0xff]
  %v33 = vld [vmem:[%s0 + $0x98] sm:$0xff]
  %v34 = vld [vmem:[%s0 + $0xa0] sm:$0xff]
  %v35 = vld [vmem:[%s0 + $0xa8] sm:$0xff]
  %v36 = vld [vmem:[%s0 + $0xb0] sm:$0xff]
  %v37 = vld [vmem:[%s0 + $0xb8] sm:$0xff]
  %v38 = vld [vmem:[%s0 + $0xc0] sm:$0xff]
  %v39 = vld [vmem:[%s0 + $0xc8] sm:$0xff]
  %v40 = vld [vmem:[%s0 + $0xd0] sm:$0xff]
  %v41 = vld [vmem:[%s0 + $0xd8] sm:$0xff]
  %v42 = vld [vmem:[%s0 + $0xe0] sm:$0xff]
  %v43 = vld [vmem:[%s0 + $0xe8] sm:$0xff]
  %v44 = vld [vmem:[%s0 + $0xf0] sm:$0xff]
  %v45 = vld [vmem:[%s0 + $0xf8] sm:$0xff]
  %v46 = vld [vmem:[%s1] sm:$0xff]
  %v47 = vld [vmem:[%s1 + $0x8] sm:$0xff]
  %v48 = vld [vmem:[%s1 + $0x10] sm:$0xff]
  %v49 = vld [vmem:[%s1 + $0x18] sm:$0xff]
  %v50 = vld [vmem:[%s1 + $0x20] sm:$0xff]
  %v51 = vld [vmem:[%s1 + $0x28] sm:$0xff]
  %v52 = vld [vmem:[%s1 + $0x30] sm:$0xff]
  %v53 = vld [vmem:[%s1 + $0x38] sm:$0xff]
  %v54 = vld [vmem:[%s1 + $0x40] sm:$0xff]
  %v55 = vld [vmem:[%s1 + $0x48] sm:$0xff]
  %v56 = vld [vmem:[%s1 + $0x50] sm:$0xff]
  %v57 = vld [vmem:[%s1 + $0x58] sm:$0xff]
  %v58 = vld [vmem:[%s1 + $0x60] sm:$0xff]
  %v59 = vld [vmem:[%s1 + $0x68] sm:$0xff]
  %v60 = vld [vmem:[%s1 + $0x70] sm:$0xff]
  %v61 = vld [vmem:[%s1 + $0x78] sm:$0xff]
  %v62 = vld [vmem:[%s1 + $0x80] sm:$0xff]
  %v63 = vld [vmem:[%s1 + $0x88] sm:$0xff]
  %v64 = vld [vmem:[%s1 + $0x90] sm:$0xff]
  %v65 = vld [vmem:[%s1 + $0x98] sm:$0xff]
  %v66 = vld [vmem:[%s1 + $0xa0] sm:$0xff]
  %v67 = vld [vmem:[%s1 + $0xa8] sm:$0xff]
  %v68 = vld [vmem:[%s1 + $0xb0] sm:$0xff]
  %v69 = vld [vmem:[%s1 + $0xb8] sm:$0xff]
  %v70 = vld [vmem:[%s1 + $0xc0] sm:$0xff]
  %v71 = vld [vmem:[%s1 + $0xc8] sm:$0xff]
  %v72 = vld [vmem:[%s1 + $0xd0] sm:$0xff]
  %v73 = vld [vmem:[%s1 + $0xd8] sm:$0xff]
  %v74 = vld [vmem:[%s1 + $0xe0] sm:$0xff]
  %v75 = vld [vmem:[%s1 + $0xe8] sm:$0xff]
  %v76 = vld [vmem:[%s1 + $0xf0] sm:$0xff]
  %v77 = vld [vmem:[%s1 + $0xf8] sm:$0xff]
  %v78 = vld [vmem:[%s2] sm:$0x1]
  %v80 = vlaneseq
  %v81 = vshrl.u32 %v80, 7
  %v82 = vsub.s32 0, %v81
  %v83 = vrot.slane %v78, %v82
  %85 = vmatprep.subr.mxu0 0.0
  %86 = vmatpush1.msra.mxu0 %v46
  %87 = vmatprep.subr.mxu0 0.0
  %88 = vmatpush1.msra.mxu0 %v47
  %89 = vmatprep.subr.mxu0 0.0
  %90 = vmatpush1.msra.mxu0 %v48
  %91 = vmatprep.subr.mxu0 0.0
  %92 = vmatpush1.msra.mxu0 %v49
  %93 = vmatprep.subr.mxu0 0.0
  %94 = vmatpush1.msra.mxu0 %v50
  %95 = vmatprep.subr.mxu0 0.0
  %96 = vmatpush1.msra.mxu0 %v51
  %97 = vmatprep.subr.mxu0 0.0
  %98 = vmatpush1.msra.mxu0 %v52
  %99 = vmatprep.subr.mxu0 0.0
  %100 = vmatpush1.msra.mxu0 %v53
  %101 = vmatprep.subr.mxu0 0.0
  %102 = vmatpush1.msra.mxu0 %v54
  %103 = vmatprep.subr.mxu0 0.0
  %104 = vmatpush1.msra.mxu0 %v55
  %105 = vmatprep.subr.mxu0 0.0
  %106 = vmatpush1.msra.mxu0 %v56
  %107 = vmatprep.subr.mxu0 0.0
  %108 = vmatpush1.msra.mxu0 %v57
  %109 = vmatprep.subr.mxu0 0.0
  %110 = vmatpush1.msra.mxu0 %v58
  %111 = vmatprep.subr.mxu0 0.0
  %112 = vmatpush1.msra.mxu0 %v59
  %113 = vmatprep.subr.mxu0 0.0
  %114 = vmatpush1.msra.mxu0 %v60
  %115 = vmatprep.subr.mxu0 0.0
  %116 = vmatpush1.msra.mxu0 %v61
  %117 = vmatprep.subr.mxu0 0.0
  %118 = vmatpush1.msra.mxu0 %v62
  %119 = vmatprep.subr.mxu0 0.0
  %120 = vmatpush1.msra.mxu0 %v63
  %121 = vmatprep.subr.mxu0 0.0
  %122 = vmatpush1.msra.mxu0 %v64
  %123 = vmatprep.subr.mxu0 0.0
  %124 = vmatpush1.msra.mxu0 %v65
  %125 = vmatprep.subr.mxu0 0.0
  %126 = vmatpush1.msra.mxu0 %v66
  %127 = vmatprep.subr.mxu0 0.0
  %128 = vmatpush1.msra.mxu0 %v67
  %129 = vmatprep.subr.mxu0 0.0
  %130 = vmatpush1.msra.mxu0 %v68
  %131 = vmatprep.subr.mxu0 0.0
  %132 = vmatpush1.msra.mxu0 %v69
  %133 = vmatprep.subr.mxu0 0.0
  %134 = vmatpush1.msra.mxu0 %v70
  %135 = vmatprep.subr.mxu0 0.0
  %136 = vmatpush1.msra.mxu0 %v71
  %137 = vmatprep.subr.mxu0 0.0
  %138 = vmatpush1.msra.mxu0 %v72
  %139 = vmatprep.subr.mxu0 0.0
  %140 = vmatpush1.msra.mxu0 %v73
  %141 = vmatprep.subr.mxu0 0.0
  %142 = vmatpush1.msra.mxu0 %v74
  %143 = vmatprep.subr.mxu0 0.0
  %144 = vmatpush1.msra.mxu0 %v75
  %145 = vmatprep.subr.mxu0 0.0
  %146 = vmatpush1.msra.mxu0 %v76
  %147 = vmatprep.subr.mxu0 0.0
  %148 = vmatpush1.msra.mxu0 %v77
  %149 = vmatprep.mubr.f32.mxu0 %v15
  %150 = vmatmul.mubr.f32.gmra.mrb[0].mxu0 %v14
  %v151 = vpop.f32.mrb[0].mxu0
  %v152 = vadd.f32 %v83, %v151
  %v153 = vpop.f32.mrb[0].mxu0
  %154 = vmatprep.mubr.f32.mxu0 %v17
  %155 = vmatmul.mubr.f32.gmra.mrb[0].mxu0 %v16
  %v156 = vpop.f32.mrb[0].mxu0
  %v157 = vadd.f32 %v83, %v156
  %v158 = vpop.f32.mrb[0].mxu0
  %159 = vmatprep.mubr.f32.mxu0 %v19
  %160 = vmatmul.mubr.f32.gmra.mrb[0].mxu0 %v18
  %v161 = vpop.f32.mrb[0].mxu0
  %v162 = vadd.f32 %v83, %v161
  %v163 = vpop.f32.mrb[0].mxu0
  %164 = vmatprep.mubr.f32.mxu0 %v21
  %165 = vmatmul.mubr.f32.gmra.mrb[0].mxu0 %v20
  %v166 = vpop.f32.mrb[0].mxu0
  %v167 = vadd.f32 %v83, %v166
  %v168 = vpop.f32.mrb[0].mxu0
  %169 = vmatprep.mubr.f32.mxu0 %v23
  %170 = vmatmul.mubr.f32.gmra.mrb[0].mxu0 %v22
  %v171 = vpop.f32.mrb[0].mxu0
  %v172 = vadd.f32 %v83, %v171
  %v173 = vpop.f32.mrb[0].mxu0
  %174 = vmatprep.mubr.f32.mxu0 %v25
  %175 = vmatmul.mubr.f32.gmra.mrb[0].mxu0 %v24
  %v176 = vpop.f32.mrb[0].mxu0
  %v177 = vadd.f32 %v83, %v176
  %v178 = vpop.f32.mrb[0].mxu0
  %179 = vmatprep.mubr.f32.mxu0 %v27
  %180 = vmatmul.mubr.f32.gmra.mrb[0].mxu0 %v26
  %v181 = vpop.f32.mrb[0].mxu0
  %v182 = vadd.f32 %v83, %v181
  %v183 = vpop.f32.mrb[0].mxu0
  %184 = vmatprep.mubr.f32.mxu0 %v29
  %185 = vmatmul.mubr.f32.gmra.mrb[0].mxu0 %v28
  %v186 = vpop.f32.mrb[0].mxu0
  %v187 = vadd.f32 %v83, %v186
  %v188 = vpop.f32.mrb[0].mxu0
  %189 = vmatprep.mubr.f32.mxu0 %v31
  %190 = vmatmul.mubr.f32.gmra.mrb[0].mxu0 %v30
  %v191 = vpop.f32.mrb[0].mxu0
  %v192 = vadd.f32 %v83, %v191
  %v193 = vpop.f32.mrb[0].mxu0
  %194 = vmatprep.mubr.f32.mxu0 %v33
  %195 = vmatmul.mubr.f32.gmra.mrb[0].mxu0 %v32
  %v196 = vpop.f32.mrb[0].mxu0
  %v197 = vadd.f32 %v83, %v196
  %v198 = vpop.f32.mrb[0].mxu0
  %199 = vmatprep.mubr.f32.mxu0 %v35
  %200 = vmatmul.mubr.f32.gmra.mrb[0].mxu0 %v34
  %v201 = vpop.f32.mrb[0].mxu0
  %v202 = vadd.f32 %v83, %v201
  %v203 = vpop.f32.mrb[0].mxu0
  %204 = vmatprep.mubr.f32.mxu0 %v37
  %205 = vmatmul.mubr.f32.gmra.mrb[0].mxu0 %v36
  %v206 = vpop.f32.mrb[0].mxu0
  %v207 = vadd.f32 %v83, %v206
  %v208 = vpop.f32.mrb[0].mxu0
  %209 = vmatprep.mubr.f32.mxu0 %v39
  %210 = vmatmul.mubr.f32.gmra.mrb[0].mxu0 %v38
  %v211 = vpop.f32.mrb[0].mxu0
  %v212 = vadd.f32 %v83, %v211
  %v213 = vpop.f32.mrb[0].mxu0
  %214 = vmatprep.mubr.f32.mxu0 %v41
  %215 = vmatmul.mubr.f32.gmra.mrb[0].mxu0 %v40
  %v216 = vpop.f32.mrb[0].mxu0
  %v217 = vadd.f32 %v83, %v216
  %v218 = vpop.f32.mrb[0].mxu0
  %219 = vmatprep.mubr.f32.mxu0 %v43
  %220 = vmatmul.mubr.f32.gmra.mrb[0].mxu0 %v42
  %v221 = vpop.f32.mrb[0].mxu0
  %v222 = vadd.f32 %v83, %v221
  %v223 = vpop.f32.mrb[0].mxu0
  %224 = vmatprep.mubr.f32.mxu0 %v45
  %225 = vmatmul.mubr.f32.gmra.mrb[0].mxu0 %v44
  %v226 = vpop.f32.mrb[0].mxu0
  %v227 = vadd.f32 %v83, %v226
  %v228 = vpop.f32.mrb[0].mxu0
  %229 = vdwg.mxu0
  %v230 = vmax.f32 %v152, 0.0
  %v231 = vmax.f32 %v157, 0.0
  %v232 = vmax.f32 %v162, 0.0
  %v233 = vmax.f32 %v167, 0.0
  %v234 = vmax.f32 %v172, 0.0
  %v235 = vmax.f32 %v177, 0.0
  %v236 = vmax.f32 %v182, 0.0
  %v237 = vmax.f32 %v187, 0.0
  %v238 = vmax.f32 %v192, 0.0
  %v239 = vmax.f32 %v197, 0.0
  %v240 = vmax.f32 %v202, 0.0
  %v241 = vmax.f32 %v207, 0.0
  %v242 = vmax.f32 %v212, 0.0
  %v243 = vmax.f32 %v217, 0.0
  %v244 = vmax.f32 %v222, 0.0
  %v245 = vmax.f32 %v227, 0.0
  %vm246 = vcmask 64512
  %247 = vst.msk [vmem:[%s3] sm:$0xff] %vm246, %v230
  %248 = vst.msk [vmem:[%s3 + $0x8] sm:$0xff] %vm246, %v231
  %249 = vst.msk [vmem:[%s3 + $0x10] sm:$0xff] %vm246, %v232
  %250 = vst.msk [vmem:[%s3 + $0x18] sm:$0xff] %vm246, %v233
  %251 = vst.msk [vmem:[%s3 + $0x20] sm:$0xff] %vm246, %v234
  %252 = vst.msk [vmem:[%s3 + $0x28] sm:$0xff] %vm246, %v235
  %253 = vst.msk [vmem:[%s3 + $0x30] sm:$0xff] %vm246, %v236
  %254 = vst.msk [vmem:[%s3 + $0x38] sm:$0xff] %vm246, %v237
  %255 = vst.msk [vmem:[%s3 + $0x40] sm:$0xff] %vm246, %v238
  %256 = vst.msk [vmem:[%s3 + $0x48] sm:$0xff] %vm246, %v239
  %257 = vst.msk [vmem:[%s3 + $0x50] sm:$0xff] %vm246, %v240
  %258 = vst.msk [vmem:[%s3 + $0x58] sm:$0xff] %vm246, %v241
  %259 = vst.msk [vmem:[%s3 + $0x60] sm:$0xff] %vm246, %v242
  %260 = vst.msk [vmem:[%s3 + $0x68] sm:$0xff] %vm246, %v243
  %261 = vst.msk [vmem:[%s3 + $0x70] sm:$0xff] %vm246, %v244
  %262 = vst.msk [vmem:[%s3 + $0x78] sm:$0xff] %vm246, %v245
  // Predicated region
  $region14: #{fcn8s_forward.15} parent=0 // pred_check
    _
  $region15: #{fcn8s_forward.15} parent=0 // pred_check_branch
    %264 = sbr.rel (0) target = $region17
  $region16: #{fcn8s_forward.15} parent=0 // pred_region
    _
  $region17: #{fcn8s_forward.15} parent=0 // pred_fallthru
    _
  // Predicated region
  $region18: #{fcn8s_forward.15} parent=0 // pred_check
    _
  $region19: #{fcn8s_forward.15} parent=0 // pred_check_branch
    %266 = sbr.rel (0) target = $region21
  $region20: #{fcn8s_forward.15} parent=0 // pred_region
    _
  $region21: #{fcn8s_forward.15} parent=0 // pred_fallthru
    _

// kernel: fcn8s_forward.10
$region0: #{fcn8s_forward.10}
  #allocation0 [shape = 'u32[]', space=smem, size = 0x4, offset = 0x4, fixed_abs, tag = 'smem constant byte address 0x4 - core index']
  #allocation1 [shape = 'u32[144,128]{1,0:T(1,128)}', space=vmem, size = 0x12000, scoped, tag = 'internal scratch']
  %s0 = inlined_call_operand.vmem [shape: f32[8,512], index: 0, kind: input, shape index: {}]
  %s1 = inlined_call_operand.vmem [shape: f32[512,8], index: 1, kind: input, shape index: {}]
  %s2 = inlined_call_operand.vmem [shape: f32[1,8], index: 2, kind: input, shape index: {}]
  %s3 = inlined_call_operand.vmem [shape: f32[8,8], index: 3, kind: output, shape index: {}]
  %s4 = sld [smem:[#allocation0]]
  $region22: #{fcn8s_forward.10} parent=0
    _
  %s6 = ssub.s32 1, %s4
  %s7 = scalar_select 0, %s6, %s4
  // Predicated region
  $region2: #{fcn8s_forward.10} parent=0 // pred_check
    _
  $region3: #{fcn8s_forward.10} parent=0 // pred_check_branch
    %9 = sbr.rel (0) target = $region5
  $region4: #{fcn8s_forward.10} parent=0 // pred_region
    _
  $region5: #{fcn8s_forward.10} parent=0 // pred_fallthru
    _
  // Predicated region
  $region6: #{fcn8s_forward.10} parent=0 // pred_check
    _
  $region7: #{fcn8s_forward.10} parent=0 // pred_check_branch
    %11 = sbr.rel (0) target = $region9
  $region8: #{fcn8s_forward.10} parent=0 // pred_region
    _
  $region9: #{fcn8s_forward.10} parent=0 // pred_fallthru
    _
  // Predicated region
  $region10: #{fcn8s_forward.10} parent=0 // pred_check
    _
  $region11: #{fcn8s_forward.10} parent=0 // pred_check_branch
    %13 = sbr.rel (0) target = $region13
  $region12: #{fcn8s_forward.10} parent=0 // pred_region
    _
  $region13: #{fcn8s_forward.10} parent=0 // pred_fallthru
    _
  %v14 = vld [vmem:[%s0] sm:$0xff]
  %v15 = vld [vmem:[%s0 + $0x8] sm:$0xff]
  %v16 = vld [vmem:[%s0 + $0x10] sm:$0xff]
  %v17 = vld [vmem:[%s0 + $0x18] sm:$0xff]
  %v18 = vld [vmem:[%s1] sm:$0xff]
  %v19 = vld [vmem:[%s1 + $0x8] sm:$0xff]
  %v20 = vld [vmem:[%s1 + $0x10] sm:$0xff]
  %v21 = vld [vmem:[%s1 + $0x18] sm:$0xff]
  %v22 = vld [vmem:[%s1 + $0x20] sm:$0xff]
  %v23 = vld [vmem:[%s1 + $0x28] sm:$0xff]
  %v24 = vld [vmem:[%s1 + $0x30] sm:$0xff]
  %v25 = vld [vmem:[%s1 + $0x38] sm:$0xff]
  %v26 = vld [vmem:[%s1 + $0x40] sm:$0xff]
  %v27 = vld [vmem:[%s1 + $0x48] sm:$0xff]
  %v28 = vld [vmem:[%s1 + $0x50] sm:$0xff]
  %v29 = vld [vmem:[%s1 + $0x58] sm:$0xff]
  %v30 = vld [vmem:[%s1 + $0x60] sm:$0xff]
  %v31 = vld [vmem:[%s1 + $0x68] sm:$0xff]
  %v32 = vld [vmem:[%s1 + $0x70] sm:$0xff]
  %v33 = vld [vmem:[%s1 + $0x78] sm:$0xff]
  %v34 = vld [vmem:[%s1 + $0x80] sm:$0xff]
  %v35 = vld [vmem:[%s1 + $0x88] sm:$0xff]
  %v36 = vld [vmem:[%s1 + $0x90] sm:$0xff]
  %v37 = vld [vmem:[%s1 + $0x98] sm:$0xff]
  %v38 = vld [vmem:[%s1 + $0xa0] sm:$0xff]
  %v39 = vld [vmem:[%s1 + $0xa8] sm:$0xff]
  %v40 = vld [vmem:[%s1 + $0xb0] sm:$0xff]
  %v41 = vld [vmem:[%s1 + $0xb8] sm:$0xff]
  %v42 = vld [vmem:[%s1 + $0xc0] sm:$0xff]
  %v43 = vld [vmem:[%s1 + $0xc8] sm:$0xff]
  %v44 = vld [vmem:[%s1 + $0xd0] sm:$0xff]
  %v45 = vld [vmem:[%s1 + $0xd8] sm:$0xff]
  %v46 = vld [vmem:[%s1 + $0xe0] sm:$0xff]
  %v47 = vld [vmem:[%s1 + $0xe8] sm:$0xff]
  %v48 = vld [vmem:[%s1 + $0xf0] sm:$0xff]
  %v49 = vld [vmem:[%s1 + $0xf8] sm:$0xff]
  %v50 = vld [vmem:[%s1 + $0x100] sm:$0xff]
  %v51 = vld [vmem:[%s1 + $0x108] sm:$0xff]
  %v52 = vld [vmem:[%s1 + $0x110] sm:$0xff]
  %v53 = vld [vmem:[%s1 + $0x118] sm:$0xff]
  %v54 = vld [vmem:[%s1 + $0x120] sm:$0xff]
  %v55 = vld [vmem:[%s1 + $0x128] sm:$0xff]
  %v56 = vld [vmem:[%s1 + $0x130] sm:$0xff]
  %v57 = vld [vmem:[%s1 + $0x138] sm:$0xff]
  %v58 = vld [vmem:[%s1 + $0x140] sm:$0xff]
  %v59 = vld [vmem:[%s1 + $0x148] sm:$0xff]
  %v60 = vld [vmem:[%s1 + $0x150] sm:$0xff]
  %v61 = vld [vmem:[%s1 + $0x158] sm:$0xff]
  %v62 = vld [vmem:[%s1 + $0x160] sm:$0xff]
  %v63 = vld [vmem:[%s1 + $0x168] sm:$0xff]
  %v64 = vld [vmem:[%s1 + $0x170] sm:$0xff]
  %v65 = vld [vmem:[%s1 + $0x178] sm:$0xff]
  %v66 = vld [vmem:[%s1 + $0x180] sm:$0xff]
  %v67 = vld [vmem:[%s1 + $0x188] sm:$0xff]
  %v68 = vld [vmem:[%s1 + $0x190] sm:$0xff]
  %v69 = vld [vmem:[%s1 + $0x198] sm:$0xff]
  %v70 = vld [vmem:[%s1 + $0x1a0] sm:$0xff]
  %v71 = vld [vmem:[%s1 + $0x1a8] sm:$0xff]
  %v72 = vld [vmem:[%s1 + $0x1b0] sm:$0xff]
  %v73 = vld [vmem:[%s1 + $0x1b8] sm:$0xff]
  %v74 = vld [vmem:[%s1 + $0x1c0] sm:$0xff]
  %v75 = vld [vmem:[%s1 + $0x1c8] sm:$0xff]
  %v76 = vld [vmem:[%s1 + $0x1d0] sm:$0xff]
  %v77 = vld [vmem:[%s1 + $0x1d8] sm:$0xff]
  %v78 = vld [vmem:[%s1 + $0x1e0] sm:$0xff]
  %v79 = vld [vmem:[%s1 + $0x1e8] sm:$0xff]
  %v80 = vld [vmem:[%s1 + $0x1f0] sm:$0xff]
  %v81 = vld [vmem:[%s1 + $0x1f8] sm:$0xff]
  %v82 = vld [vmem:[%s2] sm:$0x1]
  %v84 = vlaneseq
  %v85 = vshrl.u32 %v84, 7
  %v86 = vsub.s32 0, %v85
  %v87 = vrot.slane %v82, %v86
  %89 = vmatprep.subr.mxu0 0.0
  %90 = vmatpush1.msra.mxu0 %v18
  %91 = vmatprep.subr.mxu0 0.0
  %92 = vmatpush1.msra.mxu0 %v19
  %93 = vmatprep.subr.mxu0 0.0
  %94 = vmatpush1.msra.mxu0 %v20
  %95 = vmatprep.subr.mxu0 0.0
  %96 = vmatpush1.msra.mxu0 %v21
  %97 = vmatprep.subr.mxu0 0.0
  %98 = vmatpush1.msra.mxu0 %v22
  %99 = vmatprep.subr.mxu0 0.0
  %100 = vmatpush1.msra.mxu0 %v23
  %101 = vmatprep.subr.mxu0 0.0
  %102 = vmatpush1.msra.mxu0 %v24
  %103 = vmatprep.subr.mxu0 0.0
  %104 = vmatpush1.msra.mxu0 %v25
  %105 = vmatprep.subr.mxu0 0.0
  %106 = vmatpush1.msra.mxu0 %v26
  %107 = vmatprep.subr.mxu0 0.0
  %108 = vmatpush1.msra.mxu0 %v27
  %109 = vmatprep.subr.mxu0 0.0
  %110 = vmatpush1.msra.mxu0 %v28
  %111 = vmatprep.subr.mxu0 0.0
  %112 = vmatpush1.msra.mxu0 %v29
  %113 = vmatprep.subr.mxu0 0.0
  %114 = vmatpush1.msra.mxu0 %v30
  %115 = vmatprep.subr.mxu0 0.0
  %116 = vmatpush1.msra.mxu0 %v31
  %117 = vmatprep.subr.mxu0 0.0
  %118 = vmatpush1.msra.mxu0 %v32
  %119 = vmatprep.subr.mxu0 0.0
  %120 = vmatpush1.msra.mxu0 %v33
  %121 = vmatprep.subr.mxu0 0.0
  %122 = vmatpush1.msra.mxu0 %v34
  %123 = vmatprep.subr.mxu0 0.0
  %124 = vmatpush1.msra.mxu0 %v35
  %125 = vmatprep.subr.mxu0 0.0
  %126 = vmatpush1.msra.mxu0 %v36
  %127 = vmatprep.subr.mxu0 0.0
  %128 = vmatpush1.msra.mxu0 %v37
  %129 = vmatprep.subr.mxu0 0.0
  %130 = vmatpush1.msra.mxu0 %v38
  %131 = vmatprep.subr.mxu0 0.0
  %132 = vmatpush1.msra.mxu0 %v39
  %133 = vmatprep.subr.mxu0 0.0
  %134 = vmatpush1.msra.mxu0 %v40
  %135 = vmatprep.subr.mxu0 0.0
  %136 = vmatpush1.msra.mxu0 %v41
  %137 = vmatprep.subr.mxu0 0.0
  %138 = vmatpush1.msra.mxu0 %v42
  %139 = vmatprep.subr.mxu0 0.0
  %140 = vmatpush1.msra.mxu0 %v43
  %141 = vmatprep.subr.mxu0 0.0
  %142 = vmatpush1.msra.mxu0 %v44
  %143 = vmatprep.subr.mxu0 0.0
  %144 = vmatpush1.msra.mxu0 %v45
  %145 = vmatprep.subr.mxu0 0.0
  %146 = vmatpush1.msra.mxu0 %v46
  %147 = vmatprep.subr.mxu0 0.0
  %148 = vmatpush1.msra.mxu0 %v47
  %149 = vmatprep.subr.mxu0 0.0
  %150 = vmatpush1.msra.mxu0 %v48
  %151 = vmatprep.subr.mxu0 0.0
  %152 = vmatpush1.msra.mxu0 %v49
  %153 = vmatprep.mubr.f32.mxu0 %v15
  %154 = vmatmul.mubr.f32.gmra.mrb[0].mxu0 %v14
  %v155 = vpop.f32.mrb[0].mxu0
  %v156 = vadd.f32 %v87, %v155
  %v157 = vpop.f32.mrb[0].mxu0
  %158 = vdwg.mxu0
  %159 = vmatprep.subr.mxu0 0.0
  %160 = vmatpush1.msra.mxu0 %v50
  %161 = vmatprep.subr.mxu0 0.0
  %162 = vmatpush1.msra.mxu0 %v51
  %163 = vmatprep.subr.mxu0 0.0
  %164 = vmatpush1.msra.mxu0 %v52
  %165 = vmatprep.subr.mxu0 0.0
  %166 = vmatpush1.msra.mxu0 %v53
  %167 = vmatprep.subr.mxu0 0.0
  %168 = vmatpush1.msra.mxu0 %v54
  %169 = vmatprep.subr.mxu0 0.0
  %170 = vmatpush1.msra.mxu0 %v55
  %171 = vmatprep.subr.mxu0 0.0
  %172 = vmatpush1.msra.mxu0 %v56
  %173 = vmatprep.subr.mxu0 0.0
  %174 = vmatpush1.msra.mxu0 %v57
  %175 = vmatprep.subr.mxu0 0.0
  %176 = vmatpush1.msra.mxu0 %v58
  %177 = vmatprep.subr.mxu0 0.0
  %178 = vmatpush1.msra.mxu0 %v59
  %179 = vmatprep.subr.mxu0 0.0
  %180 = vmatpush1.msra.mxu0 %v60
  %181 = vmatprep.subr.mxu0 0.0
  %182 = vmatpush1.msra.mxu0 %v61
  %183 = vmatprep.subr.mxu0 0.0
  %184 = vmatpush1.msra.mxu0 %v62
  %185 = vmatprep.subr.mxu0 0.0
  %186 = vmatpush1.msra.mxu0 %v63
  %187 = vmatprep.subr.mxu0 0.0
  %188 = vmatpush1.msra.mxu0 %v64
  %189 = vmatprep.subr.mxu0 0.0
  %190 = vmatpush1.msra.mxu0 %v65
  %191 = vmatprep.subr.mxu0 0.0
  %192 = vmatpush1.msra.mxu0 %v66
  %193 = vmatprep.subr.mxu0 0.0
  %194 = vmatpush1.msra.mxu0 %v67
  %195 = vmatprep.subr.mxu0 0.0
  %196 = vmatpush1.msra.mxu0 %v68
  %197 = vmatprep.subr.mxu0 0.0
  %198 = vmatpush1.msra.mxu0 %v69
  %199 = vmatprep.subr.mxu0 0.0
  %200 = vmatpush1.msra.mxu0 %v70
  %201 = vmatprep.subr.mxu0 0.0
  %202 = vmatpush1.msra.mxu0 %v71
  %203 = vmatprep.subr.mxu0 0.0
  %204 = vmatpush1.msra.mxu0 %v72
  %205 = vmatprep.subr.mxu0 0.0
  %206 = vmatpush1.msra.mxu0 %v73
  %207 = vmatprep.subr.mxu0 0.0
  %208 = vmatpush1.msra.mxu0 %v74
  %209 = vmatprep.subr.mxu0 0.0
  %210 = vmatpush1.msra.mxu0 %v75
  %211 = vmatprep.subr.mxu0 0.0
  %212 = vmatpush1.msra.mxu0 %v76
  %213 = vmatprep.subr.mxu0 0.0
  %214 = vmatpush1.msra.mxu0 %v77
  %215 = vmatprep.subr.mxu0 0.0
  %216 = vmatpush1.msra.mxu0 %v78
  %217 = vmatprep.subr.mxu0 0.0
  %218 = vmatpush1.msra.mxu0 %v79
  %219 = vmatprep.subr.mxu0 0.0
  %220 = vmatpush1.msra.mxu0 %v80
  %221 = vmatprep.subr.mxu0 0.0
  %222 = vmatpush1.msra.mxu0 %v81
  %223 = vmatprep.mubr.f32.mxu0 %v17
  %224 = vmatmul.mubr.f32.gmra.mrb[0].mxu0 %v16
  %v225 = vpop.f32.mrb[0].mxu0
  %v226 = vadd.f32 %v156, %v225
  %v227 = vpop.f32.mrb[0].mxu0
  %228 = vdwg.mxu0
  %v229 = vmax.f32 %v226, 0.0
  %vm230 = vcmask 64512
  %231 = vst.msk [vmem:[%s3] sm:$0xff] %vm230, %v229
  // Predicated region
  $region14: #{fcn8s_forward.10} parent=0 // pred_check
    _
  $region15: #{fcn8s_forward.10} parent=0 // pred_check_branch
    %233 = sbr.rel (0) target = $region17
  $region16: #{fcn8s_forward.10} parent=0 // pred_region
    _
  $region17: #{fcn8s_forward.10} parent=0 // pred_fallthru
    _
  // Predicated region
  $region18: #{fcn8s_forward.10} parent=0 // pred_check
    _
  $region19: #{fcn8s_forward.10} parent=0 // pred_check_branch
    %235 = sbr.rel (0) target = $region21
  $region20: #{fcn8s_forward.10} parent=0 // pred_region
    _
  $region21: #{fcn8s_forward.10} parent=0 // pred_fallthru
    _

// kernel: tile.48
$region0: #{tile.48}
  #allocation0 [shape = 's32[1]{0}', space=sflag, size = 0x4, scoped, tag = 'scoped memory for tile.48']
  %s0 = inlined_call_operand.vmem [shape: f32[8], index: 0, kind: input, shape index: {}]
  %s1 = inlined_call_operand.vmem [shape: f32[4,8], index: 1, kind: output, shape index: {}]
  // Predicated region
  $region2: #{tile.48} parent=0 // pred_check
    _
  $region3: #{tile.48} parent=0 // pred_check_branch
    %3 = sbr.rel (0) target = $region5
  $region4: #{tile.48} parent=0 // pred_region
    _
  $region5: #{tile.48} parent=0 // pred_fallthru
    _
  %v4 = vld [vmem:[%s0] ss:$0 sm:$0xff]
  %5 = vst [vmem:[%s1] sm:$0xf] %v4

// kernel: fcn8s_forward.11
$region0: #{fcn8s_forward.11}
  #allocation0 [shape = 'u32[]', space=smem, size = 0x4, offset = 0x4, fixed_abs, tag = 'smem constant byte address 0x4 - core index']
  #allocation1 [shape = 'u32[144,128]{1,0:T(1,128)}', space=vmem, size = 0x12000, scoped, tag = 'internal scratch']
  %s0 = inlined_call_operand.vmem [shape: f32[32,512], index: 0, kind: input, shape index: {}]
  %s1 = inlined_call_operand.vmem [shape: f32[512,8], index: 1, kind: input, shape index: {}]
  %s2 = inlined_call_operand.vmem [shape: f32[1,8], index: 2, kind: input, shape index: {}]
  %s3 = inlined_call_operand.vmem [shape: f32[32,8], index: 3, kind: output, shape index: {}]
  %s4 = sld [smem:[#allocation0]]
  $region22: #{fcn8s_forward.11} parent=0
    _
  %s6 = ssub.s32 1, %s4
  %s7 = scalar_select 0, %s6, %s4
  // Predicated region
  $region2: #{fcn8s_forward.11} parent=0 // pred_check
    _
  $region3: #{fcn8s_forward.11} parent=0 // pred_check_branch
    %9 = sbr.rel (0) target = $region5
  $region4: #{fcn8s_forward.11} parent=0 // pred_region
    _
  $region5: #{fcn8s_forward.11} parent=0 // pred_fallthru
    _
  // Predicated region
  $region6: #{fcn8s_forward.11} parent=0 // pred_check
    _
  $region7: #{fcn8s_forward.11} parent=0 // pred_check_branch
    %11 = sbr.rel (0) target = $region9
  $region8: #{fcn8s_forward.11} parent=0 // pred_region
    _
  $region9: #{fcn8s_forward.11} parent=0 // pred_fallthru
    _
  // Predicated region
  $region10: #{fcn8s_forward.11} parent=0 // pred_check
    _
  $region11: #{fcn8s_forward.11} parent=0 // pred_check_branch
    %13 = sbr.rel (0) target = $region13
  $region12: #{fcn8s_forward.11} parent=0 // pred_region
    _
  $region13: #{fcn8s_forward.11} parent=0 // pred_fallthru
    _
  %v14 = vld [vmem:[%s0] sm:$0xff]
  %v15 = vld [vmem:[%s0 + $0x8] sm:$0xff]
  %v16 = vld [vmem:[%s0 + $0x10] sm:$0xff]
  %v17 = vld [vmem:[%s0 + $0x18] sm:$0xff]
  %v18 = vld [vmem:[%s0 + $0x20] sm:$0xff]
  %v19 = vld [vmem:[%s0 + $0x28] sm:$0xff]
  %v20 = vld [vmem:[%s0 + $0x30] sm:$0xff]
  %v21 = vld [vmem:[%s0 + $0x38] sm:$0xff]
  %v22 = vld [vmem:[%s0 + $0x40] sm:$0xff]
  %v23 = vld [vmem:[%s0 + $0x48] sm:$0xff]
  %v24 = vld [vmem:[%s0 + $0x50] sm:$0xff]
  %v25 = vld [vmem:[%s0 + $0x58] sm:$0xff]
  %v26 = vld [vmem:[%s0 + $0x60] sm:$0xff]
  %v27 = vld [vmem:[%s0 + $0x68] sm:$0xff]
  %v28 = vld [vmem:[%s0 + $0x70] sm:$0xff]
  %v29 = vld [vmem:[%s0 + $0x78] sm:$0xff]
  %v30 = vld [vmem:[%s1] sm:$0xff]
  %v31 = vld [vmem:[%s1 + $0x8] sm:$0xff]
  %v32 = vld [vmem:[%s1 + $0x10] sm:$0xff]
  %v33 = vld [vmem:[%s1 + $0x18] sm:$0xff]
  %v34 = vld [vmem:[%s1 + $0x20] sm:$0xff]
  %v35 = vld [vmem:[%s1 + $0x28] sm:$0xff]
  %v36 = vld [vmem:[%s1 + $0x30] sm:$0xff]
  %v37 = vld [vmem:[%s1 + $0x38] sm:$0xff]
  %v38 = vld [vmem:[%s1 + $0x40] sm:$0xff]
  %v39 = vld [vmem:[%s1 + $0x48] sm:$0xff]
  %v40 = vld [vmem:[%s1 + $0x50] sm:$0xff]
  %v41 = vld [vmem:[%s1 + $0x58] sm:$0xff]
  %v42 = vld [vmem:[%s1 + $0x60] sm:$0xff]
  %v43 = vld [vmem:[%s1 + $0x68] sm:$0xff]
  %v44 = vld [vmem:[%s1 + $0x70] sm:$0xff]
  %v45 = vld [vmem:[%s1 + $0x78] sm:$0xff]
  %v46 = vld [vmem:[%s1 + $0x80] sm:$0xff]
  %v47 = vld [vmem:[%s1 + $0x88] sm:$0xff]
  %v48 = vld [vmem:[%s1 + $0x90] sm:$0xff]
  %v49 = vld [vmem:[%s1 + $0x98] sm:$0xff]
  %v50 = vld [vmem:[%s1 + $0xa0] sm:$0xff]
  %v51 = vld [vmem:[%s1 + $0xa8] sm:$0xff]
  %v52 = vld [vmem:[%s1 + $0xb0] sm:$0xff]
  %v53 = vld [vmem:[%s1 + $0xb8] sm:$0xff]
  %v54 = vld [vmem:[%s1 + $0xc0] sm:$0xff]
  %v55 = vld [vmem:[%s1 + $0xc8] sm:$0xff]
  %v56 = vld [vmem:[%s1 + $0xd0] sm:$0xff]
  %v57 = vld [vmem:[%s1 + $0xd8] sm:$0xff]
  %v58 = vld [vmem:[%s1 + $0xe0] sm:$0xff]
  %v59 = vld [vmem:[%s1 + $0xe8] sm:$0xff]
  %v60 = vld [vmem:[%s1 + $0xf0] sm:$0xff]
  %v61 = vld [vmem:[%s1 + $0xf8] sm:$0xff]
  %v62 = vld [vmem:[%s1 + $0x100] sm:$0xff]
  %v63 = vld [vmem:[%s1 + $0x108] sm:$0xff]
  %v64 = vld [vmem:[%s1 + $0x110] sm:$0xff]
  %v65 = vld [vmem:[%s1 + $0x118] sm:$0xff]
  %v66 = vld [vmem:[%s1 + $0x120] sm:$0xff]
  %v67 = vld [vmem:[%s1 + $0x128] sm:$0xff]
  %v68 = vld [vmem:[%s1 + $0x130] sm:$0xff]
  %v69 = vld [vmem:[%s1 + $0x138] sm:$0xff]
  %v70 = vld [vmem:[%s1 + $0x140] sm:$0xff]
  %v71 = vld [vmem:[%s1 + $0x148] sm:$0xff]
  %v72 = vld [vmem:[%s1 + $0x150] sm:$0xff]
  %v73 = vld [vmem:[%s1 + $0x158] sm:$0xff]
  %v74 = vld [vmem:[%s1 + $0x160] sm:$0xff]
  %v75 = vld [vmem:[%s1 + $0x168] sm:$0xff]
  %v76 = vld [vmem:[%s1 + $0x170] sm:$0xff]
  %v77 = vld [vmem:[%s1 + $0x178] sm:$0xff]
  %v78 = vld [vmem:[%s1 + $0x180] sm:$0xff]
  %v79 = vld [vmem:[%s1 + $0x188] sm:$0xff]
  %v80 = vld [vmem:[%s1 + $0x190] sm:$0xff]
  %v81 = vld [vmem:[%s1 + $0x198] sm:$0xff]
  %v82 = vld [vmem:[%s1 + $0x1a0] sm:$0xff]
  %v83 = vld [vmem:[%s1 + $0x1a8] sm:$0xff]
  %v84 = vld [vmem:[%s1 + $0x1b0] sm:$0xff]
  %v85 = vld [vmem:[%s1 + $0x1b8] sm:$0xff]
  %v86 = vld [vmem:[%s1 + $0x1c0] sm:$0xff]
  %v87 = vld [vmem:[%s1 + $0x1c8] sm:$0xff]
  %v88 = vld [vmem:[%s1 + $0x1d0] sm:$0xff]
  %v89 = vld [vmem:[%s1 + $0x1d8] sm:$0xff]
  %v90 = vld [vmem:[%s1 + $0x1e0] sm:$0xff]
  %v91 = vld [vmem:[%s1 + $0x1e8] sm:$0xff]
  %v92 = vld [vmem:[%s1 + $0x1f0] sm:$0xff]
  %v93 = vld [vmem:[%s1 + $0x1f8] sm:$0xff]
  %v94 = vld [vmem:[%s2] sm:$0x1]
  %v96 = vlaneseq
  %v97 = vshrl.u32 %v96, 7
  %v98 = vsub.s32 0, %v97
  %v99 = vrot.slane %v94, %v98
  %101 = vmatprep.subr.mxu0 0.0
  %102 = vmatpush1.msra.mxu0 %v30
  %103 = vmatprep.subr.mxu0 0.0
  %104 = vmatpush1.msra.mxu0 %v31
  %105 = vmatprep.subr.mxu0 0.0
  %106 = vmatpush1.msra.mxu0 %v32
  %107 = vmatprep.subr.mxu0 0.0
  %108 = vmatpush1.msra.mxu0 %v33
  %109 = vmatprep.subr.mxu0 0.0
  %110 = vmatpush1.msra.mxu0 %v34
  %111 = vmatprep.subr.mxu0 0.0
  %112 = vmatpush1.msra.mxu0 %v35
  %113 = vmatprep.subr.mxu0 0.0
  %114 = vmatpush1.msra.mxu0 %v36
  %115 = vmatprep.subr.mxu0 0.0
  %116 = vmatpush1.msra.mxu0 %v37
  %117 = vmatprep.subr.mxu0 0.0
  %118 = vmatpush1.msra.mxu0 %v38
  %119 = vmatprep.subr.mxu0 0.0
  %120 = vmatpush1.msra.mxu0 %v39
  %121 = vmatprep.subr.mxu0 0.0
  %122 = vmatpush1.msra.mxu0 %v40
  %123 = vmatprep.subr.mxu0 0.0
  %124 = vmatpush1.msra.mxu0 %v41
  %125 = vmatprep.subr.mxu0 0.0
  %126 = vmatpush1.msra.mxu0 %v42
  %127 = vmatprep.subr.mxu0 0.0
  %128 = vmatpush1.msra.mxu0 %v43
  %129 = vmatprep.subr.mxu0 0.0
  %130 = vmatpush1.msra.mxu0 %v44
  %131 = vmatprep.subr.mxu0 0.0
  %132 = vmatpush1.msra.mxu0 %v45
  %133 = vmatprep.subr.mxu0 0.0
  %134 = vmatpush1.msra.mxu0 %v46
  %135 = vmatprep.subr.mxu0 0.0
  %136 = vmatpush1.msra.mxu0 %v47
  %137 = vmatprep.subr.mxu0 0.0
  %138 = vmatpush1.msra.mxu0 %v48
  %139 = vmatprep.subr.mxu0 0.0
  %140 = vmatpush1.msra.mxu0 %v49
  %141 = vmatprep.subr.mxu0 0.0
  %142 = vmatpush1.msra.mxu0 %v50
  %143 = vmatprep.subr.mxu0 0.0
  %144 = vmatpush1.msra.mxu0 %v51
  %145 = vmatprep.subr.mxu0 0.0
  %146 = vmatpush1.msra.mxu0 %v52
  %147 = vmatprep.subr.mxu0 0.0
  %148 = vmatpush1.msra.mxu0 %v53
  %149 = vmatprep.subr.mxu0 0.0
  %150 = vmatpush1.msra.mxu0 %v54
  %151 = vmatprep.subr.mxu0 0.0
  %152 = vmatpush1.msra.mxu0 %v55
  %153 = vmatprep.subr.mxu0 0.0
  %154 = vmatpush1.msra.mxu0 %v56
  %155 = vmatprep.subr.mxu0 0.0
  %156 = vmatpush1.msra.mxu0 %v57
  %157 = vmatprep.subr.mxu0 0.0
  %158 = vmatpush1.msra.mxu0 %v58
  %159 = vmatprep.subr.mxu0 0.0
  %160 = vmatpush1.msra.mxu0 %v59
  %161 = vmatprep.subr.mxu0 0.0
  %162 = vmatpush1.msra.mxu0 %v60
  %163 = vmatprep.subr.mxu0 0.0
  %164 = vmatpush1.msra.mxu0 %v61
  %165 = vmatprep.mubr.f32.mxu0 %v15
  %166 = vmatmul.mubr.f32.gmra.mrb[0].mxu0 %v14
  %v167 = vpop.f32.mrb[0].mxu0
  %v168 = vadd.f32 %v99, %v167
  %v169 = vpop.f32.mrb[0].mxu0
  %170 = vmatprep.mubr.f32.mxu0 %v19
  %171 = vmatmul.mubr.f32.gmra.mrb[0].mxu0 %v18
  %v172 = vpop.f32.mrb[0].mxu0
  %v173 = vadd.f32 %v99, %v172
  %v174 = vpop.f32.mrb[0].mxu0
  %175 = vmatprep.mubr.f32.mxu0 %v23
  %176 = vmatmul.mubr.f32.gmra.mrb[0].mxu0 %v22
  %v177 = vpop.f32.mrb[0].mxu0
  %v178 = vadd.f32 %v99, %v177
  %v179 = vpop.f32.mrb[0].mxu0
  %180 = vmatprep.mubr.f32.mxu0 %v27
  %181 = vmatmul.mubr.f32.gmra.mrb[0].mxu0 %v26
  %v182 = vpop.f32.mrb[0].mxu0
  %v183 = vadd.f32 %v99, %v182
  %v184 = vpop.f32.mrb[0].mxu0
  %185 = vdwg.mxu0
  %186 = vmatprep.subr.mxu0 0.0
  %187 = vmatpush1.msra.mxu0 %v62
  %188 = vmatprep.subr.mxu0 0.0
  %189 = vmatpush1.msra.mxu0 %v63
  %190 = vmatprep.subr.mxu0 0.0
  %191 = vmatpush1.msra.mxu0 %v64
  %192 = vmatprep.subr.mxu0 0.0
  %193 = vmatpush1.msra.mxu0 %v65
  %194 = vmatprep.subr.mxu0 0.0
  %195 = vmatpush1.msra.mxu0 %v66
  %196 = vmatprep.subr.mxu0 0.0
  %197 = vmatpush1.msra.mxu0 %v67
  %198 = vmatprep.subr.mxu0 0.0
  %199 = vmatpush1.msra.mxu0 %v68
  %200 = vmatprep.subr.mxu0 0.0
  %201 = vmatpush1.msra.mxu0 %v69
  %202 = vmatprep.subr.mxu0 0.0
  %203 = vmatpush1.msra.mxu0 %v70
  %204 = vmatprep.subr.mxu0 0.0
  %205 = vmatpush1.msra.mxu0 %v71
  %206 = vmatprep.subr.mxu0 0.0
  %207 = vmatpush1.msra.mxu0 %v72
  %208 = vmatprep.subr.mxu0 0.0
  %209 = vmatpush1.msra.mxu0 %v73
  %210 = vmatprep.subr.mxu0 0.0
  %211 = vmatpush1.msra.mxu0 %v74
  %212 = vmatprep.subr.mxu0 0.0
  %213 = vmatpush1.msra.mxu0 %v75
  %214 = vmatprep.subr.mxu0 0.0
  %215 = vmatpush1.msra.mxu0 %v76
  %216 = vmatprep.subr.mxu0 0.0
  %217 = vmatpush1.msra.mxu0 %v77
  %218 = vmatprep.subr.mxu0 0.0
  %219 = vmatpush1.msra.mxu0 %v78
  %220 = vmatprep.subr.mxu0 0.0
  %221 = vmatpush1.msra.mxu0 %v79
  %222 = vmatprep.subr.mxu0 0.0
  %223 = vmatpush1.msra.mxu0 %v80
  %224 = vmatprep.subr.mxu0 0.0
  %225 = vmatpush1.msra.mxu0 %v81
  %226 = vmatprep.subr.mxu0 0.0
  %227 = vmatpush1.msra.mxu0 %v82
  %228 = vmatprep.subr.mxu0 0.0
  %229 = vmatpush1.msra.mxu0 %v83
  %230 = vmatprep.subr.mxu0 0.0
  %231 = vmatpush1.msra.mxu0 %v84
  %232 = vmatprep.subr.mxu0 0.0
  %233 = vmatpush1.msra.mxu0 %v85
  %234 = vmatprep.subr.mxu0 0.0
  %235 = vmatpush1.msra.mxu0 %v86
  %236 = vmatprep.subr.mxu0 0.0
  %237 = vmatpush1.msra.mxu0 %v87
  %238 = vmatprep.subr.mxu0 0.0
  %239 = vmatpush1.msra.mxu0 %v88
  %240 = vmatprep.subr.mxu0 0.0
  %241 = vmatpush1.msra.mxu0 %v89
  %242 = vmatprep.subr.mxu0 0.0
  %243 = vmatpush1.msra.mxu0 %v90
  %244 = vmatprep.subr.mxu0 0.0
  %245 = vmatpush1.msra.mxu0 %v91
  %246 = vmatprep.subr.mxu0 0.0
  %247 = vmatpush1.msra.mxu0 %v92
  %248 = vmatprep.subr.mxu0 0.0
  %249 = vmatpush1.msra.mxu0 %v93
  %250 = vmatprep.mubr.f32.mxu0 %v17
  %251 = vmatmul.mubr.f32.gmra.mrb[0].mxu0 %v16
  %v252 = vpop.f32.mrb[0].mxu0
  %v253 = vadd.f32 %v168, %v252
  %v254 = vpop.f32.mrb[0].mxu0
  %255 = vmatprep.mubr.f32.mxu0 %v21
  %256 = vmatmul.mubr.f32.gmra.mrb[0].mxu0 %v20
  %v257 = vpop.f32.mrb[0].mxu0
  %v258 = vadd.f32 %v173, %v257
  %v259 = vpop.f32.mrb[0].mxu0
  %260 = vmatprep.mubr.f32.mxu0 %v25
  %261 = vmatmul.mubr.f32.gmra.mrb[0].mxu0 %v24
  %v262 = vpop.f32.mrb[0].mxu0
  %v263 = vadd.f32 %v178, %v262
  %v264 = vpop.f32.mrb[0].mxu0
  %265 = vmatprep.mubr.f32.mxu0 %v29
  %266 = vmatmul.mubr.f32.gmra.mrb[0].mxu0 %v28
  %v267 = vpop.f32.mrb[0].mxu0
  %v268 = vadd.f32 %v183, %v267
  %v269 = vpop.f32.mrb[0].mxu0
  %270 = vdwg.mxu0
  %v271 = vmax.f32 %v253, 0.0
  %v272 = vmax.f32 %v258, 0.0
  %v273 = vmax.f32 %v263, 0.0
  %v274 = vmax.f32 %v268, 0.0
  %vm275 = vcmask 64512
  %276 = vst.msk [vmem:[%s3] sm:$0xff] %vm275, %v271
  %277 = vst.msk [vmem:[%s3 + $0x8] sm:$0xff] %vm275, %v272
  %278 = vst.msk [vmem:[%s3 + $0x10] sm:$0xff] %vm275, %v273
  %279 = vst.msk [vmem:[%s3 + $0x18] sm:$0xff] %vm275, %v274
  // Predicated region
  $region14: #{fcn8s_forward.11} parent=0 // pred_check
    _
  $region15: #{fcn8s_forward.11} parent=0 // pred_check_branch
    %281 = sbr.rel (0) target = $region17
  $region16: #{fcn8s_forward.11} parent=0 // pred_region
    _
  $region17: #{fcn8s_forward.11} parent=0 // pred_fallthru
    _
  // Predicated region
  $region18: #{fcn8s_forward.11} parent=0 // pred_check
    _
  $region19: #{fcn8s_forward.11} parent=0 // pred_check_branch
    %283 = sbr.rel (0) target = $region21
  $region20: #{fcn8s_forward.11} parent=0 // pred_region
    _
  $region21: #{fcn8s_forward.11} parent=0 // pred_fallthru
    _

// kernel: fcn8s_forward.12
$region0: #{fcn8s_forward.12}
  #allocation0 [shape = 'u32[]', space=smem, size = 0x4, offset = 0x4, fixed_abs, tag = 'smem constant byte address 0x4 - core index']
  #allocation1 [shape = 'u32[144,128]{1,0:T(1,128)}', space=vmem, size = 0x12000, scoped, tag = 'internal scratch']
  %s0 = inlined_call_operand.vmem [shape: f32[8,72], index: 0, kind: input, shape index: {}]
  %s1 = inlined_call_operand.vmem [shape: f32[72,32], index: 1, kind: input, shape index: {}]
  %s2 = inlined_call_operand.vmem [shape: f32[1,32], index: 2, kind: input, shape index: {}]
  %s3 = inlined_call_operand.vmem [shape: f32[8,32], index: 3, kind: input, shape index: {}]
  %s4 = inlined_call_operand.vmem [shape: f32[8,32], index: 4, kind: output, shape index: {}]
  %s5 = sld [smem:[#allocation0]]
  $region26: #{fcn8s_forward.12} parent=0
    _
  %s7 = ssub.s32 1, %s5
  %s8 = scalar_select 0, %s7, %s5
  // Predicated region
  $region2: #{fcn8s_forward.12} parent=0 // pred_check
    _
  $region3: #{fcn8s_forward.12} parent=0 // pred_check_branch
    %10 = sbr.rel (0) target = $region5
  $region4: #{fcn8s_forward.12} parent=0 // pred_region
    _
  $region5: #{fcn8s_forward.12} parent=0 // pred_fallthru
    _
  // Predicated region
  $region6: #{fcn8s_forward.12} parent=0 // pred_check
    _
  $region7: #{fcn8s_forward.12} parent=0 // pred_check_branch
    %12 = sbr.rel (0) target = $region9
  $region8: #{fcn8s_forward.12} parent=0 // pred_region
    _
  $region9: #{fcn8s_forward.12} parent=0 // pred_fallthru
    _
  // Predicated region
  $region10: #{fcn8s_forward.12} parent=0 // pred_check
    _
  $region11: #{fcn8s_forward.12} parent=0 // pred_check_branch
    %14 = sbr.rel (0) target = $region13
  $region12: #{fcn8s_forward.12} parent=0 // pred_region
    _
  $region13: #{fcn8s_forward.12} parent=0 // pred_fallthru
    _
  // Predicated region
  $region14: #{fcn8s_forward.12} parent=0 // pred_check
    _
  $region15: #{fcn8s_forward.12} parent=0 // pred_check_branch
    %16 = sbr.rel (0) target = $region17
  $region16: #{fcn8s_forward.12} parent=0 // pred_region
    _
  $region17: #{fcn8s_forward.12} parent=0 // pred_fallthru
    _
  %v17 = vld [vmem:[%s0] sm:$0xff]
  %v18 = vld [vmem:[%s1] sm:$0xff]
  %v19 = vld [vmem:[%s1 + $0x8] sm:$0xff]
  %v20 = vld [vmem:[%s1 + $0x10] sm:$0xff]
  %v21 = vld [vmem:[%s1 + $0x18] sm:$0xff]
  %v22 = vld [vmem:[%s1 + $0x20] sm:$0xff]
  %v23 = vld [vmem:[%s1 + $0x28] sm:$0xff]
  %v24 = vld [vmem:[%s1 + $0x30] sm:$0xff]
  %v25 = vld [vmem:[%s1 + $0x38] sm:$0xff]
  %v26 = vld [vmem:[%s1 + $0x40] sm:$0xff]
  %v27 = vld [vmem:[%s2] sm:$0x1]
  %v29 = vlaneseq
  %v30 = vshrl.u32 %v29, 7
  %v31 = vsub.s32 0, %v30
  %v32 = vrot.slane %v27, %v31
  %vm34 = vcmask 588800
  %v36 = vsel %vm34, %v17, 0
  %38 = vmatprep.subr.mxu0 0.0
  %39 = vmatpush1.msra.mxu0 %v18
  %40 = vmatprep.subr.mxu0 0.0
  %41 = vmatpush1.msra.mxu0 %v19
  %42 = vmatprep.subr.mxu0 0.0
  %43 = vmatpush1.msra.mxu0 %v20
  %44 = vmatprep.subr.mxu0 0.0
  %45 = vmatpush1.msra.mxu0 %v21
  %46 = vmatprep.subr.mxu0 0.0
  %47 = vmatpush1.msra.mxu0 %v22
  %48 = vmatprep.subr.mxu0 0.0
  %49 = vmatpush1.msra.mxu0 %v23
  %50 = vmatprep.subr.mxu0 0.0
  %51 = vmatpush1.msra.mxu0 %v24
  %52 = vmatprep.subr.mxu0 0.0
  %53 = vmatpush1.msra.mxu0 %v25
  %54 = vmatprep.subr.mxu0 0.0
  %55 = vmatpush1.msra.mxu0 %v26
  %56 = vmatprep.subr.mxu0 0.0
  %57 = vmatpush1.msra.mxu0 0.0
  %58 = vmatprep.subr.mxu0 0.0
  %59 = vmatpush1.msra.mxu0 0.0
  %60 = vmatprep.subr.mxu0 0.0
  %61 = vmatpush1.msra.mxu0 0.0
  %62 = vmatprep.subr.mxu0 0.0
  %63 = vmatpush1.msra.mxu0 0.0
  %64 = vmatprep.subr.mxu0 0.0
  %65 = vmatpush1.msra.mxu0 0.0
  %66 = vmatprep.subr.mxu0 0.0
  %67 = vmatpush1.msra.mxu0 0.0
  %68 = vmatprep.subr.mxu0 0.0
  %69 = vmatpush1.msra.mxu0 0.0
  %70 = vmatprep.subr.mxu0 0.0
  %71 = vmatpush1.msra.mxu0 0.0
  %72 = vmatprep.subr.mxu0 0.0
  %73 = vmatpush1.msra.mxu0 0.0
  %74 = vmatprep.subr.mxu0 0.0
  %75 = vmatpush1.msra.mxu0 0.0
  %76 = vmatprep.subr.mxu0 0.0
  %77 = vmatpush1.msra.mxu0 0.0
  %78 = vmatprep.subr.mxu0 0.0
  %79 = vmatpush1.msra.mxu0 0.0
  %80 = vmatprep.subr.mxu0 0.0
  %81 = vmatpush1.msra.mxu0 0.0
  %82 = vmatprep.subr.mxu0 0.0
  %83 = vmatpush1.msra.mxu0 0.0
  %84 = vmatprep.subr.mxu0 0.0
  %85 = vmatpush1.msra.mxu0 0.0
  %86 = vmatprep.subr.mxu0 0.0
  %87 = vmatpush1.msra.mxu0 0.0
  %88 = vmatprep.subr.mxu0 0.0
  %89 = vmatpush1.msra.mxu0 0.0
  %90 = vmatprep.subr.mxu0 0.0
  %91 = vmatpush1.msra.mxu0 0.0
  %92 = vmatprep.subr.mxu0 0.0
  %93 = vmatpush1.msra.mxu0 0.0
  %94 = vmatprep.subr.mxu0 0.0
  %95 = vmatpush1.msra.mxu0 0.0
  %96 = vmatprep.subr.mxu0 0.0
  %97 = vmatpush1.msra.mxu0 0.0
  %98 = vmatprep.subr.mxu0 0.0
  %99 = vmatpush1.msra.mxu0 0.0
  %100 = vmatprep.subr.mxu0 0.0
  %101 = vmatpush1.msra.mxu0 0.0
  %102 = vmatprep.mubr.f32.mxu0 0.0
  %103 = vmatmul.mubr.f32.gmra.mrb[0].mxu0 %v36
  %v104 = vpop.f32.mrb[0].mxu0
  %v105 = vadd.f32 %v32, %v104
  %v106 = vpop.f32.mrb[0].mxu0
  %107 = vdwg.mxu0
  %v108 = vld [vmem:[%s3] sm:$0xff]
  %v109 = vadd.f32 %v105, %v108
  %vm110 = vcmask 261120
  %111 = vst.msk [vmem:[%s4] sm:$0xff] %vm110, %v109
  // Predicated region
  $region18: #{fcn8s_forward.12} parent=0 // pred_check
    _
  $region19: #{fcn8s_forward.12} parent=0 // pred_check_branch
    %113 = sbr.rel (0) target = $region21
  $region20: #{fcn8s_forward.12} parent=0 // pred_region
    _
  $region21: #{fcn8s_forward.12} parent=0 // pred_fallthru
    _
  // Predicated region
  $region22: #{fcn8s_forward.12} parent=0 // pred_check
    _
  $region23: #{fcn8s_forward.12} parent=0 // pred_check_branch
    %115 = sbr.rel (0) target = $region25
  $region24: #{fcn8s_forward.12} parent=0 // pred_region
    _
  $region25: #{fcn8s_forward.12} parent=0 // pred_fallthru
    _

// kernel: fcn8s_forward.13
$region0: #{fcn8s_forward.13}
  #allocation0 [shape = 'u32[]', space=smem, size = 0x4, offset = 0x4, fixed_abs, tag = 'smem constant byte address 0x4 - core index']
  #allocation1 [shape = 'u32[144,128]{1,0:T(1,128)}', space=vmem, size = 0x12000, scoped, tag = 'internal scratch']
  %s0 = inlined_call_operand.vmem [shape: f32[8,32], index: 0, kind: input, shape index: {}]
  %s1 = inlined_call_operand.vmem [shape: f32[2,32], index: 1, kind: output, shape index: {}]
  %s2 = sld [smem:[#allocation0]]
  $region18: #{fcn8s_forward.13} parent=0
    _
  %s4 = ssub.s32 1, %s2
  %s5 = scalar_select 0, %s4, %s2
  // Predicated region
  $region2: #{fcn8s_forward.13} parent=0 // pred_check
    _
  $region3: #{fcn8s_forward.13} parent=0 // pred_check_branch
    %7 = sbr.rel (0) target = $region5
  $region4: #{fcn8s_forward.13} parent=0 // pred_region
    _
  $region5: #{fcn8s_forward.13} parent=0 // pred_fallthru
    _
  %p8 = scmp.eq.s32.totalorder 0, 0
  // Predicated region
  $region6: #{fcn8s_forward.13} parent=0 // pred_check
    %p9 = pneg %p8
  $region7: #{fcn8s_forward.13} parent=0 // pred_check_branch
    %11 = sbr.rel (%p9) target = $region9
  $region8: #{fcn8s_forward.13} parent=0 // pred_region
    %vm12 = vcmask 254976
    %13 = vst.msk [vmem:[%s1] sm:$0x3] %vm12, 0.0
  $region9: #{fcn8s_forward.13} parent=0 // pred_fallthru
    _
  %v14 = vld [vmem:[%s0] sm:$0xff]
  %v15 = vlaneseq
  %v16 = vshrl.u32 %v15, 7
  %s17 = smul.u32 0, 8
  %v18 = vstv %s17
  %v19 = vadd.s32 %v16, %v18
  %vm20 = vcmp.lt.s32.totalorder %v19, 8
  %v21 = vsel %vm20, %v14, 0.0
  %vm22 = vcmask 261120
  %v23 = vsel %vm22, %v21, 0.0
  %v24 = vrot.slane %v23, 4
  %v25 = vadd.f32 %v23, %v24
  %v26 = vrot.slane %v25, 2
  %v27 = vadd.f32 %v25, %v26
  %v28 = vrot.slane %v27, 1
  %v29 = vadd.f32 %v27, %v28
  %v30 = vmul.f32 %v21, %v21
  %v31 = vsel %vm22, %v30, 0.0
  %v32 = vrot.slane %v31, 4
  %v33 = vadd.f32 %v31, %v32
  %v34 = vrot.slane %v33, 2
  %v35 = vadd.f32 %v33, %v34
  %v36 = vrot.slane %v35, 1
  %v37 = vadd.f32 %v35, %v36
  %vm38 = vcmask 1040384
  %v39 = vsel %vm38, %v29, %v37
  %v40 = vld [vmem:[%s1] sm:$0x3]
  %v41 = vadd.f32 %v40, %v39
  %vm42 = vcmask 254976
  %43 = vst.msk [vmem:[%s1] sm:$0x3] %vm42, %v41
  // Predicated region
  $region10: #{fcn8s_forward.13} parent=0 // pred_check
    _
  $region11: #{fcn8s_forward.13} parent=0 // pred_check_branch
    %45 = sbr.rel (0) target = $region13
  $region12: #{fcn8s_forward.13} parent=0 // pred_region
    _
  $region13: #{fcn8s_forward.13} parent=0 // pred_fallthru
    _
  // Predicated region
  $region14: #{fcn8s_forward.13} parent=0 // pred_check
    _
  $region15: #{fcn8s_forward.13} parent=0 // pred_check_branch
    %47 = sbr.rel (0) target = $region17
  $region16: #{fcn8s_forward.13} parent=0 // pred_region
    _
  $region17: #{fcn8s_forward.13} parent=0 // pred_fallthru
    _

// kernel: fcn8s_forward.14
$region0: #{fcn8s_forward.14}
  #allocation0 [shape = 'u32[]', space=smem, size = 0x4, offset = 0x4, fixed_abs, tag = 'smem constant byte address 0x4 - core index']
  #allocation1 [shape = 'u32[144,128]{1,0:T(1,128)}', space=vmem, size = 0x12000, scoped, tag = 'internal scratch']
  %s0 = inlined_call_operand.vmem [shape: f32[8,32], index: 0, kind: input, shape index: {}]
  %s1 = inlined_call_operand.vmem [shape: f32[1,32], index: 1, kind: input, shape index: {}]
  %s2 = inlined_call_operand.vmem [shape: f32[1,32], index: 2, kind: input, shape index: {}]
  %s3 = inlined_call_operand.vmem [shape: f32[8,32], index: 3, kind: output, shape index: {}]
  %s4 = sld [smem:[#allocation0]]
  $region22: #{fcn8s_forward.14} parent=0
    _
  %s6 = ssub.s32 1, %s4
  %s7 = scalar_select 0, %s6, %s4
  // Predicated region
  $region2: #{fcn8s_forward.14} parent=0 // pred_check
    _
  $region3: #{fcn8s_forward.14} parent=0 // pred_check_branch
    %9 = sbr.rel (0) target = $region5
  $region4: #{fcn8s_forward.14} parent=0 // pred_region
    _
  $region5: #{fcn8s_forward.14} parent=0 // pred_fallthru
    _
  // Predicated region
  $region6: #{fcn8s_forward.14} parent=0 // pred_check
    _
  $region7: #{fcn8s_forward.14} parent=0 // pred_check_branch
    %11 = sbr.rel (0) target = $region9
  $region8: #{fcn8s_forward.14} parent=0 // pred_region
    _
  $region9: #{fcn8s_forward.14} parent=0 // pred_fallthru
    _
  // Predicated region
  $region10: #{fcn8s_forward.14} parent=0 // pred_check
    _
  $region11: #{fcn8s_forward.14} parent=0 // pred_check_branch
    %13 = sbr.rel (0) target = $region13
  $region12: #{fcn8s_forward.14} parent=0 // pred_region
    _
  $region13: #{fcn8s_forward.14} parent=0 // pred_fallthru
    _
  %v14 = vld [vmem:[%s0] sm:$0xff]
  %v15 = vld [vmem:[%s1] sm:$0x1]
  %v17 = vlaneseq
  %v18 = vshrl.u32 %v17, 7
  %v19 = vsub.s32 0, %v18
  %v20 = vrot.slane %v15, %v19
  %v22 = vmul.f32 %v14, %v20
  %v23 = vld [vmem:[%s2] sm:$0x1]
  %v25 = vlaneseq
  %v26 = vshrl.u32 %v25, 7
  %v27 = vsub.s32 0, %v26
  %v28 = vrot.slane %v23, %v27
  %v30 = vadd.f32 %v22, %v28
  %vm31 = vcmask 261120
  %32 = vst.msk [vmem:[%s3] sm:$0xff] %vm31, %v30
  // Predicated region
  $region14: #{fcn8s_forward.14} parent=0 // pred_check
    _
  $region15: #{fcn8s_forward.14} parent=0 // pred_check_branch
    %34 = sbr.rel (0) target = $region17
  $region16: #{fcn8s_forward.14} parent=0 // pred_region
    _
  $region17: #{fcn8s_forward.14} parent=0 // pred_fallthru
    _
  // Predicated region
  $region18: #{fcn8s_forward.14} parent=0 // pred_check
    _
  $region19: #{fcn8s_forward.14} parent=0 // pred_check_branch
    %36 = sbr.rel (0) target = $region21
  $region20: #{fcn8s_forward.14} parent=0 // pred_region
    _
  $region21: #{fcn8s_forward.14} parent=0 // pred_fallthru
    _

// kernel: fcn8s_forward.16
$region0: #{fcn8s_forward.16}
  #allocation0 [shape = 'u32[]', space=smem, size = 0x4, offset = 0x4, fixed_abs, tag = 'smem constant byte address 0x4 - core index']
  #allocation1 [shape = 'u32[144,128]{1,0:T(1,128)}', space=vmem, size = 0x12000, scoped, tag = 'internal scratch']
  %s0 = inlined_call_operand.vmem [shape: f32[32,72], index: 0, kind: input, shape index: {}]
  %s1 = inlined_call_operand.vmem [shape: f32[72,32], index: 1, kind: input, shape index: {}]
  %s2 = inlined_call_operand.vmem [shape: f32[1,32], index: 2, kind: input, shape index: {}]
  %s3 = inlined_call_operand.vmem [shape: f32[32,32], index: 3, kind: input, shape index: {}]
  %s4 = inlined_call_operand.vmem [shape: f32[32,32], index: 4, kind: output, shape index: {}]
  %s5 = sld [smem:[#allocation0]]
  $region26: #{fcn8s_forward.16} parent=0
    _
  %s7 = ssub.s32 1, %s5
  %s8 = scalar_select 0, %s7, %s5
  // Predicated region
  $region2: #{fcn8s_forward.16} parent=0 // pred_check
    _
  $region3: #{fcn8s_forward.16} parent=0 // pred_check_branch
    %10 = sbr.rel (0) target = $region5
  $region4: #{fcn8s_forward.16} parent=0 // pred_region
    _
  $region5: #{fcn8s_forward.16} parent=0 // pred_fallthru
    _
  // Predicated region
  $region6: #{fcn8s_forward.16} parent=0 // pred_check
    _
  $region7: #{fcn8s_forward.16} parent=0 // pred_check_branch
    %12 = sbr.rel (0) target = $region9
  $region8: #{fcn8s_forward.16} parent=0 // pred_region
    _
  $region9: #{fcn8s_forward.16} parent=0 // pred_fallthru
    _
  // Predicated region
  $region10: #{fcn8s_forward.16} parent=0 // pred_check
    _
  $region11: #{fcn8s_forward.16} parent=0 // pred_check_branch
    %14 = sbr.rel (0) target = $region13
  $region12: #{fcn8s_forward.16} parent=0 // pred_region
    _
  $region13: #{fcn8s_forward.16} parent=0 // pred_fallthru
    _
  // Predicated region
  $region14: #{fcn8s_forward.16} parent=0 // pred_check
    _
  $region15: #{fcn8s_forward.16} parent=0 // pred_check_branch
    %16 = sbr.rel (0) target = $region17
  $region16: #{fcn8s_forward.16} parent=0 // pred_region
    _
  $region17: #{fcn8s_forward.16} parent=0 // pred_fallthru
    _
  %v17 = vld [vmem:[%s0] sm:$0xff]
  %v18 = vld [vmem:[%s0 + $0x8] sm:$0xff]
  %v19 = vld [vmem:[%s0 + $0x10] sm:$0xff]
  %v20 = vld [vmem:[%s0 + $0x18] sm:$0xff]
  %v21 = vld [vmem:[%s1] sm:$0xff]
  %v22 = vld [vmem:[%s1 + $0x8] sm:$0xff]
  %v23 = vld [vmem:[%s1 + $0x10] sm:$0xff]
  %v24 = vld [vmem:[%s1 + $0x18] sm:$0xff]
  %v25 = vld [vmem:[%s1 + $0x20] sm:$0xff]
  %v26 = vld [vmem:[%s1 + $0x28] sm:$0xff]
  %v27 = vld [vmem:[%s1 + $0x30] sm:$0xff]
  %v28 = vld [vmem:[%s1 + $0x38] sm:$0xff]
  %v29 = vld [vmem:[%s1 + $0x40] sm:$0xff]
  %v30 = vld [vmem:[%s2] sm:$0x1]
  %v32 = vlaneseq
  %v33 = vshrl.u32 %v32, 7
  %v34 = vsub.s32 0, %v33
  %v35 = vrot.slane %v30, %v34
  %vm37 = vcmask 588800
  %v39 = vsel %vm37, %v17, 0
  %v42 = vsel %vm37, %v18, 0
  %v45 = vsel %vm37, %v19, 0
  %v48 = vsel %vm37, %v20, 0
  %50 = vmatprep.subr.mxu0 0.0
  %51 = vmatpush1.msra.mxu0 %v21
  %52 = vmatprep.subr.mxu0 0.0
  %53 = vmatpush1.msra.mxu0 %v22
  %54 = vmatprep.subr.mxu0 0.0
  %55 = vmatpush1.msra.mxu0 %v23
  %56 = vmatprep.subr.mxu0 0.0
  %57 = vmatpush1.msra.mxu0 %v24
  %58 = vmatprep.subr.mxu0 0.0
  %59 = vmatpush1.msra.mxu0 %v25
  %60 = vmatprep.subr.mxu0 0.0
  %61 = vmatpush1.msra.mxu0 %v26
  %62 = vmatprep.subr.mxu0 0.0
  %63 = vmatpush1.msra.mxu0 %v27
  %64 = vmatprep.subr.mxu0 0.0
  %65 = vmatpush1.msra.mxu0 %v28
  %66 = vmatprep.subr.mxu0 0.0
  %67 = vmatpush1.msra.mxu0 %v29
  %68 = vmatprep.subr.mxu0 0.0
  %69 = vmatpush1.msra.mxu0 0.0
  %70 = vmatprep.subr.mxu0 0.0
  %71 = vmatpush1.msra.mxu0 0.0
  %72 = vmatprep.subr.mxu0 0.0
  %73 = vmatpush1.msra.mxu0 0.0
  %74 = vmatprep.subr.mxu0 0.0
  %75 = vmatpush1.msra.mxu0 0.0
  %76 = vmatprep.subr.mxu0 0.0
  %77 = vmatpush1.msra.mxu0 0.0
  %78 = vmatprep.subr.mxu0 0.0
  %79 = vmatpush1.msra.mxu0 0.0
  %80 = vmatprep.subr.mxu0 0.0
  %81 = vmatpush1.msra.mxu0 0.0
  %82 = vmatprep.subr.mxu0 0.0
  %83 = vmatpush1.msra.mxu0 0.0
  %84 = vmatprep.subr.mxu0 0.0
  %85 = vmatpush1.msra.mxu0 0.0
  %86 = vmatprep.subr.mxu0 0.0
  %87 = vmatpush1.msra.mxu0 0.0
  %88 = vmatprep.subr.mxu0 0.0
  %89 = vmatpush1.msra.mxu0 0.0
  %90 = vmatprep.subr.mxu0 0.0
  %91 = vmatpush1.msra.mxu0 0.0
  %92 = vmatprep.subr.mxu0 0.0
  %93 = vmatpush1.msra.mxu0 0.0
  %94 = vmatprep.subr.mxu0 0.0
  %95 = vmatpush1.msra.mxu0 0.0
  %96 = vmatprep.subr.mxu0 0.0
  %97 = vmatpush1.msra.mxu0 0.0
  %98 = vmatprep.subr.mxu0 0.0
  %99 = vmatpush1.msra.mxu0 0.0
  %100 = vmatprep.subr.mxu0 0.0
  %101 = vmatpush1.msra.mxu0 0.0
  %102 = vmatprep.subr.mxu0 0.0
  %103 = vmatpush1.msra.mxu0 0.0
  %104 = vmatprep.subr.mxu0 0.0
  %105 = vmatpush1.msra.mxu0 0.0
  %106 = vmatprep.subr.mxu0 0.0
  %107 = vmatpush1.msra.mxu0 0.0
  %108 = vmatprep.subr.mxu0 0.0
  %109 = vmatpush1.msra.mxu0 0.0
  %110 = vmatprep.subr.mxu0 0.0
  %111 = vmatpush1.msra.mxu0 0.0
  %112 = vmatprep.subr.mxu0 0.0
  %113 = vmatpush1.msra.mxu0 0.0
  %114 = vmatprep.mubr.f32.mxu0 0.0
  %115 = vmatmul.mubr.f32.gmra.mrb[0].mxu0 %v39
  %v116 = vpop.f32.mrb[0].mxu0
  %v117 = vadd.f32 %v35, %v116
  %v118 = vpop.f32.mrb[0].mxu0
  %119 = vmatprep.mubr.f32.mxu0 0.0
  %120 = vmatmul.mubr.f32.gmra.mrb[0].mxu0 %v42
  %v121 = vpop.f32.mrb[0].mxu0
  %v122 = vadd.f32 %v35, %v121
  %v123 = vpop.f32.mrb[0].mxu0
  %124 = vmatprep.mubr.f32.mxu0 0.0
  %125 = vmatmul.mubr.f32.gmra.mrb[0].mxu0 %v45
  %v126 = vpop.f32.mrb[0].mxu0
  %v127 = vadd.f32 %v35, %v126
  %v128 = vpop.f32.mrb[0].mxu0
  %129 = vmatprep.mubr.f32.mxu0 0.0
  %130 = vmatmul.mubr.f32.gmra.mrb[0].mxu0 %v48
  %v131 = vpop.f32.mrb[0].mxu0
  %v132 = vadd.f32 %v35, %v131
  %v133 = vpop.f32.mrb[0].mxu0
  %134 = vdwg.mxu0
  %v135 = vld [vmem:[%s3] sm:$0xff]
  %v136 = vld [vmem:[%s3 + $0x8] sm:$0xff]
  %v137 = vld [vmem:[%s3 + $0x10] sm:$0xff]
  %v138 = vld [vmem:[%s3 + $0x18] sm:$0xff]
  %v139 = vadd.f32 %v117, %v135
  %v140 = vadd.f32 %v122, %v136
  %v141 = vadd.f32 %v127, %v137
  %v142 = vadd.f32 %v132, %v138
  %vm143 = vcmask 261120
  %144 = vst.msk [vmem:[%s4] sm:$0xff] %vm143, %v139
  %145 = vst.msk [vmem:[%s4 + $0x8] sm:$0xff] %vm143, %v140
  %146 = vst.msk [vmem:[%s4 + $0x10] sm:$0xff] %vm143, %v141
  %147 = vst.msk [vmem:[%s4 + $0x18] sm:$0xff] %vm143, %v142
  // Predicated region
  $region18: #{fcn8s_forward.16} parent=0 // pred_check
    _
  $region19: #{fcn8s_forward.16} parent=0 // pred_check_branch
    %149 = sbr.rel (0) target = $region21
  $region20: #{fcn8s_forward.16} parent=0 // pred_region
    _
  $region21: #{fcn8s_forward.16} parent=0 // pred_fallthru
    _
  // Predicated region
  $region22: #{fcn8s_forward.16} parent=0 // pred_check
    _
  $region23: #{fcn8s_forward.16} parent=0 // pred_check_branch
    %151 = sbr.rel (0) target = $region25
  $region24: #{fcn8s_forward.16} parent=0 // pred_region
    _
  $region25: #{fcn8s_forward.16} parent=0 // pred_fallthru
    _

// kernel: fcn8s_forward.17
$region0: #{fcn8s_forward.17}
  #allocation0 [shape = 'u32[]', space=smem, size = 0x4, offset = 0x4, fixed_abs, tag = 'smem constant byte address 0x4 - core index']
  #allocation1 [shape = 'u32[144,128]{1,0:T(1,128)}', space=vmem, size = 0x12000, scoped, tag = 'internal scratch']
  %s0 = inlined_call_operand.vmem [shape: f32[32,32], index: 0, kind: input, shape index: {}]
  %s1 = inlined_call_operand.vmem [shape: f32[2,32], index: 1, kind: output, shape index: {}]
  %s2 = sld [smem:[#allocation0]]
  $region18: #{fcn8s_forward.17} parent=0
    _
  %s4 = ssub.s32 1, %s2
  %s5 = scalar_select 0, %s4, %s2
  // Predicated region
  $region2: #{fcn8s_forward.17} parent=0 // pred_check
    _
  $region3: #{fcn8s_forward.17} parent=0 // pred_check_branch
    %7 = sbr.rel (0) target = $region5
  $region4: #{fcn8s_forward.17} parent=0 // pred_region
    _
  $region5: #{fcn8s_forward.17} parent=0 // pred_fallthru
    _
  %p8 = scmp.eq.s32.totalorder 0, 0
  // Predicated region
  $region6: #{fcn8s_forward.17} parent=0 // pred_check
    %p9 = pneg %p8
  $region7: #{fcn8s_forward.17} parent=0 // pred_check_branch
    %11 = sbr.rel (%p9) target = $region9
  $region8: #{fcn8s_forward.17} parent=0 // pred_region
    %vm12 = vcmask 254976
    %13 = vst.msk [vmem:[%s1] sm:$0x3] %vm12, 0.0
  $region9: #{fcn8s_forward.17} parent=0 // pred_fallthru
    _
  %v14 = vld [vmem:[%s0] sm:$0xff]
  %v15 = vld [vmem:[%s0 + $0x8] sm:$0xff]
  %v16 = vld [vmem:[%s0 + $0x10] sm:$0xff]
  %v17 = vld [vmem:[%s0 + $0x18] sm:$0xff]
  %v18 = vlaneseq
  %v19 = vshrl.u32 %v18, 7
  %v20 = vadd.s32 %v19, 8
  %v21 = vadd.s32 %v19, 16
  %v22 = vadd.s32 %v19, 24
  %s23 = smul.u32 0, 32
  %v24 = vstv %s23
  %v25 = vadd.s32 %v19, %v24
  %v26 = vadd.s32 %v20, %v24
  %v27 = vadd.s32 %v21, %v24
  %v28 = vadd.s32 %v22, %v24
  %vm29 = vcmp.lt.s32.totalorder %v25, 32
  %vm30 = vcmp.lt.s32.totalorder %v26, 32
  %vm31 = vcmp.lt.s32.totalorder %v27, 32
  %vm32 = vcmp.lt.s32.totalorder %v28, 32
  %v33 = vsel %vm29, %v14, 0.0
  %v34 = vsel %vm30, %v15, 0.0
  %v35 = vsel %vm31, %v16, 0.0
  %v36 = vsel %vm32, %v17, 0.0
  %vm37 = vcmask 261120
  %v38 = vsel %vm37, %v33, 0.0
  %v39 = vsel %vm37, %v34, 0.0
  %v40 = vadd.f32 %v38, %v39
  %v41 = vsel %vm37, %v35, 0.0
  %v42 = vadd.f32 %v40, %v41
  %v43 = vsel %vm37, %v36, 0.0
  %v44 = vadd.f32 %v42, %v43
  %v45 = vrot.slane %v44, 4
  %v46 = vadd.f32 %v44, %v45
  %v47 = vrot.slane %v46, 2
  %v48 = vadd.f32 %v46, %v47
  %v49 = vrot.slane %v48, 1
  %v50 = vadd.f32 %v48, %v49
  %v51 = vmul.f32 %v33, %v33
  %v52 = vmul.f32 %v34, %v34
  %v53 = vmul.f32 %v35, %v35
  %v54 = vmul.f32 %v36, %v36
  %v55 = vsel %vm37, %v51, 0.0
  %v56 = vsel %vm37, %v52, 0.0
  %v57 = vadd.f32 %v55, %v56
  %v58 = vsel %vm37, %v53, 0.0
  %v59 = vadd.f32 %v57, %v58
  %v60 = vsel %vm37, %v54, 0.0
  %v61 = vadd.f32 %v59, %v60
  %v62 = vrot.slane %v61, 4
  %v63 = vadd.f32 %v61, %v62
  %v64 = vrot.slane %v63, 2
  %v65 = vadd.f32 %v63, %v64
  %v66 = vrot.slane %v65, 1
  %v67 = vadd.f32 %v65, %v66
  %vm68 = vcmask 1040384
  %v69 = vsel %vm68, %v50, %v67
  %v70 = vld [vmem:[%s1] sm:$0x3]
  %v71 = vadd.f32 %v70, %v69
  %vm72 = vcmask 254976
  %73 = vst.msk [vmem:[%s1] sm:$0x3] %vm72, %v71
  // Predicated region
  $region10: #{fcn8s_forward.17} parent=0 // pred_check
    _
  $region11: #{fcn8s_forward.17} parent=0 // pred_check_branch
    %75 = sbr.rel (0) target = $region13
  $region12: #{fcn8s_forward.17} parent=0 // pred_region
    _
  $region13: #{fcn8s_forward.17} parent=0 // pred_fallthru
    _
  // Predicated region
  $region14: #{fcn8s_forward.17} parent=0 // pred_check
    _
  $region15: #{fcn8s_forward.17} parent=0 // pred_check_branch
    %77 = sbr.rel (0) target = $region17
  $region16: #{fcn8s_forward.17} parent=0 // pred_region
    _
  $region17: #{fcn8s_forward.17} parent=0 // pred_fallthru
    _

// kernel: fcn8s_forward.18
$region0: #{fcn8s_forward.18}
  #allocation0 [shape = 'u32[]', space=smem, size = 0x4, offset = 0x4, fixed_abs, tag = 'smem constant byte address 0x4 - core index']
  #allocation1 [shape = 'u32[144,128]{1,0:T(1,128)}', space=vmem, size = 0x12000, scoped, tag = 'internal scratch']
  %s0 = inlined_call_operand.vmem [shape: f32[32,32], index: 0, kind: input, shape index: {}]
  %s1 = inlined_call_operand.vmem [shape: f32[1,32], index: 1, kind: input, shape index: {}]
  %s2 = inlined_call_operand.vmem [shape: f32[1,32], index: 2, kind: input, shape index: {}]
  %s3 = inlined_call_operand.vmem [shape: f32[32,32], index: 3, kind: output, shape index: {}]
  %s4 = sld [smem:[#allocation0]]
  $region22: #{fcn8s_forward.18} parent=0
    _
  %s6 = ssub.s32 1, %s4
  %s7 = scalar_select 0, %s6, %s4
  // Predicated region
  $region2: #{fcn8s_forward.18} parent=0 // pred_check
    _
  $region3: #{fcn8s_forward.18} parent=0 // pred_check_branch
    %9 = sbr.rel (0) target = $region5
  $region4: #{fcn8s_forward.18} parent=0 // pred_region
    _
  $region5: #{fcn8s_forward.18} parent=0 // pred_fallthru
    _
  // Predicated region
  $region6: #{fcn8s_forward.18} parent=0 // pred_check
    _
  $region7: #{fcn8s_forward.18} parent=0 // pred_check_branch
    %11 = sbr.rel (0) target = $region9
  $region8: #{fcn8s_forward.18} parent=0 // pred_region
    _
  $region9: #{fcn8s_forward.18} parent=0 // pred_fallthru
    _
  // Predicated region
  $region10: #{fcn8s_forward.18} parent=0 // pred_check
    _
  $region11: #{fcn8s_forward.18} parent=0 // pred_check_branch
    %13 = sbr.rel (0) target = $region13
  $region12: #{fcn8s_forward.18} parent=0 // pred_region
    _
  $region13: #{fcn8s_forward.18} parent=0 // pred_fallthru
    _
  %v14 = vld [vmem:[%s0] sm:$0xff]
  %v15 = vld [vmem:[%s0 + $0x8] sm:$0xff]
  %v16 = vld [vmem:[%s0 + $0x10] sm:$0xff]
  %v17 = vld [vmem:[%s0 + $0x18] sm:$0xff]
  %v18 = vld [vmem:[%s1] sm:$0x1]
  %v20 = vlaneseq
  %v21 = vshrl.u32 %v20, 7
  %v22 = vsub.s32 0, %v21
  %v23 = vrot.slane %v18, %v22
  %v25 = vmul.f32 %v14, %v23
  %v26 = vmul.f32 %v15, %v23
  %v27 = vmul.f32 %v16, %v23
  %v28 = vmul.f32 %v17, %v23
  %v29 = vld [vmem:[%s2] sm:$0x1]
  %v31 = vlaneseq
  %v32 = vshrl.u32 %v31, 7
  %v33 = vsub.s32 0, %v32
  %v34 = vrot.slane %v29, %v33
  %v36 = vadd.f32 %v25, %v34
  %v37 = vadd.f32 %v26, %v34
  %v38 = vadd.f32 %v27, %v34
  %v39 = vadd.f32 %v28, %v34
  %vm40 = vcmask 261120
  %41 = vst.msk [vmem:[%s3] sm:$0xff] %vm40, %v36
  %42 = vst.msk [vmem:[%s3 + $0x8] sm:$0xff] %vm40, %v37
  %43 = vst.msk [vmem:[%s3 + $0x10] sm:$0xff] %vm40, %v38
  %44 = vst.msk [vmem:[%s3 + $0x18] sm:$0xff] %vm40, %v39
  // Predicated region
  $region14: #{fcn8s_forward.18} parent=0 // pred_check
    _
  $region15: #{fcn8s_forward.18} parent=0 // pred_check_branch
    %46 = sbr.rel (0) target = $region17
  $region16: #{fcn8s_forward.18} parent=0 // pred_region
    _
  $region17: #{fcn8s_forward.18} parent=0 // pred_fallthru
    _
  // Predicated region
  $region18: #{fcn8s_forward.18} parent=0 // pred_check
    _
  $region19: #{fcn8s_forward.18} parent=0 // pred_check_branch
    %48 = sbr.rel (0) target = $region21
  $region20: #{fcn8s_forward.18} parent=0 // pred_region
    _
  $region21: #{fcn8s_forward.18} parent=0 // pred_fallthru
    _

// kernel: fcn8s_forward.19
$region0: #{fcn8s_forward.19}
  #allocation0 [shape = 'u32[]', space=smem, size = 0x4, offset = 0x4, fixed_abs, tag = 'smem constant byte address 0x4 - core index']
  #allocation1 [shape = 'u32[144,128]{1,0:T(1,128)}', space=vmem, size = 0x12000, scoped, tag = 'internal scratch']
  %s0 = inlined_call_operand.vmem [shape: f32[128,72], index: 0, kind: input, shape index: {}]
  %s1 = inlined_call_operand.vmem [shape: f32[72,512], index: 1, kind: input, shape index: {}]
  %s2 = inlined_call_operand.vmem [shape: f32[1,512], index: 2, kind: input, shape index: {}]
  %s3 = inlined_call_operand.vmem [shape: f32[128,512], index: 3, kind: output, shape index: {}]
  %s4 = sld [smem:[#allocation0]]
  $region22: #{fcn8s_forward.19} parent=0
    _
  %s6 = ssub.s32 1, %s4
  %s7 = scalar_select 0, %s6, %s4
  // Predicated region
  $region2: #{fcn8s_forward.19} parent=0 // pred_check
    _
  $region3: #{fcn8s_forward.19} parent=0 // pred_check_branch
    %9 = sbr.rel (0) target = $region5
  $region4: #{fcn8s_forward.19} parent=0 // pred_region
    _
  $region5: #{fcn8s_forward.19} parent=0 // pred_fallthru
    _
  // Predicated region
  $region6: #{fcn8s_forward.19} parent=0 // pred_check
    _
  $region7: #{fcn8s_forward.19} parent=0 // pred_check_branch
    %11 = sbr.rel (0) target = $region9
  $region8: #{fcn8s_forward.19} parent=0 // pred_region
    _
  $region9: #{fcn8s_forward.19} parent=0 // pred_fallthru
    _
  // Predicated region
  $region10: #{fcn8s_forward.19} parent=0 // pred_check
    _
  $region11: #{fcn8s_forward.19} parent=0 // pred_check_branch
    %13 = sbr.rel (0) target = $region13
  $region12: #{fcn8s_forward.19} parent=0 // pred_region
    _
  $region13: #{fcn8s_forward.19} parent=0 // pred_fallthru
    _
  %v14 = vld [vmem:[%s0] sm:$0xff]
  %v15 = vld [vmem:[%s0 + $0x8] sm:$0xff]
  %v16 = vld [vmem:[%s0 + $0x10] sm:$0xff]
  %v17 = vld [vmem:[%s0 + $0x18] sm:$0xff]
  %v18 = vld [vmem:[%s0 + $0x20] sm:$0xff]
  %v19 = vld [vmem:[%s0 + $0x28] sm:$0xff]
  %v20 = vld [vmem:[%s0 + $0x30] sm:$0xff]
  %v21 = vld [vmem:[%s0 + $0x38] sm:$0xff]
  %v22 = vld [vmem:[%s0 + $0x40] sm:$0xff]
  %v23 = vld [vmem:[%s0 + $0x48] sm:$0xff]
  %v24 = vld [vmem:[%s0 + $0x50] sm:$0xff]
  %v25 = vld [vmem:[%s0 + $0x58] sm:$0xff]
  %v26 = vld [vmem:[%s0 + $0x60] sm:$0xff]
  %v27 = vld [vmem:[%s0 + $0x68] sm:$0xff]
  %v28 = vld [vmem:[%s0 + $0x70] sm:$0xff]
  %v29 = vld [vmem:[%s0 + $0x78] sm:$0xff]
  %v30 = vld [vmem:[%s1] sm:$0xff]
  %v31 = vld [vmem:[%s1 + $0x8] sm:$0xff]
  %v32 = vld [vmem:[%s1 + $0x10] sm:$0xff]
  %v33 = vld [vmem:[%s1 + $0x18] sm:$0xff]
  %v34 = vld [vmem:[%s1 + $0x20] sm:$0xff]
  %v35 = vld [vmem:[%s1 + $0x28] sm:$0xff]
  %v36 = vld [vmem:[%s1 + $0x30] sm:$0xff]
  %v37 = vld [vmem:[%s1 + $0x38] sm:$0xff]
  %v38 = vld [vmem:[%s1 + $0x40] sm:$0xff]
  %v39 = vld [vmem:[%s1 + $0x48] sm:$0xff]
  %v40 = vld [vmem:[%s1 + $0x50] sm:$0xff]
  %v41 = vld [vmem:[%s1 + $0x58] sm:$0xff]
  %v42 = vld [vmem:[%s1 + $0x60] sm:$0xff]
  %v43 = vld [vmem:[%s1 + $0x68] sm:$0xff]
  %v44 = vld [vmem:[%s1 + $0x70] sm:$0xff]
  %v45 = vld [vmem:[%s1 + $0x78] sm:$0xff]
  %v46 = vld [vmem:[%s1 + $0x80] sm:$0xff]
  %v47 = vld [vmem:[%s1 + $0x88] sm:$0xff]
  %v48 = vld [vmem:[%s1 + $0x90] sm:$0xff]
  %v49 = vld [vmem:[%s1 + $0x98] sm:$0xff]
  %v50 = vld [vmem:[%s1 + $0xa0] sm:$0xff]
  %v51 = vld [vmem:[%s1 + $0xa8] sm:$0xff]
  %v52 = vld [vmem:[%s1 + $0xb0] sm:$0xff]
  %v53 = vld [vmem:[%s1 + $0xb8] sm:$0xff]
  %v54 = vld [vmem:[%s1 + $0xc0] sm:$0xff]
  %v55 = vld [vmem:[%s1 + $0xc8] sm:$0xff]
  %v56 = vld [vmem:[%s1 + $0xd0] sm:$0xff]
  %v57 = vld [vmem:[%s1 + $0xd8] sm:$0xff]
  %v58 = vld [vmem:[%s1 + $0xe0] sm:$0xff]
  %v59 = vld [vmem:[%s1 + $0xe8] sm:$0xff]
  %v60 = vld [vmem:[%s1 + $0xf0] sm:$0xff]
  %v61 = vld [vmem:[%s1 + $0xf8] sm:$0xff]
  %v62 = vld [vmem:[%s1 + $0x100] sm:$0xff]
  %v63 = vld [vmem:[%s1 + $0x108] sm:$0xff]
  %v64 = vld [vmem:[%s1 + $0x110] sm:$0xff]
  %v65 = vld [vmem:[%s1 + $0x118] sm:$0xff]
  %v66 = vld [vmem:[%s2] sm:$0xf]
  %v68 = vlaneseq
  %v69 = vshrl.u32 %v68, 7
  %v70 = vsub.s32 0, %v69
  %v71 = vrot.slane %v66, %v70
  %v72 = vlaneseq
  %v73 = vshrl.u32 %v72, 7
  %v74 = vsub.s32 1, %v73
  %v75 = vrot.slane %v66, %v74
  %v76 = vlaneseq
  %v77 = vshrl.u32 %v76, 7
  %v78 = vsub.s32 2, %v77
  %v79 = vrot.slane %v66, %v78
  %v80 = vlaneseq
  %v81 = vshrl.u32 %v80, 7
  %v82 = vsub.s32 3, %v81
  %v83 = vrot.slane %v66, %v82
  %vm88 = vcmask 588800
  %v90 = vsel %vm88, %v14, 0
  %v93 = vsel %vm88, %v15, 0
  %v96 = vsel %vm88, %v16, 0
  %v99 = vsel %vm88, %v17, 0
  %v102 = vsel %vm88, %v18, 0
  %v105 = vsel %vm88, %v19, 0
  %v108 = vsel %vm88, %v20, 0
  %v111 = vsel %vm88, %v21, 0
  %v114 = vsel %vm88, %v22, 0
  %v117 = vsel %vm88, %v23, 0
  %v120 = vsel %vm88, %v24, 0
  %v123 = vsel %vm88, %v25, 0
  %v126 = vsel %vm88, %v26, 0
  %v129 = vsel %vm88, %v27, 0
  %v132 = vsel %vm88, %v28, 0
  %v135 = vsel %vm88, %v29, 0
  %137 = vmatprep.subr.mxu0 %v31
  %138 = vmatpush1.msra.mxu0 %v30
  %139 = vmatprep.subr.mxu0 %v35
  %140 = vmatpush1.msra.mxu0 %v34
  %141 = vmatprep.subr.mxu0 %v39
  %142 = vmatpush1.msra.mxu0 %v38
  %143 = vmatprep.subr.mxu0 %v43
  %144 = vmatpush1.msra.mxu0 %v42
  %145 = vmatprep.subr.mxu0 %v47
  %146 = vmatpush1.msra.mxu0 %v46
  %147 = vmatprep.subr.mxu0 %v51
  %148 = vmatpush1.msra.mxu0 %v50
  %149 = vmatprep.subr.mxu0 %v55
  %150 = vmatpush1.msra.mxu0 %v54
  %151 = vmatprep.subr.mxu0 %v59
  %152 = vmatpush1.msra.mxu0 %v58
  %153 = vmatprep.subr.mxu0 %v63
  %154 = vmatpush1.msra.mxu0 %v62
  %155 = vmatprep.subr.mxu0 0.0
  %156 = vmatpush1.msra.mxu0 0.0
  %157 = vmatprep.subr.mxu0 0.0
  %158 = vmatpush1.msra.mxu0 0.0
  %159 = vmatprep.subr.mxu0 0.0
  %160 = vmatpush1.msra.mxu0 0.0
  %161 = vmatprep.subr.mxu0 0.0
  %162 = vmatpush1.msra.mxu0 0.0
  %163 = vmatprep.subr.mxu0 0.0
  %164 = vmatpush1.msra.mxu0 0.0
  %165 = vmatprep.subr.mxu0 0.0
  %166 = vmatpush1.msra.mxu0 0.0
  %167 = vmatprep.subr.mxu0 0.0
  %168 = vmatpush1.msra.mxu0 0.0
  %169 = vmatprep.subr.mxu0 0.0
  %170 = vmatpush1.msra.mxu0 0.0
  %171 = vmatprep.subr.mxu0 0.0
  %172 = vmatpush1.msra.mxu0 0.0
  %173 = vmatprep.subr.mxu0 0.0
  %174 = vmatpush1.msra.mxu0 0.0
  %175 = vmatprep.subr.mxu0 0.0
  %176 = vmatpush1.msra.mxu0 0.0
  %177 = vmatprep.subr.mxu0 0.0
  %178 = vmatpush1.msra.mxu0 0.0
  %179 = vmatprep.subr.mxu0 0.0
  %180 = vmatpush1.msra.mxu0 0.0
  %181 = vmatprep.subr.mxu0 0.0
  %182 = vmatpush1.msra.mxu0 0.0
  %183 = vmatprep.subr.mxu0 0.0
  %184 = vmatpush1.msra.mxu0 0.0
  %185 = vmatprep.subr.mxu0 0.0
  %186 = vmatpush1.msra.mxu0 0.0
  %187 = vmatprep.subr.mxu0 0.0
  %188 = vmatpush1.msra.mxu0 0.0
  %189 = vmatprep.subr.mxu0 0.0
  %190 = vmatpush1.msra.mxu0 0.0
  %191 = vmatprep.subr.mxu0 0.0
  %192 = vmatpush1.msra.mxu0 0.0
  %193 = vmatprep.subr.mxu0 0.0
  %194 = vmatpush1.msra.mxu0 0.0
  %195 = vmatprep.subr.mxu0 0.0
  %196 = vmatpush1.msra.mxu0 0.0
  %197 = vmatprep.subr.mxu0 0.0
  %198 = vmatpush1.msra.mxu0 0.0
  %199 = vmatprep.subr.mxu0 0.0
  %200 = vmatpush1.msra.mxu0 0.0
  %201 = vmatprep.mubr.f32.mxu0 0.0
  %202 = vmatmul.mubr.f32.gmra.mrb[0].mxu0 %v90
  %v203 = vpop.f32.mrb[0].mxu0
  %v204 = vadd.f32 %v71, %v203
  %v205 = vpop.f32.mrb[0].mxu0
  %v206 = vadd.f32 %v75, %v205
  %207 = vmatprep.mubr.f32.mxu0 0.0
  %208 = vmatmul.mubr.f32.gmra.mrb[0].mxu0 %v93
  %v209 = vpop.f32.mrb[0].mxu0
  %v210 = vadd.f32 %v71, %v209
  %v211 = vpop.f32.mrb[0].mxu0
  %v212 = vadd.f32 %v75, %v211
  %213 = vmatprep.mubr.f32.mxu0 0.0
  %214 = vmatmul.mubr.f32.gmra.mrb[0].mxu0 %v96
  %v215 = vpop.f32.mrb[0].mxu0
  %v216 = vadd.f32 %v71, %v215
  %v217 = vpop.f32.mrb[0].mxu0
  %v218 = vadd.f32 %v75, %v217
  %219 = vmatprep.mubr.f32.mxu0 0.0
  %220 = vmatmul.mubr.f32.gmra.mrb[0].mxu0 %v99
  %v221 = vpop.f32.mrb[0].mxu0
  %v222 = vadd.f32 %v71, %v221
  %v223 = vpop.f32.mrb[0].mxu0
  %v224 = vadd.f32 %v75, %v223
  %225 = vmatprep.mubr.f32.mxu0 0.0
  %226 = vmatmul.mubr.f32.gmra.mrb[0].mxu0 %v102
  %v227 = vpop.f32.mrb[0].mxu0
  %v228 = vadd.f32 %v71, %v227
  %v229 = vpop.f32.mrb[0].mxu0
  %v230 = vadd.f32 %v75, %v229
  %231 = vmatprep.mubr.f32.mxu0 0.0
  %232 = vmatmul.mubr.f32.gmra.mrb[0].mxu0 %v105
  %v233 = vpop.f32.mrb[0].mxu0
  %v234 = vadd.f32 %v71, %v233
  %v235 = vpop.f32.mrb[0].mxu0
  %v236 = vadd.f32 %v75, %v235
  %237 = vmatprep.mubr.f32.mxu0 0.0
  %238 = vmatmul.mubr.f32.gmra.mrb[0].mxu0 %v108
  %v239 = vpop.f32.mrb[0].mxu0
  %v240 = vadd.f32 %v71, %v239
  %v241 = vpop.f32.mrb[0].mxu0
  %v242 = vadd.f32 %v75, %v241
  %243 = vmatprep.mubr.f32.mxu0 0.0
  %244 = vmatmul.mubr.f32.gmra.mrb[0].mxu0 %v111
  %v245 = vpop.f32.mrb[0].mxu0
  %v246 = vadd.f32 %v71, %v245
  %v247 = vpop.f32.mrb[0].mxu0
  %v248 = vadd.f32 %v75, %v247
  %249 = vmatprep.mubr.f32.mxu0 0.0
  %250 = vmatmul.mubr.f32.gmra.mrb[0].mxu0 %v114
  %v251 = vpop.f32.mrb[0].mxu0
  %v252 = vadd.f32 %v71, %v251
  %v253 = vpop.f32.mrb[0].mxu0
  %v254 = vadd.f32 %v75, %v253
  %255 = vmatprep.mubr.f32.mxu0 0.0
  %256 = vmatmul.mubr.f32.gmra.mrb[0].mxu0 %v117
  %v257 = vpop.f32.mrb[0].mxu0
  %v258 = vadd.f32 %v71, %v257
  %v259 = vpop.f32.mrb[0].mxu0
  %v260 = vadd.f32 %v75, %v259
  %261 = vmatprep.mubr.f32.mxu0 0.0
  %262 = vmatmul.mubr.f32.gmra.mrb[0].mxu0 %v120
  %v263 = vpop.f32.mrb[0].mxu0
  %v264 = vadd.f32 %v71, %v263
  %v265 = vpop.f32.mrb[0].mxu0
  %v266 = vadd.f32 %v75, %v265
  %267 = vmatprep.mubr.f32.mxu0 0.0
  %268 = vmatmul.mubr.f32.gmra.mrb[0].mxu0 %v123
  %v269 = vpop.f32.mrb[0].mxu0
  %v270 = vadd.f32 %v71, %v269
  %v271 = vpop.f32.mrb[0].mxu0
  %v272 = vadd.f32 %v75, %v271
  %273 = vmatprep.mubr.f32.mxu0 0.0
  %274 = vmatmul.mubr.f32.gmra.mrb[0].mxu0 %v126
  %v275 = vpop.f32.mrb[0].mxu0
  %v276 = vadd.f32 %v71, %v275
  %v277 = vpop.f32.mrb[0].mxu0
  %v278 = vadd.f32 %v75, %v277
  %279 = vmatprep.mubr.f32.mxu0 0.0
  %280 = vmatmul.mubr.f32.gmra.mrb[0].mxu0 %v129
  %v281 = vpop.f32.mrb[0].mxu0
  %v282 = vadd.f32 %v71, %v281
  %v283 = vpop.f32.mrb[0].mxu0
  %v284 = vadd.f32 %v75, %v283
  %285 = vmatprep.mubr.f32.mxu0 0.0
  %286 = vmatmul.mubr.f32.gmra.mrb[0].mxu0 %v132
  %v287 = vpop.f32.mrb[0].mxu0
  %v288 = vadd.f32 %v71, %v287
  %v289 = vpop.f32.mrb[0].mxu0
  %v290 = vadd.f32 %v75, %v289
  %291 = vmatprep.mubr.f32.mxu0 0.0
  %292 = vmatmul.mubr.f32.gmra.mrb[0].mxu0 %v135
  %v293 = vpop.f32.mrb[0].mxu0
  %v294 = vadd.f32 %v71, %v293
  %v295 = vpop.f32.mrb[0].mxu0
  %v296 = vadd.f32 %v75, %v295
  %297 = vdwg.mxu0
  %298 = vmatprep.subr.mxu0 %v33
  %299 = vmatpush1.msra.mxu0 %v32
  %300 = vmatprep.subr.mxu0 %v37
  %301 = vmatpush1.msra.mxu0 %v36
  %302 = vmatprep.subr.mxu0 %v41
  %303 = vmatpush1.msra.mxu0 %v40
  %304 = vmatprep.subr.mxu0 %v45
  %305 = vmatpush1.msra.mxu0 %v44
  %306 = vmatprep.subr.mxu0 %v49
  %307 = vmatpush1.msra.mxu0 %v48
  %308 = vmatprep.subr.mxu0 %v53
  %309 = vmatpush1.msra.mxu0 %v52
  %310 = vmatprep.subr.mxu0 %v57
  %311 = vmatpush1.msra.mxu0 %v56
  %312 = vmatprep.subr.mxu0 %v61
  %313 = vmatpush1.msra.mxu0 %v60
  %314 = vmatprep.subr.mxu0 %v65
  %315 = vmatpush1.msra.mxu0 %v64
  %316 = vmatprep.subr.mxu0 0.0
  %317 = vmatpush1.msra.mxu0 0.0
  %318 = vmatprep.subr.mxu0 0.0
  %319 = vmatpush1.msra.mxu0 0.0
  %320 = vmatprep.subr.mxu0 0.0
  %321 = vmatpush1.msra.mxu0 0.0
  %322 = vmatprep.subr.mxu0 0.0
  %323 = vmatpush1.msra.mxu0 0.0
  %324 = vmatprep.subr.mxu0 0.0
  %325 = vmatpush1.msra.mxu0 0.0
  %326 = vmatprep.subr.mxu0 0.0
  %327 = vmatpush1.msra.mxu0 0.0
  %328 = vmatprep.subr.mxu0 0.0
  %329 = vmatpush1.msra.mxu0 0.0
  %330 = vmatprep.subr.mxu0 0.0
  %331 = vmatpush1.msra.mxu0 0.0
  %332 = vmatprep.subr.mxu0 0.0
  %333 = vmatpush1.msra.mxu0 0.0
  %334 = vmatprep.subr.mxu0 0.0
  %335 = vmatpush1.msra.mxu0 0.0
  %336 = vmatprep.subr.mxu0 0.0
  %337 = vmatpush1.msra.mxu0 0.0
  %338 = vmatprep.subr.mxu0 0.0
  %339 = vmatpush1.msra.mxu0 0.0
  %340 = vmatprep.subr.mxu0 0.0
  %341 = vmatpush1.msra.mxu0 0.0
  %342 = vmatprep.subr.mxu0 0.0
  %343 = vmatpush1.msra.mxu0 0.0
  %344 = vmatprep.subr.mxu0 0.0
  %345 = vmatpush1.msra.mxu0 0.0
  %346 = vmatprep.subr.mxu0 0.0
  %347 = vmatpush1.msra.mxu0 0.0
  %348 = vmatprep.subr.mxu0 0.0
  %349 = vmatpush1.msra.mxu0 0.0
  %350 = vmatprep.subr.mxu0 0.0
  %351 = vmatpush1.msra.mxu0 0.0
  %352 = vmatprep.subr.mxu0 0.0
  %353 = vmatpush1.msra.mxu0 0.0
  %354 = vmatprep.subr.mxu0 0.0
  %355 = vmatpush1.msra.mxu0 0.0
  %356 = vmatprep.subr.mxu0 0.0
  %357 = vmatpush1.msra.mxu0 0.0
  %358 = vmatprep.subr.mxu0 0.0
  %359 = vmatpush1.msra.mxu0 0.0
  %360 = vmatprep.subr.mxu0 0.0
  %361 = vmatpush1.msra.mxu0 0.0
  %362 = vmatprep.mubr.f32.mxu0 0.0
  %363 = vmatmul.mubr.f32.gmra.mrb[0].mxu0 %v90
  %v364 = vpop.f32.mrb[0].mxu0
  %v365 = vadd.f32 %v79, %v364
  %v366 = vpop.f32.mrb[0].mxu0
  %v367 = vadd.f32 %v83, %v366
  %368 = vmatprep.mubr.f32.mxu0 0.0
  %369 = vmatmul.mubr.f32.gmra.mrb[0].mxu0 %v93
  %v370 = vpop.f32.mrb[0].mxu0
  %v371 = vadd.f32 %v79, %v370
  %v372 = vpop.f32.mrb[0].mxu0
  %v373 = vadd.f32 %v83, %v372
  %374 = vmatprep.mubr.f32.mxu0 0.0
  %375 = vmatmul.mubr.f32.gmra.mrb[0].mxu0 %v96
  %v376 = vpop.f32.mrb[0].mxu0
  %v377 = vadd.f32 %v79, %v376
  %v378 = vpop.f32.mrb[0].mxu0
  %v379 = vadd.f32 %v83, %v378
  %380 = vmatprep.mubr.f32.mxu0 0.0
  %381 = vmatmul.mubr.f32.gmra.mrb[0].mxu0 %v99
  %v382 = vpop.f32.mrb[0].mxu0
  %v383 = vadd.f32 %v79, %v382
  %v384 = vpop.f32.mrb[0].mxu0
  %v385 = vadd.f32 %v83, %v384
  %386 = vmatprep.mubr.f32.mxu0 0.0
  %387 = vmatmul.mubr.f32.gmra.mrb[0].mxu0 %v102
  %v388 = vpop.f32.mrb[0].mxu0
  %v389 = vadd.f32 %v79, %v388
  %v390 = vpop.f32.mrb[0].mxu0
  %v391 = vadd.f32 %v83, %v390
  %392 = vmatprep.mubr.f32.mxu0 0.0
  %393 = vmatmul.mubr.f32.gmra.mrb[0].mxu0 %v105
  %v394 = vpop.f32.mrb[0].mxu0
  %v395 = vadd.f32 %v79, %v394
  %v396 = vpop.f32.mrb[0].mxu0
  %v397 = vadd.f32 %v83, %v396
  %398 = vmatprep.mubr.f32.mxu0 0.0
  %399 = vmatmul.mubr.f32.gmra.mrb[0].mxu0 %v108
  %v400 = vpop.f32.mrb[0].mxu0
  %v401 = vadd.f32 %v79, %v400
  %v402 = vpop.f32.mrb[0].mxu0
  %v403 = vadd.f32 %v83, %v402
  %404 = vmatprep.mubr.f32.mxu0 0.0
  %405 = vmatmul.mubr.f32.gmra.mrb[0].mxu0 %v111
  %v406 = vpop.f32.mrb[0].mxu0
  %v407 = vadd.f32 %v79, %v406
  %v408 = vpop.f32.mrb[0].mxu0
  %v409 = vadd.f32 %v83, %v408
  %410 = vmatprep.mubr.f32.mxu0 0.0
  %411 = vmatmul.mubr.f32.gmra.mrb[0].mxu0 %v114
  %v412 = vpop.f32.mrb[0].mxu0
  %v413 = vadd.f32 %v79, %v412
  %v414 = vpop.f32.mrb[0].mxu0
  %v415 = vadd.f32 %v83, %v414
  %416 = vmatprep.mubr.f32.mxu0 0.0
  %417 = vmatmul.mubr.f32.gmra.mrb[0].mxu0 %v117
  %v418 = vpop.f32.mrb[0].mxu0
  %v419 = vadd.f32 %v79, %v418
  %v420 = vpop.f32.mrb[0].mxu0
  %v421 = vadd.f32 %v83, %v420
  %422 = vmatprep.mubr.f32.mxu0 0.0
  %423 = vmatmul.mubr.f32.gmra.mrb[0].mxu0 %v120
  %v424 = vpop.f32.mrb[0].mxu0
  %v425 = vadd.f32 %v79, %v424
  %v426 = vpop.f32.mrb[0].mxu0
  %v427 = vadd.f32 %v83, %v426
  %428 = vmatprep.mubr.f32.mxu0 0.0
  %429 = vmatmul.mubr.f32.gmra.mrb[0].mxu0 %v123
  %v430 = vpop.f32.mrb[0].mxu0
  %v431 = vadd.f32 %v79, %v430
  %v432 = vpop.f32.mrb[0].mxu0
  %v433 = vadd.f32 %v83, %v432
  %434 = vmatprep.mubr.f32.mxu0 0.0
  %435 = vmatmul.mubr.f32.gmra.mrb[0].mxu0 %v126
  %v436 = vpop.f32.mrb[0].mxu0
  %v437 = vadd.f32 %v79, %v436
  %v438 = vpop.f32.mrb[0].mxu0
  %v439 = vadd.f32 %v83, %v438
  %440 = vmatprep.mubr.f32.mxu0 0.0
  %441 = vmatmul.mubr.f32.gmra.mrb[0].mxu0 %v129
  %v442 = vpop.f32.mrb[0].mxu0
  %v443 = vadd.f32 %v79, %v442
  %v444 = vpop.f32.mrb[0].mxu0
  %v445 = vadd.f32 %v83, %v444
  %446 = vmatprep.mubr.f32.mxu0 0.0
  %447 = vmatmul.mubr.f32.gmra.mrb[0].mxu0 %v132
  %v448 = vpop.f32.mrb[0].mxu0
  %v449 = vadd.f32 %v79, %v448
  %v450 = vpop.f32.mrb[0].mxu0
  %v451 = vadd.f32 %v83, %v450
  %452 = vmatprep.mubr.f32.mxu0 0.0
  %453 = vmatmul.mubr.f32.gmra.mrb[0].mxu0 %v135
  %v454 = vpop.f32.mrb[0].mxu0
  %v455 = vadd.f32 %v79, %v454
  %v456 = vpop.f32.mrb[0].mxu0
  %v457 = vadd.f32 %v83, %v456
  %458 = vdwg.mxu0
  %459 = vst [vmem:[%s3] sm:$0xff] %v204
  %460 = vst [vmem:[%s3 + $0x8] sm:$0xff] %v206
  %461 = vst [vmem:[%s3 + $0x10] sm:$0xff] %v365
  %462 = vst [vmem:[%s3 + $0x18] sm:$0xff] %v367
  %463 = vst [vmem:[%s3 + $0x20] sm:$0xff] %v210
  %464 = vst [vmem:[%s3 + $0x28] sm:$0xff] %v212
  %465 = vst [vmem:[%s3 + $0x30] sm:$0xff] %v371
  %466 = vst [vmem:[%s3 + $0x38] sm:$0xff] %v373
  %467 = vst [vmem:[%s3 + $0x40] sm:$0xff] %v216
  %468 = vst [vmem:[%s3 + $0x48] sm:$0xff] %v218
  %469 = vst [vmem:[%s3 + $0x50] sm:$0xff] %v377
  %470 = vst [vmem:[%s3 + $0x58] sm:$0xff] %v379
  %471 = vst [vmem:[%s3 + $0x60] sm:$0xff] %v222
  %472 = vst [vmem:[%s3 + $0x68] sm:$0xff] %v224
  %473 = vst [vmem:[%s3 + $0x70] sm:$0xff] %v383
  %474 = vst [vmem:[%s3 + $0x78] sm:$0xff] %v385
  %475 = vst [vmem:[%s3 + $0x80] sm:$0xff] %v228
  %476 = vst [vmem:[%s3 + $0x88] sm:$0xff] %v230
  %477 = vst [vmem:[%s3 + $0x90] sm:$0xff] %v389
  %478 = vst [vmem:[%s3 + $0x98] sm:$0xff] %v391
  %479 = vst [vmem:[%s3 + $0xa0] sm:$0xff] %v234
  %480 = vst [vmem:[%s3 + $0xa8] sm:$0xff] %v236
  %481 = vst [vmem:[%s3 + $0xb0] sm:$0xff] %v395
  %482 = vst [vmem:[%s3 + $0xb8] sm:$0xff] %v397
  %483 = vst [vmem:[%s3 + $0xc0] sm:$0xff] %v240
  %484 = vst [vmem:[%s3 + $0xc8] sm:$0xff] %v242
  %485 = vst [vmem:[%s3 + $0xd0] sm:$0xff] %v401
  %486 = vst [vmem:[%s3 + $0xd8] sm:$0xff] %v403
  %487 = vst [vmem:[%s3 + $0xe0] sm:$0xff] %v246
  %488 = vst [vmem:[%s3 + $0xe8] sm:$0xff] %v248
  %489 = vst [vmem:[%s3 + $0xf0] sm:$0xff] %v407
  %490 = vst [vmem:[%s3 + $0xf8] sm:$0xff] %v409
  %491 = vst [vmem:[%s3 + $0x100] sm:$0xff] %v252
  %492 = vst [vmem:[%s3 + $0x108] sm:$0xff] %v254
  %493 = vst [vmem:[%s3 + $0x110] sm:$0xff] %v413
  %494 = vst [vmem:[%s3 + $0x118] sm:$0xff] %v415
  %495 = vst [vmem:[%s3 + $0x120] sm:$0xff] %v258
  %496 = vst [vmem:[%s3 + $0x128] sm:$0xff] %v260
  %497 = vst [vmem:[%s3 + $0x130] sm:$0xff] %v419
  %498 = vst [vmem:[%s3 + $0x138] sm:$0xff] %v421
  %499 = vst [vmem:[%s3 + $0x140] sm:$0xff] %v264
  %500 = vst [vmem:[%s3 + $0x148] sm:$0xff] %v266
  %501 = vst [vmem:[%s3 + $0x150] sm:$0xff] %v425
  %502 = vst [vmem:[%s3 + $0x158] sm:$0xff] %v427
  %503 = vst [vmem:[%s3 + $0x160] sm:$0xff] %v270
  %504 = vst [vmem:[%s3 + $0x168] sm:$0xff] %v272
  %505 = vst [vmem:[%s3 + $0x170] sm:$0xff] %v431
  %506 = vst [vmem:[%s3 + $0x178] sm:$0xff] %v433
  %507 = vst [vmem:[%s3 + $0x180] sm:$0xff] %v276
  %508 = vst [vmem:[%s3 + $0x188] sm:$0xff] %v278
  %509 = vst [vmem:[%s3 + $0x190] sm:$0xff] %v437
  %510 = vst [vmem:[%s3 + $0x198] sm:$0xff] %v439
  %511 = vst [vmem:[%s3 + $0x1a0] sm:$0xff] %v282
  %512 = vst [vmem:[%s3 + $0x1a8] sm:$0xff] %v284
  %513 = vst [vmem:[%s3 + $0x1b0] sm:$0xff] %v443
  %514 = vst [vmem:[%s3 + $0x1b8] sm:$0xff] %v445
  %515 = vst [vmem:[%s3 + $0x1c0] sm:$0xff] %v288
  %516 = vst [vmem:[%s3 + $0x1c8] sm:$0xff] %v290
  %517 = vst [vmem:[%s3 + $0x1d0] sm:$0xff] %v449
  %518 = vst [vmem:[%s3 + $0x1d8] sm:$0xff] %v451
  %519 = vst [vmem:[%s3 + $0x1e0] sm:$0xff] %v294
  %520 = vst [vmem:[%s3 + $0x1e8] sm:$0xff] %v296
  %521 = vst [vmem:[%s3 + $0x1f0] sm:$0xff] %v455
  %522 = vst [vmem:[%s3 + $0x1f8] sm:$0xff] %v457
  // Predicated region
  $region14: #{fcn8s_forward.19} parent=0 // pred_check
    _
  $region15: #{fcn8s_forward.19} parent=0 // pred_check_branch
    %524 = sbr.rel (0) target = $region17
  $region16: #{fcn8s_forward.19} parent=0 // pred_region
    _
  $region17: #{fcn8s_forward.19} parent=0 // pred_fallthru
    _
  // Predicated region
  $region18: #{fcn8s_forward.19} parent=0 // pred_check
    _
  $region19: #{fcn8s_forward.19} parent=0 // pred_check_branch
    %526 = sbr.rel (0) target = $region21
  $region20: #{fcn8s_forward.19} parent=0 // pred_region
    _
  $region21: #{fcn8s_forward.19} parent=0 // pred_fallthru
    _

</llo_original>
